<compile_context>
chip_gen: v7x
topology: tpu7x:2x2x1
jax: 0.10.0
libtpu: 0.0.40
codegen_flags: <defaults>
</compile_context>

<pallas_src>
import functools

import jax
import jax.numpy as jnp
from jax.experimental import pallas as pl
from jax.experimental.pallas import tpu as pltpu

NEG_SLOPE = 0.1
KH = KW = 32
STRIDE = 2
PAD = 3


def _conv_lrelu_kernel(xph_ref, t_ref, b_ref, o_ref, *, oh, ow, n_kh):
    # xph_ref: (1, 2, HPp//2, WPp)  phase-split padded input rows (one image)
    # t_ref:   (KH, WPp, OW)        Toeplitz-expanded conv weights (W axis)
    # b_ref:   (1, 1)  SMEM         conv bias scalar
    # o_ref:   (1, OH, OW)          leaky-relu(conv) output (one image)
    acc = jnp.zeros((oh, ow), jnp.float32)
    for kh in range(n_kh):                       # static unroll, 32 MXU matmuls
        p, r0 = kh % 2, kh // 2
        xk = xph_ref[0, p, r0:r0 + oh, :]        # (OH, WPp) contiguous rows
        acc = acc + jnp.dot(xk, t_ref[kh], preferred_element_type=jnp.float32)
    v = acc + b_ref[0, 0]                        # conv + bias
    o_ref[0] = jnp.where(v > 0, v, v * NEG_SLOPE)


@jax.jit
def conv_leaky_relu(x, weight, bias):
    """x: (N, 1, H, W) f32, weight: (1, 1, KH, KW) f32, bias: (1,) f32."""
    N, C, H, W = x.shape
    assert C == 1 and weight.shape == (1, 1, KH, KW)
    OH = (H + 2 * PAD - KH) // STRIDE + 1
    OW = (W + 2 * PAD - KW) // STRIDE + 1
    HP = H + 2 * PAD
    WP = W + 2 * PAD
    HPp = HP + (HP % 2)                       # even row count for phase split
    WPp = ((WP + 127) // 128) * 128           # lane-aligned padded width

    # --- tiny JAX glue: pad once, split rows into even/odd phases (no gather,
    # no im2col matrix: total ~N*HPp*WPp*4 bytes ~ 70 KB) ---
    xp = jnp.pad(x[:, 0].astype(jnp.float32),
                 ((0, 0), (PAD, PAD + (HPp - HP)), (PAD, PAD + (WPp - WP))))
    x_ph = xp.reshape(N, HPp // 2, 2, WPp).transpose(0, 2, 1, 3)  # (N,2,HPp/2,WPp)

    # --- Toeplitz expansion of the kernel along W:
    # T[kh, pw, ow] = weight[kh, pw - 2*ow] if 0 <= pw - 2*ow < KW else 0 ---
    pw = jnp.arange(WPp)[:, None]
    owi = jnp.arange(OW)[None, :]
    kw = pw - STRIDE * owi                                   # (WPp, OW)
    valid = (kw >= 0) & (kw < KW)
    w2 = weight.reshape(KH, KW).astype(jnp.float32)
    T = jnp.where(valid[None], w2[:, jnp.clip(kw, 0, KW - 1)], 0.0)  # (KH,WPp,OW)

    b2 = bias.reshape(1, 1).astype(jnp.float32)

    kernel = functools.partial(_conv_lrelu_kernel, oh=OH, ow=OW, n_kh=KH)

    out = pl.pallas_call(
        kernel,
        out_shape=jax.ShapeDtypeStruct((N, OH, OW), jnp.float32),
        grid_spec=pltpu.PrefetchScalarGridSpec(
            num_scalar_prefetch=0,
            grid=(N,),
            in_specs=[
                pl.BlockSpec((1, 2, HPp // 2, WPp), lambda n: (n, 0, 0, 0)),
                pl.BlockSpec((KH, WPp, OW), lambda n: (0, 0, 0)),
                pl.BlockSpec(memory_space=pltpu.MemorySpace.SMEM),
            ],
            out_specs=pl.BlockSpec((1, OH, OW), lambda n: (n, 0, 0)),
        ),
        compiler_params=pltpu.CompilerParams(
            dimension_semantics=("parallel",)),
    )(x_ph, T, b2)

    return out.reshape(N, 1, OH, OW)


if __name__ == "__main__":
    key = jax.random.PRNGKey(0)
    kx, kw_, kb = jax.random.split(key, 3)

    # Input must satisfy H + 2*pad >= 32; use 64x64 spatial, batch 2.
    x = jax.random.normal(kx, (2, 1, 64, 64), dtype=jnp.float32)
    weight = jax.random.normal(kw_, (1, 1, KH, KW), dtype=jnp.float32) * (1.0 / 32.0)
    bias = jax.random.normal(kb, (1,), dtype=jnp.float32) * 0.1

    out = jax.block_until_ready(conv_leaky_relu(x, weight, bias))

    # Pure-JAX reference.
    ref_conv = jax.lax.conv_general_dilated(
        x, weight, window_strides=(STRIDE, STRIDE),
        padding=((PAD, PAD), (PAD, PAD)),
        dimension_numbers=("NCHW", "OIHW", "NCHW"),
        precision=jax.lax.Precision.HIGHEST) + bias.reshape(1, 1, 1, 1)
    ref = jnp.where(ref_conv > 0, ref_conv, ref_conv * NEG_SLOPE)

    assert out.shape == ref.shape == (2, 1, 20, 20), out.shape
    err = float(jnp.max(jnp.abs(out - ref)))
    assert err < 1e-3, err
    print("KERNEL_OK")
</pallas_src>

<mosaic_0001>
module attributes {stable_mosaic.version = 11 : i64} {
  func.func @_conv_lrelu_kernel(%arg0: i32, %arg1: memref<1x2x35x128xf32, #tpu.memory_space<vmem>>, %arg2: memref<32x128x20xf32, #tpu.memory_space<vmem>>, %arg3: memref<1x1xf32, #tpu.memory_space<smem>>, %arg4: memref<1x20x20xf32, #tpu.memory_space<vmem>>) attributes {dimension_semantics = [#tpu.dimension_semantics<parallel>], iteration_bounds = array<i64: 2>, scalar_prefetch = 0 : i64, scratch_operands = 0 : i64, tpu.core_type = #tpu.core_type<tc>, window_params = [{transform_indices = @transform_0, window_bounds = array<i64: 1, 2, 35, 128>}, {pipeline_mode = #tpu.pipeline_mode<synchronous>, transform_indices = @transform_1, window_bounds = array<i64: 32, 128, 20>}, {transform_indices = @transform_2, window_bounds = array<i64: 1, 1>}, {transform_indices = @transform_3, window_bounds = array<i64: 1, 20, 20>}]} {
    %cst = arith.constant 0.000000e+00 : f32
    %0 = vector.broadcast %cst : f32 to vector<20x20xf32>
    %c0 = arith.constant 0 : index
    %c0_0 = arith.constant 0 : index
    %c0_1 = arith.constant 0 : index
    %c0_2 = arith.constant 0 : index
    %1 = vector.load %arg1[%c0, %c0_0, %c0_1, %c0_2] : memref<1x2x35x128xf32, #tpu.memory_space<vmem>>, vector<1x1x20x128xf32>
    %2 = vector.shape_cast %1 : vector<1x1x20x128xf32> to vector<20x128xf32>
    %c0_3 = arith.constant 0 : index
    %c0_4 = arith.constant 0 : index
    %c0_5 = arith.constant 0 : index
    %3 = vector.load %arg2[%c0_3, %c0_4, %c0_5] : memref<32x128x20xf32, #tpu.memory_space<vmem>>, vector<1x128x20xf32>
    %4 = vector.shape_cast %3 : vector<1x128x20xf32> to vector<128x20xf32>
    %cst_6 = arith.constant dense<0.000000e+00> : vector<20x20xf32>
    %5 = tpu.matmul %2, %4, %cst_6 {dimension_numbers = #tpu.dot_dimension_numbers<[1], [0], [0], [1], [0, 0, 1, 1], [], []>} : vector<20x128xf32>, vector<128x20xf32>, vector<20x20xf32> -> vector<20x20xf32>
    %6 = arith.addf %0, %5 : vector<20x20xf32>
    %c0_7 = arith.constant 0 : index
    %c1 = arith.constant 1 : index
    %c0_8 = arith.constant 0 : index
    %c0_9 = arith.constant 0 : index
    %7 = vector.load %arg1[%c0_7, %c1, %c0_8, %c0_9] : memref<1x2x35x128xf32, #tpu.memory_space<vmem>>, vector<1x1x20x128xf32>
    %8 = vector.shape_cast %7 : vector<1x1x20x128xf32> to vector<20x128xf32>
    %c1_10 = arith.constant 1 : index
    %c0_11 = arith.constant 0 : index
    %c0_12 = arith.constant 0 : index
    %9 = vector.load %arg2[%c1_10, %c0_11, %c0_12] : memref<32x128x20xf32, #tpu.memory_space<vmem>>, vector<1x128x20xf32>
    %10 = vector.shape_cast %9 : vector<1x128x20xf32> to vector<128x20xf32>
    %cst_13 = arith.constant dense<0.000000e+00> : vector<20x20xf32>
    %11 = tpu.matmul %8, %10, %cst_13 {dimension_numbers = #tpu.dot_dimension_numbers<[1], [0], [0], [1], [0, 0, 1, 1], [], []>} : vector<20x128xf32>, vector<128x20xf32>, vector<20x20xf32> -> vector<20x20xf32>
    %12 = arith.addf %6, %11 : vector<20x20xf32>
    %c0_14 = arith.constant 0 : index
    %c0_15 = arith.constant 0 : index
    %c1_16 = arith.constant 1 : index
    %c0_17 = arith.constant 0 : index
    %13 = vector.load %arg1[%c0_14, %c0_15, %c1_16, %c0_17] : memref<1x2x35x128xf32, #tpu.memory_space<vmem>>, vector<1x1x20x128xf32>
    %14 = vector.shape_cast %13 : vector<1x1x20x128xf32> to vector<20x128xf32>
    %c2 = arith.constant 2 : index
    %c0_18 = arith.constant 0 : index
    %c0_19 = arith.constant 0 : index
    %15 = vector.load %arg2[%c2, %c0_18, %c0_19] : memref<32x128x20xf32, #tpu.memory_space<vmem>>, vector<1x128x20xf32>
    %16 = vector.shape_cast %15 : vector<1x128x20xf32> to vector<128x20xf32>
    %cst_20 = arith.constant dense<0.000000e+00> : vector<20x20xf32>
    %17 = tpu.matmul %14, %16, %cst_20 {dimension_numbers = #tpu.dot_dimension_numbers<[1], [0], [0], [1], [0, 0, 1, 1], [], []>} : vector<20x128xf32>, vector<128x20xf32>, vector<20x20xf32> -> vector<20x20xf32>
    %18 = arith.addf %12, %17 : vector<20x20xf32>
    %c0_21 = arith.constant 0 : index
    %c1_22 = arith.constant 1 : index
    %c1_23 = arith.constant 1 : index
    %c0_24 = arith.constant 0 : index
    %19 = vector.load %arg1[%c0_21, %c1_22, %c1_23, %c0_24] : memref<1x2x35x128xf32, #tpu.memory_space<vmem>>, vector<1x1x20x128xf32>
    %20 = vector.shape_cast %19 : vector<1x1x20x128xf32> to vector<20x128xf32>
    %c3 = arith.constant 3 : index
    %c0_25 = arith.constant 0 : index
    %c0_26 = arith.constant 0 : index
    %21 = vector.load %arg2[%c3, %c0_25, %c0_26] : memref<32x128x20xf32, #tpu.memory_space<vmem>>, vector<1x128x20xf32>
    %22 = vector.shape_cast %21 : vector<1x128x20xf32> to vector<128x20xf32>
    %cst_27 = arith.constant dense<0.000000e+00> : vector<20x20xf32>
    %23 = tpu.matmul %20, %22, %cst_27 {dimension_numbers = #tpu.dot_dimension_numbers<[1], [0], [0], [1], [0, 0, 1, 1], [], []>} : vector<20x128xf32>, vector<128x20xf32>, vector<20x20xf32> -> vector<20x20xf32>
    %24 = arith.addf %18, %23 : vector<20x20xf32>
    %c0_28 = arith.constant 0 : index
    %c0_29 = arith.constant 0 : index
    %c2_30 = arith.constant 2 : index
    %c0_31 = arith.constant 0 : index
    %25 = vector.load %arg1[%c0_28, %c0_29, %c2_30, %c0_31] : memref<1x2x35x128xf32, #tpu.memory_space<vmem>>, vector<1x1x20x128xf32>
    %26 = vector.shape_cast %25 : vector<1x1x20x128xf32> to vector<20x128xf32>
    %c4 = arith.constant 4 : index
    %c0_32 = arith.constant 0 : index
    %c0_33 = arith.constant 0 : index
    %27 = vector.load %arg2[%c4, %c0_32, %c0_33] : memref<32x128x20xf32, #tpu.memory_space<vmem>>, vector<1x128x20xf32>
    %28 = vector.shape_cast %27 : vector<1x128x20xf32> to vector<128x20xf32>
    %cst_34 = arith.constant dense<0.000000e+00> : vector<20x20xf32>
    %29 = tpu.matmul %26, %28, %cst_34 {dimension_numbers = #tpu.dot_dimension_numbers<[1], [0], [0], [1], [0, 0, 1, 1], [], []>} : vector<20x128xf32>, vector<128x20xf32>, vector<20x20xf32> -> vector<20x20xf32>
    %30 = arith.addf %24, %29 : vector<20x20xf32>
    %c0_35 = arith.constant 0 : index
    %c1_36 = arith.constant 1 : index
    %c2_37 = arith.constant 2 : index
    %c0_38 = arith.constant 0 : index
    %31 = vector.load %arg1[%c0_35, %c1_36, %c2_37, %c0_38] : memref<1x2x35x128xf32, #tpu.memory_space<vmem>>, vector<1x1x20x128xf32>
    %32 = vector.shape_cast %31 : vector<1x1x20x128xf32> to vector<20x128xf32>
    %c5 = arith.constant 5 : index
    %c0_39 = arith.constant 0 : index
    %c0_40 = arith.constant 0 : index
    %33 = vector.load %arg2[%c5, %c0_39, %c0_40] : memref<32x128x20xf32, #tpu.memory_space<vmem>>, vector<1x128x20xf32>
    %34 = vector.shape_cast %33 : vector<1x128x20xf32> to vector<128x20xf32>
    %cst_41 = arith.constant dense<0.000000e+00> : vector<20x20xf32>
    %35 = tpu.matmul %32, %34, %cst_41 {dimension_numbers = #tpu.dot_dimension_numbers<[1], [0], [0], [1], [0, 0, 1, 1], [], []>} : vector<20x128xf32>, vector<128x20xf32>, vector<20x20xf32> -> vector<20x20xf32>
    %36 = arith.addf %30, %35 : vector<20x20xf32>
    %c0_42 = arith.constant 0 : index
    %c0_43 = arith.constant 0 : index
    %c3_44 = arith.constant 3 : index
    %c0_45 = arith.constant 0 : index
    %37 = vector.load %arg1[%c0_42, %c0_43, %c3_44, %c0_45] : memref<1x2x35x128xf32, #tpu.memory_space<vmem>>, vector<1x1x20x128xf32>
    %38 = vector.shape_cast %37 : vector<1x1x20x128xf32> to vector<20x128xf32>
    %c6 = arith.constant 6 : index
    %c0_46 = arith.constant 0 : index
    %c0_47 = arith.constant 0 : index
    %39 = vector.load %arg2[%c6, %c0_46, %c0_47] : memref<32x128x20xf32, #tpu.memory_space<vmem>>, vector<1x128x20xf32>
    %40 = vector.shape_cast %39 : vector<1x128x20xf32> to vector<128x20xf32>
    %cst_48 = arith.constant dense<0.000000e+00> : vector<20x20xf32>
    %41 = tpu.matmul %38, %40, %cst_48 {dimension_numbers = #tpu.dot_dimension_numbers<[1], [0], [0], [1], [0, 0, 1, 1], [], []>} : vector<20x128xf32>, vector<128x20xf32>, vector<20x20xf32> -> vector<20x20xf32>
    %42 = arith.addf %36, %41 : vector<20x20xf32>
    %c0_49 = arith.constant 0 : index
    %c1_50 = arith.constant 1 : index
    %c3_51 = arith.constant 3 : index
    %c0_52 = arith.constant 0 : index
    %43 = vector.load %arg1[%c0_49, %c1_50, %c3_51, %c0_52] : memref<1x2x35x128xf32, #tpu.memory_space<vmem>>, vector<1x1x20x128xf32>
    %44 = vector.shape_cast %43 : vector<1x1x20x128xf32> to vector<20x128xf32>
    %c7 = arith.constant 7 : index
    %c0_53 = arith.constant 0 : index
    %c0_54 = arith.constant 0 : index
    %45 = vector.load %arg2[%c7, %c0_53, %c0_54] : memref<32x128x20xf32, #tpu.memory_space<vmem>>, vector<1x128x20xf32>
    %46 = vector.shape_cast %45 : vector<1x128x20xf32> to vector<128x20xf32>
    %cst_55 = arith.constant dense<0.000000e+00> : vector<20x20xf32>
    %47 = tpu.matmul %44, %46, %cst_55 {dimension_numbers = #tpu.dot_dimension_numbers<[1], [0], [0], [1], [0, 0, 1, 1], [], []>} : vector<20x128xf32>, vector<128x20xf32>, vector<20x20xf32> -> vector<20x20xf32>
    %48 = arith.addf %42, %47 : vector<20x20xf32>
    %c0_56 = arith.constant 0 : index
    %c0_57 = arith.constant 0 : index
    %c4_58 = arith.constant 4 : index
    %c0_59 = arith.constant 0 : index
    %49 = vector.load %arg1[%c0_56, %c0_57, %c4_58, %c0_59] : memref<1x2x35x128xf32, #tpu.memory_space<vmem>>, vector<1x1x20x128xf32>
    %50 = vector.shape_cast %49 : vector<1x1x20x128xf32> to vector<20x128xf32>
    %c8 = arith.constant 8 : index
    %c0_60 = arith.constant 0 : index
    %c0_61 = arith.constant 0 : index
    %51 = vector.load %arg2[%c8, %c0_60, %c0_61] : memref<32x128x20xf32, #tpu.memory_space<vmem>>, vector<1x128x20xf32>
    %52 = vector.shape_cast %51 : vector<1x128x20xf32> to vector<128x20xf32>
    %cst_62 = arith.constant dense<0.000000e+00> : vector<20x20xf32>
    %53 = tpu.matmul %50, %52, %cst_62 {dimension_numbers = #tpu.dot_dimension_numbers<[1], [0], [0], [1], [0, 0, 1, 1], [], []>} : vector<20x128xf32>, vector<128x20xf32>, vector<20x20xf32> -> vector<20x20xf32>
    %54 = arith.addf %48, %53 : vector<20x20xf32>
    %c0_63 = arith.constant 0 : index
    %c1_64 = arith.constant 1 : index
    %c4_65 = arith.constant 4 : index
    %c0_66 = arith.constant 0 : index
    %55 = vector.load %arg1[%c0_63, %c1_64, %c4_65, %c0_66] : memref<1x2x35x128xf32, #tpu.memory_space<vmem>>, vector<1x1x20x128xf32>
    %56 = vector.shape_cast %55 : vector<1x1x20x128xf32> to vector<20x128xf32>
    %c9 = arith.constant 9 : index
    %c0_67 = arith.constant 0 : index
    %c0_68 = arith.constant 0 : index
    %57 = vector.load %arg2[%c9, %c0_67, %c0_68] : memref<32x128x20xf32, #tpu.memory_space<vmem>>, vector<1x128x20xf32>
    %58 = vector.shape_cast %57 : vector<1x128x20xf32> to vector<128x20xf32>
    %cst_69 = arith.constant dense<0.000000e+00> : vector<20x20xf32>
    %59 = tpu.matmul %56, %58, %cst_69 {dimension_numbers = #tpu.dot_dimension_numbers<[1], [0], [0], [1], [0, 0, 1, 1], [], []>} : vector<20x128xf32>, vector<128x20xf32>, vector<20x20xf32> -> vector<20x20xf32>
    %60 = arith.addf %54, %59 : vector<20x20xf32>
    %c0_70 = arith.constant 0 : index
    %c0_71 = arith.constant 0 : index
    %c5_72 = arith.constant 5 : index
    %c0_73 = arith.constant 0 : index
    %61 = vector.load %arg1[%c0_70, %c0_71, %c5_72, %c0_73] : memref<1x2x35x128xf32, #tpu.memory_space<vmem>>, vector<1x1x20x128xf32>
    %62 = vector.shape_cast %61 : vector<1x1x20x128xf32> to vector<20x128xf32>
    %c10 = arith.constant 10 : index
    %c0_74 = arith.constant 0 : index
    %c0_75 = arith.constant 0 : index
    %63 = vector.load %arg2[%c10, %c0_74, %c0_75] : memref<32x128x20xf32, #tpu.memory_space<vmem>>, vector<1x128x20xf32>
    %64 = vector.shape_cast %63 : vector<1x128x20xf32> to vector<128x20xf32>
    %cst_76 = arith.constant dense<0.000000e+00> : vector<20x20xf32>
    %65 = tpu.matmul %62, %64, %cst_76 {dimension_numbers = #tpu.dot_dimension_numbers<[1], [0], [0], [1], [0, 0, 1, 1], [], []>} : vector<20x128xf32>, vector<128x20xf32>, vector<20x20xf32> -> vector<20x20xf32>
    %66 = arith.addf %60, %65 : vector<20x20xf32>
    %c0_77 = arith.constant 0 : index
    %c1_78 = arith.constant 1 : index
    %c5_79 = arith.constant 5 : index
    %c0_80 = arith.constant 0 : index
    %67 = vector.load %arg1[%c0_77, %c1_78, %c5_79, %c0_80] : memref<1x2x35x128xf32, #tpu.memory_space<vmem>>, vector<1x1x20x128xf32>
    %68 = vector.shape_cast %67 : vector<1x1x20x128xf32> to vector<20x128xf32>
    %c11 = arith.constant 11 : index
    %c0_81 = arith.constant 0 : index
    %c0_82 = arith.constant 0 : index
    %69 = vector.load %arg2[%c11, %c0_81, %c0_82] : memref<32x128x20xf32, #tpu.memory_space<vmem>>, vector<1x128x20xf32>
    %70 = vector.shape_cast %69 : vector<1x128x20xf32> to vector<128x20xf32>
    %cst_83 = arith.constant dense<0.000000e+00> : vector<20x20xf32>
    %71 = tpu.matmul %68, %70, %cst_83 {dimension_numbers = #tpu.dot_dimension_numbers<[1], [0], [0], [1], [0, 0, 1, 1], [], []>} : vector<20x128xf32>, vector<128x20xf32>, vector<20x20xf32> -> vector<20x20xf32>
    %72 = arith.addf %66, %71 : vector<20x20xf32>
    %c0_84 = arith.constant 0 : index
    %c0_85 = arith.constant 0 : index
    %c6_86 = arith.constant 6 : index
    %c0_87 = arith.constant 0 : index
    %73 = vector.load %arg1[%c0_84, %c0_85, %c6_86, %c0_87] : memref<1x2x35x128xf32, #tpu.memory_space<vmem>>, vector<1x1x20x128xf32>
    %74 = vector.shape_cast %73 : vector<1x1x20x128xf32> to vector<20x128xf32>
    %c12 = arith.constant 12 : index
    %c0_88 = arith.constant 0 : index
    %c0_89 = arith.constant 0 : index
    %75 = vector.load %arg2[%c12, %c0_88, %c0_89] : memref<32x128x20xf32, #tpu.memory_space<vmem>>, vector<1x128x20xf32>
    %76 = vector.shape_cast %75 : vector<1x128x20xf32> to vector<128x20xf32>
    %cst_90 = arith.constant dense<0.000000e+00> : vector<20x20xf32>
    %77 = tpu.matmul %74, %76, %cst_90 {dimension_numbers = #tpu.dot_dimension_numbers<[1], [0], [0], [1], [0, 0, 1, 1], [], []>} : vector<20x128xf32>, vector<128x20xf32>, vector<20x20xf32> -> vector<20x20xf32>
    %78 = arith.addf %72, %77 : vector<20x20xf32>
    %c0_91 = arith.constant 0 : index
    %c1_92 = arith.constant 1 : index
    %c6_93 = arith.constant 6 : index
    %c0_94 = arith.constant 0 : index
    %79 = vector.load %arg1[%c0_91, %c1_92, %c6_93, %c0_94] : memref<1x2x35x128xf32, #tpu.memory_space<vmem>>, vector<1x1x20x128xf32>
    %80 = vector.shape_cast %79 : vector<1x1x20x128xf32> to vector<20x128xf32>
    %c13 = arith.constant 13 : index
    %c0_95 = arith.constant 0 : index
    %c0_96 = arith.constant 0 : index
    %81 = vector.load %arg2[%c13, %c0_95, %c0_96] : memref<32x128x20xf32, #tpu.memory_space<vmem>>, vector<1x128x20xf32>
    %82 = vector.shape_cast %81 : vector<1x128x20xf32> to vector<128x20xf32>
    %cst_97 = arith.constant dense<0.000000e+00> : vector<20x20xf32>
    %83 = tpu.matmul %80, %82, %cst_97 {dimension_numbers = #tpu.dot_dimension_numbers<[1], [0], [0], [1], [0, 0, 1, 1], [], []>} : vector<20x128xf32>, vector<128x20xf32>, vector<20x20xf32> -> vector<20x20xf32>
    %84 = arith.addf %78, %83 : vector<20x20xf32>
    %c0_98 = arith.constant 0 : index
    %c0_99 = arith.constant 0 : index
    %c7_100 = arith.constant 7 : index
    %c0_101 = arith.constant 0 : index
    %85 = vector.load %arg1[%c0_98, %c0_99, %c7_100, %c0_101] : memref<1x2x35x128xf32, #tpu.memory_space<vmem>>, vector<1x1x20x128xf32>
    %86 = vector.shape_cast %85 : vector<1x1x20x128xf32> to vector<20x128xf32>
    %c14 = arith.constant 14 : index
    %c0_102 = arith.constant 0 : index
    %c0_103 = arith.constant 0 : index
    %87 = vector.load %arg2[%c14, %c0_102, %c0_103] : memref<32x128x20xf32, #tpu.memory_space<vmem>>, vector<1x128x20xf32>
    %88 = vector.shape_cast %87 : vector<1x128x20xf32> to vector<128x20xf32>
    %cst_104 = arith.constant dense<0.000000e+00> : vector<20x20xf32>
    %89 = tpu.matmul %86, %88, %cst_104 {dimension_numbers = #tpu.dot_dimension_numbers<[1], [0], [0], [1], [0, 0, 1, 1], [], []>} : vector<20x128xf32>, vector<128x20xf32>, vector<20x20xf32> -> vector<20x20xf32>
    %90 = arith.addf %84, %89 : vector<20x20xf32>
    %c0_105 = arith.constant 0 : index
    %c1_106 = arith.constant 1 : index
    %c7_107 = arith.constant 7 : index
    %c0_108 = arith.constant 0 : index
    %91 = vector.load %arg1[%c0_105, %c1_106, %c7_107, %c0_108] : memref<1x2x35x128xf32, #tpu.memory_space<vmem>>, vector<1x1x20x128xf32>
    %92 = vector.shape_cast %91 : vector<1x1x20x128xf32> to vector<20x128xf32>
    %c15 = arith.constant 15 : index
    %c0_109 = arith.constant 0 : index
    %c0_110 = arith.constant 0 : index
    %93 = vector.load %arg2[%c15, %c0_109, %c0_110] : memref<32x128x20xf32, #tpu.memory_space<vmem>>, vector<1x128x20xf32>
    %94 = vector.shape_cast %93 : vector<1x128x20xf32> to vector<128x20xf32>
    %cst_111 = arith.constant dense<0.000000e+00> : vector<20x20xf32>
    %95 = tpu.matmul %92, %94, %cst_111 {dimension_numbers = #tpu.dot_dimension_numbers<[1], [0], [0], [1], [0, 0, 1, 1], [], []>} : vector<20x128xf32>, vector<128x20xf32>, vector<20x20xf32> -> vector<20x20xf32>
    %96 = arith.addf %90, %95 : vector<20x20xf32>
    %c0_112 = arith.constant 0 : index
    %c0_113 = arith.constant 0 : index
    %c8_114 = arith.constant 8 : index
    %c0_115 = arith.constant 0 : index
    %97 = vector.load %arg1[%c0_112, %c0_113, %c8_114, %c0_115] : memref<1x2x35x128xf32, #tpu.memory_space<vmem>>, vector<1x1x20x128xf32>
    %98 = vector.shape_cast %97 : vector<1x1x20x128xf32> to vector<20x128xf32>
    %c16 = arith.constant 16 : index
    %c0_116 = arith.constant 0 : index
    %c0_117 = arith.constant 0 : index
    %99 = vector.load %arg2[%c16, %c0_116, %c0_117] : memref<32x128x20xf32, #tpu.memory_space<vmem>>, vector<1x128x20xf32>
    %100 = vector.shape_cast %99 : vector<1x128x20xf32> to vector<128x20xf32>
    %cst_118 = arith.constant dense<0.000000e+00> : vector<20x20xf32>
    %101 = tpu.matmul %98, %100, %cst_118 {dimension_numbers = #tpu.dot_dimension_numbers<[1], [0], [0], [1], [0, 0, 1, 1], [], []>} : vector<20x128xf32>, vector<128x20xf32>, vector<20x20xf32> -> vector<20x20xf32>
    %102 = arith.addf %96, %101 : vector<20x20xf32>
    %c0_119 = arith.constant 0 : index
    %c1_120 = arith.constant 1 : index
    %c8_121 = arith.constant 8 : index
    %c0_122 = arith.constant 0 : index
    %103 = vector.load %arg1[%c0_119, %c1_120, %c8_121, %c0_122] : memref<1x2x35x128xf32, #tpu.memory_space<vmem>>, vector<1x1x20x128xf32>
    %104 = vector.shape_cast %103 : vector<1x1x20x128xf32> to vector<20x128xf32>
    %c17 = arith.constant 17 : index
    %c0_123 = arith.constant 0 : index
    %c0_124 = arith.constant 0 : index
    %105 = vector.load %arg2[%c17, %c0_123, %c0_124] : memref<32x128x20xf32, #tpu.memory_space<vmem>>, vector<1x128x20xf32>
    %106 = vector.shape_cast %105 : vector<1x128x20xf32> to vector<128x20xf32>
    %cst_125 = arith.constant dense<0.000000e+00> : vector<20x20xf32>
    %107 = tpu.matmul %104, %106, %cst_125 {dimension_numbers = #tpu.dot_dimension_numbers<[1], [0], [0], [1], [0, 0, 1, 1], [], []>} : vector<20x128xf32>, vector<128x20xf32>, vector<20x20xf32> -> vector<20x20xf32>
    %108 = arith.addf %102, %107 : vector<20x20xf32>
    %c0_126 = arith.constant 0 : index
    %c0_127 = arith.constant 0 : index
    %c9_128 = arith.constant 9 : index
    %c0_129 = arith.constant 0 : index
    %109 = vector.load %arg1[%c0_126, %c0_127, %c9_128, %c0_129] : memref<1x2x35x128xf32, #tpu.memory_space<vmem>>, vector<1x1x20x128xf32>
    %110 = vector.shape_cast %109 : vector<1x1x20x128xf32> to vector<20x128xf32>
    %c18 = arith.constant 18 : index
    %c0_130 = arith.constant 0 : index
    %c0_131 = arith.constant 0 : index
    %111 = vector.load %arg2[%c18, %c0_130, %c0_131] : memref<32x128x20xf32, #tpu.memory_space<vmem>>, vector<1x128x20xf32>
    %112 = vector.shape_cast %111 : vector<1x128x20xf32> to vector<128x20xf32>
    %cst_132 = arith.constant dense<0.000000e+00> : vector<20x20xf32>
    %113 = tpu.matmul %110, %112, %cst_132 {dimension_numbers = #tpu.dot_dimension_numbers<[1], [0], [0], [1], [0, 0, 1, 1], [], []>} : vector<20x128xf32>, vector<128x20xf32>, vector<20x20xf32> -> vector<20x20xf32>
    %114 = arith.addf %108, %113 : vector<20x20xf32>
    %c0_133 = arith.constant 0 : index
    %c1_134 = arith.constant 1 : index
    %c9_135 = arith.constant 9 : index
    %c0_136 = arith.constant 0 : index
    %115 = vector.load %arg1[%c0_133, %c1_134, %c9_135, %c0_136] : memref<1x2x35x128xf32, #tpu.memory_space<vmem>>, vector<1x1x20x128xf32>
    %116 = vector.shape_cast %115 : vector<1x1x20x128xf32> to vector<20x128xf32>
    %c19 = arith.constant 19 : index
    %c0_137 = arith.constant 0 : index
    %c0_138 = arith.constant 0 : index
    %117 = vector.load %arg2[%c19, %c0_137, %c0_138] : memref<32x128x20xf32, #tpu.memory_space<vmem>>, vector<1x128x20xf32>
    %118 = vector.shape_cast %117 : vector<1x128x20xf32> to vector<128x20xf32>
    %cst_139 = arith.constant dense<0.000000e+00> : vector<20x20xf32>
    %119 = tpu.matmul %116, %118, %cst_139 {dimension_numbers = #tpu.dot_dimension_numbers<[1], [0], [0], [1], [0, 0, 1, 1], [], []>} : vector<20x128xf32>, vector<128x20xf32>, vector<20x20xf32> -> vector<20x20xf32>
    %120 = arith.addf %114, %119 : vector<20x20xf32>
    %c0_140 = arith.constant 0 : index
    %c0_141 = arith.constant 0 : index
    %c10_142 = arith.constant 10 : index
    %c0_143 = arith.constant 0 : index
    %121 = vector.load %arg1[%c0_140, %c0_141, %c10_142, %c0_143] : memref<1x2x35x128xf32, #tpu.memory_space<vmem>>, vector<1x1x20x128xf32>
    %122 = vector.shape_cast %121 : vector<1x1x20x128xf32> to vector<20x128xf32>
    %c20 = arith.constant 20 : index
    %c0_144 = arith.constant 0 : index
    %c0_145 = arith.constant 0 : index
    %123 = vector.load %arg2[%c20, %c0_144, %c0_145] : memref<32x128x20xf32, #tpu.memory_space<vmem>>, vector<1x128x20xf32>
    %124 = vector.shape_cast %123 : vector<1x128x20xf32> to vector<128x20xf32>
    %cst_146 = arith.constant dense<0.000000e+00> : vector<20x20xf32>
    %125 = tpu.matmul %122, %124, %cst_146 {dimension_numbers = #tpu.dot_dimension_numbers<[1], [0], [0], [1], [0, 0, 1, 1], [], []>} : vector<20x128xf32>, vector<128x20xf32>, vector<20x20xf32> -> vector<20x20xf32>
    %126 = arith.addf %120, %125 : vector<20x20xf32>
    %c0_147 = arith.constant 0 : index
    %c1_148 = arith.constant 1 : index
    %c10_149 = arith.constant 10 : index
    %c0_150 = arith.constant 0 : index
    %127 = vector.load %arg1[%c0_147, %c1_148, %c10_149, %c0_150] : memref<1x2x35x128xf32, #tpu.memory_space<vmem>>, vector<1x1x20x128xf32>
    %128 = vector.shape_cast %127 : vector<1x1x20x128xf32> to vector<20x128xf32>
    %c21 = arith.constant 21 : index
    %c0_151 = arith.constant 0 : index
    %c0_152 = arith.constant 0 : index
    %129 = vector.load %arg2[%c21, %c0_151, %c0_152] : memref<32x128x20xf32, #tpu.memory_space<vmem>>, vector<1x128x20xf32>
    %130 = vector.shape_cast %129 : vector<1x128x20xf32> to vector<128x20xf32>
    %cst_153 = arith.constant dense<0.000000e+00> : vector<20x20xf32>
    %131 = tpu.matmul %128, %130, %cst_153 {dimension_numbers = #tpu.dot_dimension_numbers<[1], [0], [0], [1], [0, 0, 1, 1], [], []>} : vector<20x128xf32>, vector<128x20xf32>, vector<20x20xf32> -> vector<20x20xf32>
    %132 = arith.addf %126, %131 : vector<20x20xf32>
    %c0_154 = arith.constant 0 : index
    %c0_155 = arith.constant 0 : index
    %c11_156 = arith.constant 11 : index
    %c0_157 = arith.constant 0 : index
    %133 = vector.load %arg1[%c0_154, %c0_155, %c11_156, %c0_157] : memref<1x2x35x128xf32, #tpu.memory_space<vmem>>, vector<1x1x20x128xf32>
    %134 = vector.shape_cast %133 : vector<1x1x20x128xf32> to vector<20x128xf32>
    %c22 = arith.constant 22 : index
    %c0_158 = arith.constant 0 : index
    %c0_159 = arith.constant 0 : index
    %135 = vector.load %arg2[%c22, %c0_158, %c0_159] : memref<32x128x20xf32, #tpu.memory_space<vmem>>, vector<1x128x20xf32>
    %136 = vector.shape_cast %135 : vector<1x128x20xf32> to vector<128x20xf32>
    %cst_160 = arith.constant dense<0.000000e+00> : vector<20x20xf32>
    %137 = tpu.matmul %134, %136, %cst_160 {dimension_numbers = #tpu.dot_dimension_numbers<[1], [0], [0], [1], [0, 0, 1, 1], [], []>} : vector<20x128xf32>, vector<128x20xf32>, vector<20x20xf32> -> vector<20x20xf32>
    %138 = arith.addf %132, %137 : vector<20x20xf32>
    %c0_161 = arith.constant 0 : index
    %c1_162 = arith.constant 1 : index
    %c11_163 = arith.constant 11 : index
    %c0_164 = arith.constant 0 : index
    %139 = vector.load %arg1[%c0_161, %c1_162, %c11_163, %c0_164] : memref<1x2x35x128xf32, #tpu.memory_space<vmem>>, vector<1x1x20x128xf32>
    %140 = vector.shape_cast %139 : vector<1x1x20x128xf32> to vector<20x128xf32>
    %c23 = arith.constant 23 : index
    %c0_165 = arith.constant 0 : index
    %c0_166 = arith.constant 0 : index
    %141 = vector.load %arg2[%c23, %c0_165, %c0_166] : memref<32x128x20xf32, #tpu.memory_space<vmem>>, vector<1x128x20xf32>
    %142 = vector.shape_cast %141 : vector<1x128x20xf32> to vector<128x20xf32>
    %cst_167 = arith.constant dense<0.000000e+00> : vector<20x20xf32>
    %143 = tpu.matmul %140, %142, %cst_167 {dimension_numbers = #tpu.dot_dimension_numbers<[1], [0], [0], [1], [0, 0, 1, 1], [], []>} : vector<20x128xf32>, vector<128x20xf32>, vector<20x20xf32> -> vector<20x20xf32>
    %144 = arith.addf %138, %143 : vector<20x20xf32>
    %c0_168 = arith.constant 0 : index
    %c0_169 = arith.constant 0 : index
    %c12_170 = arith.constant 12 : index
    %c0_171 = arith.constant 0 : index
    %145 = vector.load %arg1[%c0_168, %c0_169, %c12_170, %c0_171] : memref<1x2x35x128xf32, #tpu.memory_space<vmem>>, vector<1x1x20x128xf32>
    %146 = vector.shape_cast %145 : vector<1x1x20x128xf32> to vector<20x128xf32>
    %c24 = arith.constant 24 : index
    %c0_172 = arith.constant 0 : index
    %c0_173 = arith.constant 0 : index
    %147 = vector.load %arg2[%c24, %c0_172, %c0_173] : memref<32x128x20xf32, #tpu.memory_space<vmem>>, vector<1x128x20xf32>
    %148 = vector.shape_cast %147 : vector<1x128x20xf32> to vector<128x20xf32>
    %cst_174 = arith.constant dense<0.000000e+00> : vector<20x20xf32>
    %149 = tpu.matmul %146, %148, %cst_174 {dimension_numbers = #tpu.dot_dimension_numbers<[1], [0], [0], [1], [0, 0, 1, 1], [], []>} : vector<20x128xf32>, vector<128x20xf32>, vector<20x20xf32> -> vector<20x20xf32>
    %150 = arith.addf %144, %149 : vector<20x20xf32>
    %c0_175 = arith.constant 0 : index
    %c1_176 = arith.constant 1 : index
    %c12_177 = arith.constant 12 : index
    %c0_178 = arith.constant 0 : index
    %151 = vector.load %arg1[%c0_175, %c1_176, %c12_177, %c0_178] : memref<1x2x35x128xf32, #tpu.memory_space<vmem>>, vector<1x1x20x128xf32>
    %152 = vector.shape_cast %151 : vector<1x1x20x128xf32> to vector<20x128xf32>
    %c25 = arith.constant 25 : index
    %c0_179 = arith.constant 0 : index
    %c0_180 = arith.constant 0 : index
    %153 = vector.load %arg2[%c25, %c0_179, %c0_180] : memref<32x128x20xf32, #tpu.memory_space<vmem>>, vector<1x128x20xf32>
    %154 = vector.shape_cast %153 : vector<1x128x20xf32> to vector<128x20xf32>
    %cst_181 = arith.constant dense<0.000000e+00> : vector<20x20xf32>
    %155 = tpu.matmul %152, %154, %cst_181 {dimension_numbers = #tpu.dot_dimension_numbers<[1], [0], [0], [1], [0, 0, 1, 1], [], []>} : vector<20x128xf32>, vector<128x20xf32>, vector<20x20xf32> -> vector<20x20xf32>
    %156 = arith.addf %150, %155 : vector<20x20xf32>
    %c0_182 = arith.constant 0 : index
    %c0_183 = arith.constant 0 : index
    %c13_184 = arith.constant 13 : index
    %c0_185 = arith.constant 0 : index
    %157 = vector.load %arg1[%c0_182, %c0_183, %c13_184, %c0_185] : memref<1x2x35x128xf32, #tpu.memory_space<vmem>>, vector<1x1x20x128xf32>
    %158 = vector.shape_cast %157 : vector<1x1x20x128xf32> to vector<20x128xf32>
    %c26 = arith.constant 26 : index
    %c0_186 = arith.constant 0 : index
    %c0_187 = arith.constant 0 : index
    %159 = vector.load %arg2[%c26, %c0_186, %c0_187] : memref<32x128x20xf32, #tpu.memory_space<vmem>>, vector<1x128x20xf32>
    %160 = vector.shape_cast %159 : vector<1x128x20xf32> to vector<128x20xf32>
    %cst_188 = arith.constant dense<0.000000e+00> : vector<20x20xf32>
    %161 = tpu.matmul %158, %160, %cst_188 {dimension_numbers = #tpu.dot_dimension_numbers<[1], [0], [0], [1], [0, 0, 1, 1], [], []>} : vector<20x128xf32>, vector<128x20xf32>, vector<20x20xf32> -> vector<20x20xf32>
    %162 = arith.addf %156, %161 : vector<20x20xf32>
    %c0_189 = arith.constant 0 : index
    %c1_190 = arith.constant 1 : index
    %c13_191 = arith.constant 13 : index
    %c0_192 = arith.constant 0 : index
    %163 = vector.load %arg1[%c0_189, %c1_190, %c13_191, %c0_192] : memref<1x2x35x128xf32, #tpu.memory_space<vmem>>, vector<1x1x20x128xf32>
    %164 = vector.shape_cast %163 : vector<1x1x20x128xf32> to vector<20x128xf32>
    %c27 = arith.constant 27 : index
    %c0_193 = arith.constant 0 : index
    %c0_194 = arith.constant 0 : index
    %165 = vector.load %arg2[%c27, %c0_193, %c0_194] : memref<32x128x20xf32, #tpu.memory_space<vmem>>, vector<1x128x20xf32>
    %166 = vector.shape_cast %165 : vector<1x128x20xf32> to vector<128x20xf32>
    %cst_195 = arith.constant dense<0.000000e+00> : vector<20x20xf32>
    %167 = tpu.matmul %164, %166, %cst_195 {dimension_numbers = #tpu.dot_dimension_numbers<[1], [0], [0], [1], [0, 0, 1, 1], [], []>} : vector<20x128xf32>, vector<128x20xf32>, vector<20x20xf32> -> vector<20x20xf32>
    %168 = arith.addf %162, %167 : vector<20x20xf32>
    %c0_196 = arith.constant 0 : index
    %c0_197 = arith.constant 0 : index
    %c14_198 = arith.constant 14 : index
    %c0_199 = arith.constant 0 : index
    %169 = vector.load %arg1[%c0_196, %c0_197, %c14_198, %c0_199] : memref<1x2x35x128xf32, #tpu.memory_space<vmem>>, vector<1x1x20x128xf32>
    %170 = vector.shape_cast %169 : vector<1x1x20x128xf32> to vector<20x128xf32>
    %c28 = arith.constant 28 : index
    %c0_200 = arith.constant 0 : index
    %c0_201 = arith.constant 0 : index
    %171 = vector.load %arg2[%c28, %c0_200, %c0_201] : memref<32x128x20xf32, #tpu.memory_space<vmem>>, vector<1x128x20xf32>
    %172 = vector.shape_cast %171 : vector<1x128x20xf32> to vector<128x20xf32>
    %cst_202 = arith.constant dense<0.000000e+00> : vector<20x20xf32>
    %173 = tpu.matmul %170, %172, %cst_202 {dimension_numbers = #tpu.dot_dimension_numbers<[1], [0], [0], [1], [0, 0, 1, 1], [], []>} : vector<20x128xf32>, vector<128x20xf32>, vector<20x20xf32> -> vector<20x20xf32>
    %174 = arith.addf %168, %173 : vector<20x20xf32>
    %c0_203 = arith.constant 0 : index
    %c1_204 = arith.constant 1 : index
    %c14_205 = arith.constant 14 : index
    %c0_206 = arith.constant 0 : index
    %175 = vector.load %arg1[%c0_203, %c1_204, %c14_205, %c0_206] : memref<1x2x35x128xf32, #tpu.memory_space<vmem>>, vector<1x1x20x128xf32>
    %176 = vector.shape_cast %175 : vector<1x1x20x128xf32> to vector<20x128xf32>
    %c29 = arith.constant 29 : index
    %c0_207 = arith.constant 0 : index
    %c0_208 = arith.constant 0 : index
    %177 = vector.load %arg2[%c29, %c0_207, %c0_208] : memref<32x128x20xf32, #tpu.memory_space<vmem>>, vector<1x128x20xf32>
    %178 = vector.shape_cast %177 : vector<1x128x20xf32> to vector<128x20xf32>
    %cst_209 = arith.constant dense<0.000000e+00> : vector<20x20xf32>
    %179 = tpu.matmul %176, %178, %cst_209 {dimension_numbers = #tpu.dot_dimension_numbers<[1], [0], [0], [1], [0, 0, 1, 1], [], []>} : vector<20x128xf32>, vector<128x20xf32>, vector<20x20xf32> -> vector<20x20xf32>
    %180 = arith.addf %174, %179 : vector<20x20xf32>
    %c0_210 = arith.constant 0 : index
    %c0_211 = arith.constant 0 : index
    %c15_212 = arith.constant 15 : index
    %c0_213 = arith.constant 0 : index
    %181 = vector.load %arg1[%c0_210, %c0_211, %c15_212, %c0_213] : memref<1x2x35x128xf32, #tpu.memory_space<vmem>>, vector<1x1x20x128xf32>
    %182 = vector.shape_cast %181 : vector<1x1x20x128xf32> to vector<20x128xf32>
    %c30 = arith.constant 30 : index
    %c0_214 = arith.constant 0 : index
    %c0_215 = arith.constant 0 : index
    %183 = vector.load %arg2[%c30, %c0_214, %c0_215] : memref<32x128x20xf32, #tpu.memory_space<vmem>>, vector<1x128x20xf32>
    %184 = vector.shape_cast %183 : vector<1x128x20xf32> to vector<128x20xf32>
    %cst_216 = arith.constant dense<0.000000e+00> : vector<20x20xf32>
    %185 = tpu.matmul %182, %184, %cst_216 {dimension_numbers = #tpu.dot_dimension_numbers<[1], [0], [0], [1], [0, 0, 1, 1], [], []>} : vector<20x128xf32>, vector<128x20xf32>, vector<20x20xf32> -> vector<20x20xf32>
    %186 = arith.addf %180, %185 : vector<20x20xf32>
    %c0_217 = arith.constant 0 : index
    %c1_218 = arith.constant 1 : index
    %c15_219 = arith.constant 15 : index
    %c0_220 = arith.constant 0 : index
    %187 = vector.load %arg1[%c0_217, %c1_218, %c15_219, %c0_220] : memref<1x2x35x128xf32, #tpu.memory_space<vmem>>, vector<1x1x20x128xf32>
    %188 = vector.shape_cast %187 : vector<1x1x20x128xf32> to vector<20x128xf32>
    %c31 = arith.constant 31 : index
    %c0_221 = arith.constant 0 : index
    %c0_222 = arith.constant 0 : index
    %189 = vector.load %arg2[%c31, %c0_221, %c0_222] : memref<32x128x20xf32, #tpu.memory_space<vmem>>, vector<1x128x20xf32>
    %190 = vector.shape_cast %189 : vector<1x128x20xf32> to vector<128x20xf32>
    %cst_223 = arith.constant dense<0.000000e+00> : vector<20x20xf32>
    %191 = tpu.matmul %188, %190, %cst_223 {dimension_numbers = #tpu.dot_dimension_numbers<[1], [0], [0], [1], [0, 0, 1, 1], [], []>} : vector<20x128xf32>, vector<128x20xf32>, vector<20x20xf32> -> vector<20x20xf32>
    %192 = arith.addf %186, %191 : vector<20x20xf32>
    %c0_224 = arith.constant 0 : index
    %c0_225 = arith.constant 0 : index
    %193 = memref.load %arg3[%c0_224, %c0_225] : memref<1x1xf32, #tpu.memory_space<smem>>
    %194 = vector.broadcast %193 : f32 to vector<20x20xf32>
    %195 = arith.addf %192, %194 : vector<20x20xf32>
    %cst_226 = arith.constant 0.000000e+00 : f32
    %196 = vector.broadcast %cst_226 : f32 to vector<20x20xf32>
    %197 = arith.cmpf ogt, %195, %196 : vector<20x20xf32>
    %cst_227 = arith.constant 1.000000e-01 : f32
    %198 = vector.broadcast %cst_227 : f32 to vector<20x20xf32>
    %199 = arith.mulf %195, %198 : vector<20x20xf32>
    %200 = arith.select %197, %195, %199 : vector<20x20xi1>, vector<20x20xf32>
    %c0_228 = arith.constant 0 : index
    %c0_229 = arith.constant 0 : index
    %c0_230 = arith.constant 0 : index
    %201 = vector.load %arg4[%c0_228, %c0_229, %c0_230] : memref<1x20x20xf32, #tpu.memory_space<vmem>>, vector<1x20x20xf32>
    %202 = vector.shape_cast %201 : vector<1x20x20xf32> to vector<20x20xf32>
    %203 = vector.shape_cast %200 : vector<20x20xf32> to vector<1x20x20xf32>
    tpu.vector_store %arg4[%c0_228, %c0_229, %c0_230], %203 {strides = array<i32>} : memref<1x20x20xf32, #tpu.memory_space<vmem>>, vector<1x20x20xf32>,
    return
  }
  func.func @transform_0(%arg0: i32) -> (i32, i32, i32, i32) {
    %c0_i32 = arith.constant 0 : i32
    %c0_i32_0 = arith.constant 0 : i32
    %c0_i32_1 = arith.constant 0 : i32
    %c0_i32_2 = arith.constant 0 : i32
    return %arg0, %c0_i32, %c0_i32_0, %c0_i32_1 : i32, i32, i32, i32
  }
  func.func @transform_1(%arg0: i32) -> (i32, i32, i32) {
    %c0_i32 = arith.constant 0 : i32
    %c0_i32_0 = arith.constant 0 : i32
    %c0_i32_1 = arith.constant 0 : i32
    %c0_i32_2 = arith.constant 0 : i32
    return %c0_i32, %c0_i32_0, %c0_i32_1 : i32, i32, i32
  }
  func.func @transform_2(%arg0: i32) -> (i32, i32) {
    %c0_i32 = arith.constant 0 : i32
    %c0_i32_0 = arith.constant 0 : i32
    %c0_i32_1 = arith.constant 0 : i32
    return %c0_i32, %c0_i32_0 : i32, i32
  }
  func.func @transform_3(%arg0: i32) -> (i32, i32, i32) {
    %c0_i32 = arith.constant 0 : i32
    %c0_i32_0 = arith.constant 0 : i32
    %c0_i32_1 = arith.constant 0 : i32
    return %arg0, %c0_i32, %c0_i32_0 : i32, i32, i32
  }
}

</mosaic_0001>

<llo_original>
// kernel: conv_leaky_relu.1
$region0: #{conv_leaky_relu.1}
  #allocation0 [shape = 'u32[]', space=smem, size = 0x4, offset = 0x4, fixed_abs, tag = 'smem constant byte address 0x4 - core index']
  #allocation1 [shape = 'u32[144,128]{1,0:T(1,128)}', space=vmem, size = 0x12000, scoped, tag = 'internal scratch']
  #allocation2 [shape = 'f32[1,1]{1,0:T(1,128)S(6)}', space=smem, size = 0x200, scoped, tag = 'scoped memory for conv_leaky_relu.1']
  %s0 = inlined_call_operand.vmem [shape: f32[2,2,35,128], index: 0, kind: input, shape index: {}]
  %s1 = inlined_call_operand.vmem [shape: f32[32,128,20], index: 1, kind: input, shape index: {}]
  %s2 = inlined_call_operand.<no memory space> [shape: f32[1,1], index: 2, kind: input, shape index: {}]
  %s3 = inlined_call_operand.vmem [shape: f32[2,20,20], index: 3, kind: output, shape index: {}]
  %s4 = sld [smem:[#allocation0]]
  $region45: #{conv_leaky_relu.1} parent=0
    _
  %s6 = ssub.s32 1, %s4
  %s7 = scalar_select 0, %s6, %s4
  %8 = sst [smem:[#allocation2]] %s2
  loop: start=0, step=1, limit=4
  $region2: #{conv_leaky_relu.1} parent=0 // loop_pre_header
    _
  $region3: #{conv_leaky_relu.1} parent=0 // loop_header
    %s10 = sphi 0, %s14
    %p11 = scmp.ge.s32.totalorder %s10, 4
    %s20 = sphi 0, %s22
    %s23 = sphi 0, %s20
    %s24 = sphi 0, %s23
    %s40 = sphi 0, %s24
    %s44 = sphi 0, %s44
    %s46 = sphi 0, %s44
    %s47 = sphi 0, %s46
    %s61 = sphi 0, %s47
    %s65 = sphi 0, %s65
    %s67 = sphi 0, %s65
    %s68 = sphi 0, %s67
    %s82 = sphi 0, %s68
    %s88 = sphi 0, %s90
    %s91 = sphi 0, %s88
    %s92 = sphi 0, %s91
    %s108 = sphi 0, %s92
  $region4: #{conv_leaky_relu.1} parent=0 // loop_header_branch
    %13 = sbr.rel (%p11) target = $region8
  $region5: #{conv_leaky_relu.1} parent=0 // loop_body
    %s15 = ssub.s32 %s10, 1
    %s16 = ssub.s32 %s10, 2
    %s17 = sadd.s32 %s10, 1
    %s18 = ssub.s32 %s10, %s17
    %p19 = scmp.eq.s32.totalorder %s18, 0
    %s21 = sadd.s32 %s20, 1
    %s22 = scalar_select %p19, %s20, %s21
    %p25 = pneg %p19
    %p26 = scmp.eq.s32.totalorder %s10, 1
    %p27 = por %p25, %p26
    %p28 = scmp.ne.s32.totalorder %s20, %s23
    %p29 = scmp.eq.s32.totalorder %s10, 0
    %p30 = por %p28, %p29
    %p31 = scmp.ne.s32.totalorder %s20, %s23
    %p32 = scmp.eq.s32.totalorder %s15, 1
    %p33 = por %p31, %p32
    %p34 = scmp.ne.s32.totalorder %s23, %s24
    %p35 = scmp.eq.s32.totalorder %s15, 0
    %p36 = por %p34, %p35
    %p37 = scmp.ne.s32.totalorder %s23, %s24
    %p38 = scmp.eq.s32.totalorder %s16, 1
    %p39 = por %p37, %p38
    %p41 = scmp.ne.s32.totalorder %s24, %s40
    %p42 = scmp.eq.s32.totalorder %s16, 0
    %p43 = por %p41, %p42
    %s45 = sadd.s32 %s44, 1
    %p48 = scmp.eq.s32.totalorder %s10, 1
    %p49 = scmp.ne.s32.totalorder %s44, %s46
    %p50 = scmp.eq.s32.totalorder %s10, 0
    %p51 = por %p49, %p50
    %p52 = scmp.ne.s32.totalorder %s44, %s46
    %p53 = scmp.eq.s32.totalorder %s15, 1
    %p54 = por %p52, %p53
    %p55 = scmp.ne.s32.totalorder %s46, %s47
    %p56 = scmp.eq.s32.totalorder %s15, 0
    %p57 = por %p55, %p56
    %p58 = scmp.ne.s32.totalorder %s46, %s47
    %p59 = scmp.eq.s32.totalorder %s16, 1
    %p60 = por %p58, %p59
    %p62 = scmp.ne.s32.totalorder %s47, %s61
    %p63 = scmp.eq.s32.totalorder %s16, 0
    %p64 = por %p62, %p63
    %s66 = sadd.s32 %s65, 1
    %p69 = scmp.eq.s32.totalorder %s10, 1
    %p70 = scmp.ne.s32.totalorder %s65, %s67
    %p71 = scmp.eq.s32.totalorder %s10, 0
    %p72 = por %p70, %p71
    %p73 = scmp.ne.s32.totalorder %s65, %s67
    %p74 = scmp.eq.s32.totalorder %s15, 1
    %p75 = por %p73, %p74
    %p76 = scmp.ne.s32.totalorder %s67, %s68
    %p77 = scmp.eq.s32.totalorder %s15, 0
    %p78 = por %p76, %p77
    %p79 = scmp.ne.s32.totalorder %s67, %s68
    %p80 = scmp.eq.s32.totalorder %s16, 1
    %p81 = por %p79, %p80
    %p83 = scmp.ne.s32.totalorder %s68, %s82
    %p84 = scmp.eq.s32.totalorder %s16, 0
    %p85 = por %p83, %p84
    %s86 = ssub.s32 %s10, %s17
    %p87 = scmp.eq.s32.totalorder %s86, 0
    %s89 = sadd.s32 %s88, 1
    %s90 = scalar_select %p87, %s88, %s89
    %p93 = pneg %p87
    %p94 = scmp.eq.s32.totalorder %s10, 1
    %p95 = por %p93, %p94
    %p96 = scmp.ne.s32.totalorder %s88, %s91
    %p97 = scmp.eq.s32.totalorder %s10, 0
    %p98 = por %p96, %p97
    %p99 = scmp.ne.s32.totalorder %s88, %s91
    %p100 = scmp.eq.s32.totalorder %s15, 1
    %p101 = por %p99, %p100
    %p102 = scmp.ne.s32.totalorder %s91, %s92
    %p103 = scmp.eq.s32.totalorder %s15, 0
    %p104 = por %p102, %p103
    %p105 = scmp.ne.s32.totalorder %s91, %s92
    %p106 = scmp.eq.s32.totalorder %s16, 1
    %p107 = por %p105, %p106
    %p109 = scmp.ne.s32.totalorder %s92, %s108
    %p110 = scmp.eq.s32.totalorder %s16, 0
    %p111 = por %p109, %p110
    %p112 = scmp.le.s32.totalorder 1, %s10
    %p113 = scmp.lt.s32.totalorder %s10, 3
    %p114 = pnand %p112, %p113
    %p115 = pneg %p114
    // Predicated region
    $region9: #{conv_leaky_relu.1} parent=5 // pred_check
      _
    $region10: #{conv_leaky_relu.1} parent=5 // pred_check_branch
      %117 = sbr.rel (%p114) target = $region12
    $region11: #{conv_leaky_relu.1} parent=5 // pred_region
      %s118 = ssub.s32 %s10, 1
      // Predicated region
      $region13: #{conv_leaky_relu.1} parent=11 // pred_check
        %p119 = pneg %p57
      $region14: #{conv_leaky_relu.1} parent=11 // pred_check_branch
        %121 = sbr.rel (%p119) target = $region16
      $region15: #{conv_leaky_relu.1} parent=11 // pred_region
        _
      $region16: #{conv_leaky_relu.1} parent=11 // pred_fallthru
        _
      // Predicated region
      $region17: #{conv_leaky_relu.1} parent=11 // pred_check
        %p122 = pneg %p78
      $region18: #{conv_leaky_relu.1} parent=11 // pred_check_branch
        %124 = sbr.rel (%p122) target = $region20
      $region19: #{conv_leaky_relu.1} parent=11 // pred_region
        _
      $region20: #{conv_leaky_relu.1} parent=11 // pred_fallthru
        _
    $region12: #{conv_leaky_relu.1} parent=5 // pred_fallthru
      _
    %p125 = scmp.lt.s32.totalorder %s10, 2
    // Predicated region
    $region21: #{conv_leaky_relu.1} parent=5 // pred_check
      %p126 = pneg %p125
    $region22: #{conv_leaky_relu.1} parent=5 // pred_check_branch
      %128 = sbr.rel (%p126) target = $region24
    $region23: #{conv_leaky_relu.1} parent=5 // pred_region
      // Predicated region
      $region25: #{conv_leaky_relu.1} parent=23 // pred_check
        %p129 = pneg %p30
      $region26: #{conv_leaky_relu.1} parent=23 // pred_check_branch
        %131 = sbr.rel (%p129) target = $region28
      $region27: #{conv_leaky_relu.1} parent=23 // pred_region
        %p132 = scmp.lt.s32.totalorder %s10, 1
        %s133 = scalar_select %p132, %s10, 1
        %s134 = smul.addr %s133, 10
        %s135 = smul.addr %s134, 8
        %s136 = scalar_lea.vmem %s0, %s135
      $region28: #{conv_leaky_relu.1} parent=23 // pred_fallthru
        _
    $region24: #{conv_leaky_relu.1} parent=5 // pred_fallthru
      _
    %p137 = scmp.le.s32.totalorder 1, %s10
    %p138 = scmp.lt.s32.totalorder %s10, 3
    %p139 = pnand %p137, %p138
    %p140 = pneg %p139
    // Predicated region
    $region29: #{conv_leaky_relu.1} parent=5 // pred_check
      _
    $region30: #{conv_leaky_relu.1} parent=5 // pred_check_branch
      %142 = sbr.rel (%p139) target = $region32
    $region31: #{conv_leaky_relu.1} parent=5 // pred_region
      %s143 = ssub.s32 %s10, 1
      %p144 = scmp.lt.s32.totalorder %s15, 1
      %s145 = scalar_select %p144, %s15, 1
      %s146 = smul.addr %s145, 10
      %s147 = smul.addr %s146, 8
      %s148 = scalar_lea.vmem %s0, %s147
      %p149 = pneg %p36
      %p150 = pneg %p33
      %p151 = pneg %p57
      %p152 = pneg %p54
      %p153 = pneg %p78
      %p154 = pneg %p75
      %p155 = pneg %p104
      %p156 = pneg %p101
      %p157 = scmp.lt.s32.totalorder %s15, 1
      %s158 = scalar_select %p157, %s15, 1
      %s159 = smul.addr %s158, 3
      %s160 = smul.addr %s159, 8
      %s161 = scalar_lea.vmem %s3, %s160
      %p162 = scmp.lt.s32.totalorder %s15, 1
      %s163 = scalar_select %p162, %s15, 1
      %s164 = smul.addr %s163, 10
      %s165 = smul.addr %s164, 8
      %s166 = scalar_lea.vmem %s0, %s165
      %p167 = scmp.lt.s32.totalorder %s15, 1
      %s168 = scalar_select %p167, %s15, 1
      %s169 = smul.addr %s168, 3
      %s170 = smul.addr %s169, 8
      %s171 = scalar_lea.vmem %s3, %s170
      %v172 = vld [vmem:[%s166] sm:$0xff]
      %v173 = vld [vmem:[%s166 + $0x8] sm:$0xff]
      %v174 = vld [vmem:[%s166 + $0x10] sm:$0xf]
      %v175 = vld [vmem:[%s1] sm:$0xff]
      %v176 = vld [vmem:[%s1 + $0x8] sm:$0xff]
      %v177 = vld [vmem:[%s1 + $0x10] sm:$0xff]
      %v178 = vld [vmem:[%s1 + $0x18] sm:$0xff]
      %v179 = vld [vmem:[%s1 + $0x20] sm:$0xff]
      %v180 = vld [vmem:[%s1 + $0x28] sm:$0xff]
      %v181 = vld [vmem:[%s1 + $0x30] sm:$0xff]
      %v182 = vld [vmem:[%s1 + $0x38] sm:$0xff]
      %v183 = vld [vmem:[%s1 + $0x40] sm:$0xff]
      %v184 = vld [vmem:[%s1 + $0x48] sm:$0xff]
      %v185 = vld [vmem:[%s1 + $0x50] sm:$0xff]
      %v186 = vld [vmem:[%s1 + $0x58] sm:$0xff]
      %v187 = vld [vmem:[%s1 + $0x60] sm:$0xff]
      %v188 = vld [vmem:[%s1 + $0x68] sm:$0xff]
      %v189 = vld [vmem:[%s1 + $0x70] sm:$0xff]
      %v190 = vld [vmem:[%s1 + $0x78] sm:$0xff]
      %s191 = scalar_lea.vmem %s166, 40
      %v192 = vld [vmem:[%s191] sm:$0xff]
      %v193 = vld [vmem:[%s191 + $0x8] sm:$0xff]
      %v194 = vld [vmem:[%s191 + $0x10] sm:$0xf]
      %s195 = scalar_lea.vmem %s1, 128
      %v196 = vld [vmem:[%s195] sm:$0xff]
      %v197 = vld [vmem:[%s195 + $0x8] sm:$0xff]
      %v198 = vld [vmem:[%s195 + $0x10] sm:$0xff]
      %v199 = vld [vmem:[%s195 + $0x18] sm:$0xff]
      %v200 = vld [vmem:[%s195 + $0x20] sm:$0xff]
      %v201 = vld [vmem:[%s195 + $0x28] sm:$0xff]
      %v202 = vld [vmem:[%s195 + $0x30] sm:$0xff]
      %v203 = vld [vmem:[%s195 + $0x38] sm:$0xff]
      %v204 = vld [vmem:[%s195 + $0x40] sm:$0xff]
      %v205 = vld [vmem:[%s195 + $0x48] sm:$0xff]
      %v206 = vld [vmem:[%s195 + $0x50] sm:$0xff]
      %v207 = vld [vmem:[%s195 + $0x58] sm:$0xff]
      %v208 = vld [vmem:[%s195 + $0x60] sm:$0xff]
      %v209 = vld [vmem:[%s195 + $0x68] sm:$0xff]
      %v210 = vld [vmem:[%s195 + $0x70] sm:$0xff]
      %v211 = vld [vmem:[%s195 + $0x78] sm:$0xff]
      %212 = vmatprep.subr.mxu0 0.0
      %213 = vmatpush1.msra.mxu0 %v196
      %214 = vmatprep.subr.mxu0 0.0
      %215 = vmatpush1.msra.mxu0 %v197
      %216 = vmatprep.subr.mxu0 0.0
      %217 = vmatpush1.msra.mxu0 %v198
      %218 = vmatprep.subr.mxu0 0.0
      %219 = vmatpush1.msra.mxu0 %v199
      %220 = vmatprep.subr.mxu0 0.0
      %221 = vmatpush1.msra.mxu0 %v200
      %222 = vmatprep.subr.mxu0 0.0
      %223 = vmatpush1.msra.mxu0 %v201
      %224 = vmatprep.subr.mxu0 0.0
      %225 = vmatpush1.msra.mxu0 %v202
      %226 = vmatprep.subr.mxu0 0.0
      %227 = vmatpush1.msra.mxu0 %v203
      %228 = vmatprep.subr.mxu0 0.0
      %229 = vmatpush1.msra.mxu0 %v204
      %230 = vmatprep.subr.mxu0 0.0
      %231 = vmatpush1.msra.mxu0 %v205
      %232 = vmatprep.subr.mxu0 0.0
      %233 = vmatpush1.msra.mxu0 %v206
      %234 = vmatprep.subr.mxu0 0.0
      %235 = vmatpush1.msra.mxu0 %v207
      %236 = vmatprep.subr.mxu0 0.0
      %237 = vmatpush1.msra.mxu0 %v208
      %238 = vmatprep.subr.mxu0 0.0
      %239 = vmatpush1.msra.mxu0 %v209
      %240 = vmatprep.subr.mxu0 0.0
      %241 = vmatpush1.msra.mxu0 %v210
      %242 = vmatprep.subr.mxu0 0.0
      %243 = vmatpush1.msra.mxu0 %v211
      %244 = vmatprep.subr.mxu0 0.0
      %245 = vmatpush1.msra.mxu0 0.0
      %246 = vmatprep.subr.mxu0 0.0
      %247 = vmatpush1.msra.mxu0 0.0
      %248 = vmatprep.subr.mxu0 0.0
      %249 = vmatpush1.msra.mxu0 0.0
      %250 = vmatprep.subr.mxu0 0.0
      %251 = vmatpush1.msra.mxu0 0.0
      %252 = vmatprep.subr.mxu0 0.0
      %253 = vmatpush1.msra.mxu0 0.0
      %254 = vmatprep.subr.mxu0 0.0
      %255 = vmatpush1.msra.mxu0 0.0
      %256 = vmatprep.subr.mxu0 0.0
      %257 = vmatpush1.msra.mxu0 0.0
      %258 = vmatprep.subr.mxu0 0.0
      %259 = vmatpush1.msra.mxu0 0.0
      %260 = vmatprep.subr.mxu0 0.0
      %261 = vmatpush1.msra.mxu0 0.0
      %262 = vmatprep.subr.mxu0 0.0
      %263 = vmatpush1.msra.mxu0 0.0
      %264 = vmatprep.subr.mxu0 0.0
      %265 = vmatpush1.msra.mxu0 0.0
      %266 = vmatprep.subr.mxu0 0.0
      %267 = vmatpush1.msra.mxu0 0.0
      %268 = vmatprep.subr.mxu0 0.0
      %269 = vmatpush1.msra.mxu0 0.0
      %270 = vmatprep.subr.mxu0 0.0
      %271 = vmatpush1.msra.mxu0 0.0
      %272 = vmatprep.subr.mxu0 0.0
      %273 = vmatpush1.msra.mxu0 0.0
      %274 = vmatprep.subr.mxu0 0.0
      %275 = vmatpush1.msra.mxu0 0.0
      %276 = vmatprep.mubr.f32.mxu0 0.0
      %277 = vmatmul.mubr.f32.gmra.mrb[0].mxu0 %v192
      %v278 = vpop.f32.mrb[0].mxu0
      %v279 = vadd.f32 0.0, %v278
      %v280 = vpop.f32.mrb[0].mxu0
      %281 = vmatprep.mubr.f32.mxu0 0.0
      %282 = vmatmul.mubr.f32.gmra.mrb[0].mxu0 %v193
      %v283 = vpop.f32.mrb[0].mxu0
      %v284 = vadd.f32 0.0, %v283
      %v285 = vpop.f32.mrb[0].mxu0
      %286 = vmatprep.mubr.f32.mxu0 0.0
      %287 = vmatmul.mubr.f32.gmra.mrb[0].mxu0 %v194
      %v288 = vpop.f32.mrb[0].mxu0
      %v289 = vadd.f32 0.0, %v288
      %v290 = vpop.f32.mrb[0].mxu0
      %291 = vdwg.mxu0
      %292 = vmatprep.subr.mxu0 0.0
      %293 = vmatpush1.msra.mxu0 %v175
      %294 = vmatprep.subr.mxu0 0.0
      %295 = vmatpush1.msra.mxu0 %v176
      %296 = vmatprep.subr.mxu0 0.0
      %297 = vmatpush1.msra.mxu0 %v177
      %298 = vmatprep.subr.mxu0 0.0
      %299 = vmatpush1.msra.mxu0 %v178
      %300 = vmatprep.subr.mxu0 0.0
      %301 = vmatpush1.msra.mxu0 %v179
      %302 = vmatprep.subr.mxu0 0.0
      %303 = vmatpush1.msra.mxu0 %v180
      %304 = vmatprep.subr.mxu0 0.0
      %305 = vmatpush1.msra.mxu0 %v181
      %306 = vmatprep.subr.mxu0 0.0
      %307 = vmatpush1.msra.mxu0 %v182
      %308 = vmatprep.subr.mxu0 0.0
      %309 = vmatpush1.msra.mxu0 %v183
      %310 = vmatprep.subr.mxu0 0.0
      %311 = vmatpush1.msra.mxu0 %v184
      %312 = vmatprep.subr.mxu0 0.0
      %313 = vmatpush1.msra.mxu0 %v185
      %314 = vmatprep.subr.mxu0 0.0
      %315 = vmatpush1.msra.mxu0 %v186
      %316 = vmatprep.subr.mxu0 0.0
      %317 = vmatpush1.msra.mxu0 %v187
      %318 = vmatprep.subr.mxu0 0.0
      %319 = vmatpush1.msra.mxu0 %v188
      %320 = vmatprep.subr.mxu0 0.0
      %321 = vmatpush1.msra.mxu0 %v189
      %322 = vmatprep.subr.mxu0 0.0
      %323 = vmatpush1.msra.mxu0 %v190
      %324 = vmatprep.subr.mxu0 0.0
      %325 = vmatpush1.msra.mxu0 0.0
      %326 = vmatprep.subr.mxu0 0.0
      %327 = vmatpush1.msra.mxu0 0.0
      %328 = vmatprep.subr.mxu0 0.0
      %329 = vmatpush1.msra.mxu0 0.0
      %330 = vmatprep.subr.mxu0 0.0
      %331 = vmatpush1.msra.mxu0 0.0
      %332 = vmatprep.subr.mxu0 0.0
      %333 = vmatpush1.msra.mxu0 0.0
      %334 = vmatprep.subr.mxu0 0.0
      %335 = vmatpush1.msra.mxu0 0.0
      %336 = vmatprep.subr.mxu0 0.0
      %337 = vmatpush1.msra.mxu0 0.0
      %338 = vmatprep.subr.mxu0 0.0
      %339 = vmatpush1.msra.mxu0 0.0
      %340 = vmatprep.subr.mxu0 0.0
      %341 = vmatpush1.msra.mxu0 0.0
      %342 = vmatprep.subr.mxu0 0.0
      %343 = vmatpush1.msra.mxu0 0.0
      %344 = vmatprep.subr.mxu0 0.0
      %345 = vmatpush1.msra.mxu0 0.0
      %346 = vmatprep.subr.mxu0 0.0
      %347 = vmatpush1.msra.mxu0 0.0
      %348 = vmatprep.subr.mxu0 0.0
      %349 = vmatpush1.msra.mxu0 0.0
      %350 = vmatprep.subr.mxu0 0.0
      %351 = vmatpush1.msra.mxu0 0.0
      %352 = vmatprep.subr.mxu0 0.0
      %353 = vmatpush1.msra.mxu0 0.0
      %354 = vmatprep.subr.mxu0 0.0
      %355 = vmatpush1.msra.mxu0 0.0
      %356 = vmatprep.mubr.f32.mxu0 0.0
      %357 = vmatmul.mubr.f32.gmra.mrb[0].mxu0 %v172
      %v358 = vpop.f32.mrb[0].mxu0
      %v359 = vadd.f32 %v279, %v358
      %v360 = vpop.f32.mrb[0].mxu0
      %361 = vmatprep.mubr.f32.mxu0 0.0
      %362 = vmatmul.mubr.f32.gmra.mrb[0].mxu0 %v173
      %v363 = vpop.f32.mrb[0].mxu0
      %v364 = vadd.f32 %v284, %v363
      %v365 = vpop.f32.mrb[0].mxu0
      %366 = vmatprep.mubr.f32.mxu0 0.0
      %367 = vmatmul.mubr.f32.gmra.mrb[0].mxu0 %v174
      %v368 = vpop.f32.mrb[0].mxu0
      %v369 = vadd.f32 %v289, %v368
      %v370 = vpop.f32.mrb[0].mxu0
      %371 = vdwg.mxu0
      %v372 = vld [vmem:[%s166 + $0x1] sm:$0xff]
      %v373 = vld [vmem:[%s166 + $0x9] sm:$0xff]
      %v374 = vld [vmem:[%s166 + $0x11] sm:$0xf]
      %s375 = scalar_lea.vmem %s1, 256
      %v376 = vld [vmem:[%s375] sm:$0xff]
      %v377 = vld [vmem:[%s375 + $0x8] sm:$0xff]
      %v378 = vld [vmem:[%s375 + $0x10] sm:$0xff]
      %v379 = vld [vmem:[%s375 + $0x18] sm:$0xff]
      %v380 = vld [vmem:[%s375 + $0x20] sm:$0xff]
      %v381 = vld [vmem:[%s375 + $0x28] sm:$0xff]
      %v382 = vld [vmem:[%s375 + $0x30] sm:$0xff]
      %v383 = vld [vmem:[%s375 + $0x38] sm:$0xff]
      %v384 = vld [vmem:[%s375 + $0x40] sm:$0xff]
      %v385 = vld [vmem:[%s375 + $0x48] sm:$0xff]
      %v386 = vld [vmem:[%s375 + $0x50] sm:$0xff]
      %v387 = vld [vmem:[%s375 + $0x58] sm:$0xff]
      %v388 = vld [vmem:[%s375 + $0x60] sm:$0xff]
      %v389 = vld [vmem:[%s375 + $0x68] sm:$0xff]
      %v390 = vld [vmem:[%s375 + $0x70] sm:$0xff]
      %v391 = vld [vmem:[%s375 + $0x78] sm:$0xff]
      %392 = vmatprep.subr.mxu0 0.0
      %393 = vmatpush1.msra.mxu0 %v376
      %394 = vmatprep.subr.mxu0 0.0
      %395 = vmatpush1.msra.mxu0 %v377
      %396 = vmatprep.subr.mxu0 0.0
      %397 = vmatpush1.msra.mxu0 %v378
      %398 = vmatprep.subr.mxu0 0.0
      %399 = vmatpush1.msra.mxu0 %v379
      %400 = vmatprep.subr.mxu0 0.0
      %401 = vmatpush1.msra.mxu0 %v380
      %402 = vmatprep.subr.mxu0 0.0
      %403 = vmatpush1.msra.mxu0 %v381
      %404 = vmatprep.subr.mxu0 0.0
      %405 = vmatpush1.msra.mxu0 %v382
      %406 = vmatprep.subr.mxu0 0.0
      %407 = vmatpush1.msra.mxu0 %v383
      %408 = vmatprep.subr.mxu0 0.0
      %409 = vmatpush1.msra.mxu0 %v384
      %410 = vmatprep.subr.mxu0 0.0
      %411 = vmatpush1.msra.mxu0 %v385
      %412 = vmatprep.subr.mxu0 0.0
      %413 = vmatpush1.msra.mxu0 %v386
      %414 = vmatprep.subr.mxu0 0.0
      %415 = vmatpush1.msra.mxu0 %v387
      %416 = vmatprep.subr.mxu0 0.0
      %417 = vmatpush1.msra.mxu0 %v388
      %418 = vmatprep.subr.mxu0 0.0
      %419 = vmatpush1.msra.mxu0 %v389
      %420 = vmatprep.subr.mxu0 0.0
      %421 = vmatpush1.msra.mxu0 %v390
      %422 = vmatprep.subr.mxu0 0.0
      %423 = vmatpush1.msra.mxu0 %v391
      %424 = vmatprep.subr.mxu0 0.0
      %425 = vmatpush1.msra.mxu0 0.0
      %426 = vmatprep.subr.mxu0 0.0
      %427 = vmatpush1.msra.mxu0 0.0
      %428 = vmatprep.subr.mxu0 0.0
      %429 = vmatpush1.msra.mxu0 0.0
      %430 = vmatprep.subr.mxu0 0.0
      %431 = vmatpush1.msra.mxu0 0.0
      %432 = vmatprep.subr.mxu0 0.0
      %433 = vmatpush1.msra.mxu0 0.0
      %434 = vmatprep.subr.mxu0 0.0
      %435 = vmatpush1.msra.mxu0 0.0
      %436 = vmatprep.subr.mxu0 0.0
      %437 = vmatpush1.msra.mxu0 0.0
      %438 = vmatprep.subr.mxu0 0.0
      %439 = vmatpush1.msra.mxu0 0.0
      %440 = vmatprep.subr.mxu0 0.0
      %441 = vmatpush1.msra.mxu0 0.0
      %442 = vmatprep.subr.mxu0 0.0
      %443 = vmatpush1.msra.mxu0 0.0
      %444 = vmatprep.subr.mxu0 0.0
      %445 = vmatpush1.msra.mxu0 0.0
      %446 = vmatprep.subr.mxu0 0.0
      %447 = vmatpush1.msra.mxu0 0.0
      %448 = vmatprep.subr.mxu0 0.0
      %449 = vmatpush1.msra.mxu0 0.0
      %450 = vmatprep.subr.mxu0 0.0
      %451 = vmatpush1.msra.mxu0 0.0
      %452 = vmatprep.subr.mxu0 0.0
      %453 = vmatpush1.msra.mxu0 0.0
      %454 = vmatprep.subr.mxu0 0.0
      %455 = vmatpush1.msra.mxu0 0.0
      %456 = vmatprep.mubr.f32.mxu0 0.0
      %457 = vmatmul.mubr.f32.gmra.mrb[0].mxu0 %v372
      %v458 = vpop.f32.mrb[0].mxu0
      %v459 = vadd.f32 0.0, %v458
      %v460 = vpop.f32.mrb[0].mxu0
      %461 = vmatprep.mubr.f32.mxu0 0.0
      %462 = vmatmul.mubr.f32.gmra.mrb[0].mxu0 %v373
      %v463 = vpop.f32.mrb[0].mxu0
      %v464 = vadd.f32 0.0, %v463
      %v465 = vpop.f32.mrb[0].mxu0
      %466 = vmatprep.mubr.f32.mxu0 0.0
      %467 = vmatmul.mubr.f32.gmra.mrb[0].mxu0 %v374
      %v468 = vpop.f32.mrb[0].mxu0
      %v469 = vadd.f32 0.0, %v468
      %v470 = vpop.f32.mrb[0].mxu0
      %471 = vdwg.mxu0
      %v472 = vadd.f32 %v359, %v459
      %v473 = vadd.f32 %v364, %v464
      %v474 = vadd.f32 %v369, %v469
      %v475 = vld [vmem:[%s191 + $0x1] sm:$0xff]
      %v476 = vld [vmem:[%s191 + $0x9] sm:$0xff]
      %v477 = vld [vmem:[%s191 + $0x11] sm:$0xf]
      %s478 = scalar_lea.vmem %s1, 384
      %v479 = vld [vmem:[%s478] sm:$0xff]
      %v480 = vld [vmem:[%s478 + $0x8] sm:$0xff]
      %v481 = vld [vmem:[%s478 + $0x10] sm:$0xff]
      %v482 = vld [vmem:[%s478 + $0x18] sm:$0xff]
      %v483 = vld [vmem:[%s478 + $0x20] sm:$0xff]
      %v484 = vld [vmem:[%s478 + $0x28] sm:$0xff]
      %v485 = vld [vmem:[%s478 + $0x30] sm:$0xff]
      %v486 = vld [vmem:[%s478 + $0x38] sm:$0xff]
      %v487 = vld [vmem:[%s478 + $0x40] sm:$0xff]
      %v488 = vld [vmem:[%s478 + $0x48] sm:$0xff]
      %v489 = vld [vmem:[%s478 + $0x50] sm:$0xff]
      %v490 = vld [vmem:[%s478 + $0x58] sm:$0xff]
      %v491 = vld [vmem:[%s478 + $0x60] sm:$0xff]
      %v492 = vld [vmem:[%s478 + $0x68] sm:$0xff]
      %v493 = vld [vmem:[%s478 + $0x70] sm:$0xff]
      %v494 = vld [vmem:[%s478 + $0x78] sm:$0xff]
      %495 = vmatprep.subr.mxu0 0.0
      %496 = vmatpush1.msra.mxu0 %v479
      %497 = vmatprep.subr.mxu0 0.0
      %498 = vmatpush1.msra.mxu0 %v480
      %499 = vmatprep.subr.mxu0 0.0
      %500 = vmatpush1.msra.mxu0 %v481
      %501 = vmatprep.subr.mxu0 0.0
      %502 = vmatpush1.msra.mxu0 %v482
      %503 = vmatprep.subr.mxu0 0.0
      %504 = vmatpush1.msra.mxu0 %v483
      %505 = vmatprep.subr.mxu0 0.0
      %506 = vmatpush1.msra.mxu0 %v484
      %507 = vmatprep.subr.mxu0 0.0
      %508 = vmatpush1.msra.mxu0 %v485
      %509 = vmatprep.subr.mxu0 0.0
      %510 = vmatpush1.msra.mxu0 %v486
      %511 = vmatprep.subr.mxu0 0.0
      %512 = vmatpush1.msra.mxu0 %v487
      %513 = vmatprep.subr.mxu0 0.0
      %514 = vmatpush1.msra.mxu0 %v488
      %515 = vmatprep.subr.mxu0 0.0
      %516 = vmatpush1.msra.mxu0 %v489
      %517 = vmatprep.subr.mxu0 0.0
      %518 = vmatpush1.msra.mxu0 %v490
      %519 = vmatprep.subr.mxu0 0.0
      %520 = vmatpush1.msra.mxu0 %v491
      %521 = vmatprep.subr.mxu0 0.0
      %522 = vmatpush1.msra.mxu0 %v492
      %523 = vmatprep.subr.mxu0 0.0
      %524 = vmatpush1.msra.mxu0 %v493
      %525 = vmatprep.subr.mxu0 0.0
      %526 = vmatpush1.msra.mxu0 %v494
      %527 = vmatprep.subr.mxu0 0.0
      %528 = vmatpush1.msra.mxu0 0.0
      %529 = vmatprep.subr.mxu0 0.0
      %530 = vmatpush1.msra.mxu0 0.0
      %531 = vmatprep.subr.mxu0 0.0
      %532 = vmatpush1.msra.mxu0 0.0
      %533 = vmatprep.subr.mxu0 0.0
      %534 = vmatpush1.msra.mxu0 0.0
      %535 = vmatprep.subr.mxu0 0.0
      %536 = vmatpush1.msra.mxu0 0.0
      %537 = vmatprep.subr.mxu0 0.0
      %538 = vmatpush1.msra.mxu0 0.0
      %539 = vmatprep.subr.mxu0 0.0
      %540 = vmatpush1.msra.mxu0 0.0
      %541 = vmatprep.subr.mxu0 0.0
      %542 = vmatpush1.msra.mxu0 0.0
      %543 = vmatprep.subr.mxu0 0.0
      %544 = vmatpush1.msra.mxu0 0.0
      %545 = vmatprep.subr.mxu0 0.0
      %546 = vmatpush1.msra.mxu0 0.0
      %547 = vmatprep.subr.mxu0 0.0
      %548 = vmatpush1.msra.mxu0 0.0
      %549 = vmatprep.subr.mxu0 0.0
      %550 = vmatpush1.msra.mxu0 0.0
      %551 = vmatprep.subr.mxu0 0.0
      %552 = vmatpush1.msra.mxu0 0.0
      %553 = vmatprep.subr.mxu0 0.0
      %554 = vmatpush1.msra.mxu0 0.0
      %555 = vmatprep.subr.mxu0 0.0
      %556 = vmatpush1.msra.mxu0 0.0
      %557 = vmatprep.subr.mxu0 0.0
      %558 = vmatpush1.msra.mxu0 0.0
      %559 = vmatprep.mubr.f32.mxu0 0.0
      %560 = vmatmul.mubr.f32.gmra.mrb[0].mxu0 %v475
      %v561 = vpop.f32.mrb[0].mxu0
      %v562 = vadd.f32 0.0, %v561
      %v563 = vpop.f32.mrb[0].mxu0
      %564 = vmatprep.mubr.f32.mxu0 0.0
      %565 = vmatmul.mubr.f32.gmra.mrb[0].mxu0 %v476
      %v566 = vpop.f32.mrb[0].mxu0
      %v567 = vadd.f32 0.0, %v566
      %v568 = vpop.f32.mrb[0].mxu0
      %569 = vmatprep.mubr.f32.mxu0 0.0
      %570 = vmatmul.mubr.f32.gmra.mrb[0].mxu0 %v477
      %v571 = vpop.f32.mrb[0].mxu0
      %v572 = vadd.f32 0.0, %v571
      %v573 = vpop.f32.mrb[0].mxu0
      %574 = vdwg.mxu0
      %v575 = vadd.f32 %v472, %v562
      %v576 = vadd.f32 %v473, %v567
      %v577 = vadd.f32 %v474, %v572
      %v578 = vld [vmem:[%s166 + $0x2] sm:$0xff]
      %v579 = vld [vmem:[%s166 + $0xa] sm:$0xff]
      %v580 = vld [vmem:[%s166 + $0x12] sm:$0xf]
      %s581 = scalar_lea.vmem %s1, 512
      %v582 = vld [vmem:[%s581] sm:$0xff]
      %v583 = vld [vmem:[%s581 + $0x8] sm:$0xff]
      %v584 = vld [vmem:[%s581 + $0x10] sm:$0xff]
      %v585 = vld [vmem:[%s581 + $0x18] sm:$0xff]
      %v586 = vld [vmem:[%s581 + $0x20] sm:$0xff]
      %v587 = vld [vmem:[%s581 + $0x28] sm:$0xff]
      %v588 = vld [vmem:[%s581 + $0x30] sm:$0xff]
      %v589 = vld [vmem:[%s581 + $0x38] sm:$0xff]
      %v590 = vld [vmem:[%s581 + $0x40] sm:$0xff]
      %v591 = vld [vmem:[%s581 + $0x48] sm:$0xff]
      %v592 = vld [vmem:[%s581 + $0x50] sm:$0xff]
      %v593 = vld [vmem:[%s581 + $0x58] sm:$0xff]
      %v594 = vld [vmem:[%s581 + $0x60] sm:$0xff]
      %v595 = vld [vmem:[%s581 + $0x68] sm:$0xff]
      %v596 = vld [vmem:[%s581 + $0x70] sm:$0xff]
      %v597 = vld [vmem:[%s581 + $0x78] sm:$0xff]
      %598 = vmatprep.subr.mxu0 0.0
      %599 = vmatpush1.msra.mxu0 %v582
      %600 = vmatprep.subr.mxu0 0.0
      %601 = vmatpush1.msra.mxu0 %v583
      %602 = vmatprep.subr.mxu0 0.0
      %603 = vmatpush1.msra.mxu0 %v584
      %604 = vmatprep.subr.mxu0 0.0
      %605 = vmatpush1.msra.mxu0 %v585
      %606 = vmatprep.subr.mxu0 0.0
      %607 = vmatpush1.msra.mxu0 %v586
      %608 = vmatprep.subr.mxu0 0.0
      %609 = vmatpush1.msra.mxu0 %v587
      %610 = vmatprep.subr.mxu0 0.0
      %611 = vmatpush1.msra.mxu0 %v588
      %612 = vmatprep.subr.mxu0 0.0
      %613 = vmatpush1.msra.mxu0 %v589
      %614 = vmatprep.subr.mxu0 0.0
      %615 = vmatpush1.msra.mxu0 %v590
      %616 = vmatprep.subr.mxu0 0.0
      %617 = vmatpush1.msra.mxu0 %v591
      %618 = vmatprep.subr.mxu0 0.0
      %619 = vmatpush1.msra.mxu0 %v592
      %620 = vmatprep.subr.mxu0 0.0
      %621 = vmatpush1.msra.mxu0 %v593
      %622 = vmatprep.subr.mxu0 0.0
      %623 = vmatpush1.msra.mxu0 %v594
      %624 = vmatprep.subr.mxu0 0.0
      %625 = vmatpush1.msra.mxu0 %v595
      %626 = vmatprep.subr.mxu0 0.0
      %627 = vmatpush1.msra.mxu0 %v596
      %628 = vmatprep.subr.mxu0 0.0
      %629 = vmatpush1.msra.mxu0 %v597
      %630 = vmatprep.subr.mxu0 0.0
      %631 = vmatpush1.msra.mxu0 0.0
      %632 = vmatprep.subr.mxu0 0.0
      %633 = vmatpush1.msra.mxu0 0.0
      %634 = vmatprep.subr.mxu0 0.0
      %635 = vmatpush1.msra.mxu0 0.0
      %636 = vmatprep.subr.mxu0 0.0
      %637 = vmatpush1.msra.mxu0 0.0
      %638 = vmatprep.subr.mxu0 0.0
      %639 = vmatpush1.msra.mxu0 0.0
      %640 = vmatprep.subr.mxu0 0.0
      %641 = vmatpush1.msra.mxu0 0.0
      %642 = vmatprep.subr.mxu0 0.0
      %643 = vmatpush1.msra.mxu0 0.0
      %644 = vmatprep.subr.mxu0 0.0
      %645 = vmatpush1.msra.mxu0 0.0
      %646 = vmatprep.subr.mxu0 0.0
      %647 = vmatpush1.msra.mxu0 0.0
      %648 = vmatprep.subr.mxu0 0.0
      %649 = vmatpush1.msra.mxu0 0.0
      %650 = vmatprep.subr.mxu0 0.0
      %651 = vmatpush1.msra.mxu0 0.0
      %652 = vmatprep.subr.mxu0 0.0
      %653 = vmatpush1.msra.mxu0 0.0
      %654 = vmatprep.subr.mxu0 0.0
      %655 = vmatpush1.msra.mxu0 0.0
      %656 = vmatprep.subr.mxu0 0.0
      %657 = vmatpush1.msra.mxu0 0.0
      %658 = vmatprep.subr.mxu0 0.0
      %659 = vmatpush1.msra.mxu0 0.0
      %660 = vmatprep.subr.mxu0 0.0
      %661 = vmatpush1.msra.mxu0 0.0
      %662 = vmatprep.mubr.f32.mxu0 0.0
      %663 = vmatmul.mubr.f32.gmra.mrb[0].mxu0 %v578
      %v664 = vpop.f32.mrb[0].mxu0
      %v665 = vadd.f32 0.0, %v664
      %v666 = vpop.f32.mrb[0].mxu0
      %667 = vmatprep.mubr.f32.mxu0 0.0
      %668 = vmatmul.mubr.f32.gmra.mrb[0].mxu0 %v579
      %v669 = vpop.f32.mrb[0].mxu0
      %v670 = vadd.f32 0.0, %v669
      %v671 = vpop.f32.mrb[0].mxu0
      %672 = vmatprep.mubr.f32.mxu0 0.0
      %673 = vmatmul.mubr.f32.gmra.mrb[0].mxu0 %v580
      %v674 = vpop.f32.mrb[0].mxu0
      %v675 = vadd.f32 0.0, %v674
      %v676 = vpop.f32.mrb[0].mxu0
      %677 = vdwg.mxu0
      %v678 = vadd.f32 %v575, %v665
      %v679 = vadd.f32 %v576, %v670
      %v680 = vadd.f32 %v577, %v675
      %v681 = vld [vmem:[%s191 + $0x2] sm:$0xff]
      %v682 = vld [vmem:[%s191 + $0xa] sm:$0xff]
      %v683 = vld [vmem:[%s191 + $0x12] sm:$0xf]
      %s684 = scalar_lea.vmem %s1, 640
      %v685 = vld [vmem:[%s684] sm:$0xff]
      %v686 = vld [vmem:[%s684 + $0x8] sm:$0xff]
      %v687 = vld [vmem:[%s684 + $0x10] sm:$0xff]
      %v688 = vld [vmem:[%s684 + $0x18] sm:$0xff]
      %v689 = vld [vmem:[%s684 + $0x20] sm:$0xff]
      %v690 = vld [vmem:[%s684 + $0x28] sm:$0xff]
      %v691 = vld [vmem:[%s684 + $0x30] sm:$0xff]
      %v692 = vld [vmem:[%s684 + $0x38] sm:$0xff]
      %v693 = vld [vmem:[%s684 + $0x40] sm:$0xff]
      %v694 = vld [vmem:[%s684 + $0x48] sm:$0xff]
      %v695 = vld [vmem:[%s684 + $0x50] sm:$0xff]
      %v696 = vld [vmem:[%s684 + $0x58] sm:$0xff]
      %v697 = vld [vmem:[%s684 + $0x60] sm:$0xff]
      %v698 = vld [vmem:[%s684 + $0x68] sm:$0xff]
      %v699 = vld [vmem:[%s684 + $0x70] sm:$0xff]
      %v700 = vld [vmem:[%s684 + $0x78] sm:$0xff]
      %701 = vmatprep.subr.mxu0 0.0
      %702 = vmatpush1.msra.mxu0 %v685
      %703 = vmatprep.subr.mxu0 0.0
      %704 = vmatpush1.msra.mxu0 %v686
      %705 = vmatprep.subr.mxu0 0.0
      %706 = vmatpush1.msra.mxu0 %v687
      %707 = vmatprep.subr.mxu0 0.0
      %708 = vmatpush1.msra.mxu0 %v688
      %709 = vmatprep.subr.mxu0 0.0
      %710 = vmatpush1.msra.mxu0 %v689
      %711 = vmatprep.subr.mxu0 0.0
      %712 = vmatpush1.msra.mxu0 %v690
      %713 = vmatprep.subr.mxu0 0.0
      %714 = vmatpush1.msra.mxu0 %v691
      %715 = vmatprep.subr.mxu0 0.0
      %716 = vmatpush1.msra.mxu0 %v692
      %717 = vmatprep.subr.mxu0 0.0
      %718 = vmatpush1.msra.mxu0 %v693
      %719 = vmatprep.subr.mxu0 0.0
      %720 = vmatpush1.msra.mxu0 %v694
      %721 = vmatprep.subr.mxu0 0.0
      %722 = vmatpush1.msra.mxu0 %v695
      %723 = vmatprep.subr.mxu0 0.0
      %724 = vmatpush1.msra.mxu0 %v696
      %725 = vmatprep.subr.mxu0 0.0
      %726 = vmatpush1.msra.mxu0 %v697
      %727 = vmatprep.subr.mxu0 0.0
      %728 = vmatpush1.msra.mxu0 %v698
      %729 = vmatprep.subr.mxu0 0.0
      %730 = vmatpush1.msra.mxu0 %v699
      %731 = vmatprep.subr.mxu0 0.0
      %732 = vmatpush1.msra.mxu0 %v700
      %733 = vmatprep.subr.mxu0 0.0
      %734 = vmatpush1.msra.mxu0 0.0
      %735 = vmatprep.subr.mxu0 0.0
      %736 = vmatpush1.msra.mxu0 0.0
      %737 = vmatprep.subr.mxu0 0.0
      %738 = vmatpush1.msra.mxu0 0.0
      %739 = vmatprep.subr.mxu0 0.0
      %740 = vmatpush1.msra.mxu0 0.0
      %741 = vmatprep.subr.mxu0 0.0
      %742 = vmatpush1.msra.mxu0 0.0
      %743 = vmatprep.subr.mxu0 0.0
      %744 = vmatpush1.msra.mxu0 0.0
      %745 = vmatprep.subr.mxu0 0.0
      %746 = vmatpush1.msra.mxu0 0.0
      %747 = vmatprep.subr.mxu0 0.0
      %748 = vmatpush1.msra.mxu0 0.0
      %749 = vmatprep.subr.mxu0 0.0
      %750 = vmatpush1.msra.mxu0 0.0
      %751 = vmatprep.subr.mxu0 0.0
      %752 = vmatpush1.msra.mxu0 0.0
      %753 = vmatprep.subr.mxu0 0.0
      %754 = vmatpush1.msra.mxu0 0.0
      %755 = vmatprep.subr.mxu0 0.0
      %756 = vmatpush1.msra.mxu0 0.0
      %757 = vmatprep.subr.mxu0 0.0
      %758 = vmatpush1.msra.mxu0 0.0
      %759 = vmatprep.subr.mxu0 0.0
      %760 = vmatpush1.msra.mxu0 0.0
      %761 = vmatprep.subr.mxu0 0.0
      %762 = vmatpush1.msra.mxu0 0.0
      %763 = vmatprep.subr.mxu0 0.0
      %764 = vmatpush1.msra.mxu0 0.0
      %765 = vmatprep.mubr.f32.mxu0 0.0
      %766 = vmatmul.mubr.f32.gmra.mrb[0].mxu0 %v681
      %v767 = vpop.f32.mrb[0].mxu0
      %v768 = vadd.f32 0.0, %v767
      %v769 = vpop.f32.mrb[0].mxu0
      %770 = vmatprep.mubr.f32.mxu0 0.0
      %771 = vmatmul.mubr.f32.gmra.mrb[0].mxu0 %v682
      %v772 = vpop.f32.mrb[0].mxu0
      %v773 = vadd.f32 0.0, %v772
      %v774 = vpop.f32.mrb[0].mxu0
      %775 = vmatprep.mubr.f32.mxu0 0.0
      %776 = vmatmul.mubr.f32.gmra.mrb[0].mxu0 %v683
      %v777 = vpop.f32.mrb[0].mxu0
      %v778 = vadd.f32 0.0, %v777
      %v779 = vpop.f32.mrb[0].mxu0
      %780 = vdwg.mxu0
      %v781 = vadd.f32 %v678, %v768
      %v782 = vadd.f32 %v679, %v773
      %v783 = vadd.f32 %v680, %v778
      %v784 = vld [vmem:[%s166 + $0x3] sm:$0xff]
      %v785 = vld [vmem:[%s166 + $0xb] sm:$0xff]
      %v786 = vld [vmem:[%s166 + $0x13] sm:$0xf]
      %s787 = scalar_lea.vmem %s1, 768
      %v788 = vld [vmem:[%s787] sm:$0xff]
      %v789 = vld [vmem:[%s787 + $0x8] sm:$0xff]
      %v790 = vld [vmem:[%s787 + $0x10] sm:$0xff]
      %v791 = vld [vmem:[%s787 + $0x18] sm:$0xff]
      %v792 = vld [vmem:[%s787 + $0x20] sm:$0xff]
      %v793 = vld [vmem:[%s787 + $0x28] sm:$0xff]
      %v794 = vld [vmem:[%s787 + $0x30] sm:$0xff]
      %v795 = vld [vmem:[%s787 + $0x38] sm:$0xff]
      %v796 = vld [vmem:[%s787 + $0x40] sm:$0xff]
      %v797 = vld [vmem:[%s787 + $0x48] sm:$0xff]
      %v798 = vld [vmem:[%s787 + $0x50] sm:$0xff]
      %v799 = vld [vmem:[%s787 + $0x58] sm:$0xff]
      %v800 = vld [vmem:[%s787 + $0x60] sm:$0xff]
      %v801 = vld [vmem:[%s787 + $0x68] sm:$0xff]
      %v802 = vld [vmem:[%s787 + $0x70] sm:$0xff]
      %v803 = vld [vmem:[%s787 + $0x78] sm:$0xff]
      %804 = vmatprep.subr.mxu0 0.0
      %805 = vmatpush1.msra.mxu0 %v788
      %806 = vmatprep.subr.mxu0 0.0
      %807 = vmatpush1.msra.mxu0 %v789
      %808 = vmatprep.subr.mxu0 0.0
      %809 = vmatpush1.msra.mxu0 %v790
      %810 = vmatprep.subr.mxu0 0.0
      %811 = vmatpush1.msra.mxu0 %v791
      %812 = vmatprep.subr.mxu0 0.0
      %813 = vmatpush1.msra.mxu0 %v792
      %814 = vmatprep.subr.mxu0 0.0
      %815 = vmatpush1.msra.mxu0 %v793
      %816 = vmatprep.subr.mxu0 0.0
      %817 = vmatpush1.msra.mxu0 %v794
      %818 = vmatprep.subr.mxu0 0.0
      %819 = vmatpush1.msra.mxu0 %v795
      %820 = vmatprep.subr.mxu0 0.0
      %821 = vmatpush1.msra.mxu0 %v796
      %822 = vmatprep.subr.mxu0 0.0
      %823 = vmatpush1.msra.mxu0 %v797
      %824 = vmatprep.subr.mxu0 0.0
      %825 = vmatpush1.msra.mxu0 %v798
      %826 = vmatprep.subr.mxu0 0.0
      %827 = vmatpush1.msra.mxu0 %v799
      %828 = vmatprep.subr.mxu0 0.0
      %829 = vmatpush1.msra.mxu0 %v800
      %830 = vmatprep.subr.mxu0 0.0
      %831 = vmatpush1.msra.mxu0 %v801
      %832 = vmatprep.subr.mxu0 0.0
      %833 = vmatpush1.msra.mxu0 %v802
      %834 = vmatprep.subr.mxu0 0.0
      %835 = vmatpush1.msra.mxu0 %v803
      %836 = vmatprep.subr.mxu0 0.0
      %837 = vmatpush1.msra.mxu0 0.0
      %838 = vmatprep.subr.mxu0 0.0
      %839 = vmatpush1.msra.mxu0 0.0
      %840 = vmatprep.subr.mxu0 0.0
      %841 = vmatpush1.msra.mxu0 0.0
      %842 = vmatprep.subr.mxu0 0.0
      %843 = vmatpush1.msra.mxu0 0.0
      %844 = vmatprep.subr.mxu0 0.0
      %845 = vmatpush1.msra.mxu0 0.0
      %846 = vmatprep.subr.mxu0 0.0
      %847 = vmatpush1.msra.mxu0 0.0
      %848 = vmatprep.subr.mxu0 0.0
      %849 = vmatpush1.msra.mxu0 0.0
      %850 = vmatprep.subr.mxu0 0.0
      %851 = vmatpush1.msra.mxu0 0.0
      %852 = vmatprep.subr.mxu0 0.0
      %853 = vmatpush1.msra.mxu0 0.0
      %854 = vmatprep.subr.mxu0 0.0
      %855 = vmatpush1.msra.mxu0 0.0
      %856 = vmatprep.subr.mxu0 0.0
      %857 = vmatpush1.msra.mxu0 0.0
      %858 = vmatprep.subr.mxu0 0.0
      %859 = vmatpush1.msra.mxu0 0.0
      %860 = vmatprep.subr.mxu0 0.0
      %861 = vmatpush1.msra.mxu0 0.0
      %862 = vmatprep.subr.mxu0 0.0
      %863 = vmatpush1.msra.mxu0 0.0
      %864 = vmatprep.subr.mxu0 0.0
      %865 = vmatpush1.msra.mxu0 0.0
      %866 = vmatprep.subr.mxu0 0.0
      %867 = vmatpush1.msra.mxu0 0.0
      %868 = vmatprep.mubr.f32.mxu0 0.0
      %869 = vmatmul.mubr.f32.gmra.mrb[0].mxu0 %v784
      %v870 = vpop.f32.mrb[0].mxu0
      %v871 = vadd.f32 0.0, %v870
      %v872 = vpop.f32.mrb[0].mxu0
      %873 = vmatprep.mubr.f32.mxu0 0.0
      %874 = vmatmul.mubr.f32.gmra.mrb[0].mxu0 %v785
      %v875 = vpop.f32.mrb[0].mxu0
      %v876 = vadd.f32 0.0, %v875
      %v877 = vpop.f32.mrb[0].mxu0
      %878 = vmatprep.mubr.f32.mxu0 0.0
      %879 = vmatmul.mubr.f32.gmra.mrb[0].mxu0 %v786
      %v880 = vpop.f32.mrb[0].mxu0
      %v881 = vadd.f32 0.0, %v880
      %v882 = vpop.f32.mrb[0].mxu0
      %883 = vdwg.mxu0
      %v884 = vadd.f32 %v781, %v871
      %v885 = vadd.f32 %v782, %v876
      %v886 = vadd.f32 %v783, %v881
      %v887 = vld [vmem:[%s191 + $0x3] sm:$0xff]
      %v888 = vld [vmem:[%s191 + $0xb] sm:$0xff]
      %v889 = vld [vmem:[%s191 + $0x13] sm:$0xf]
      %s890 = scalar_lea.vmem %s1, 896
      %v891 = vld [vmem:[%s890] sm:$0xff]
      %v892 = vld [vmem:[%s890 + $0x8] sm:$0xff]
      %v893 = vld [vmem:[%s890 + $0x10] sm:$0xff]
      %v894 = vld [vmem:[%s890 + $0x18] sm:$0xff]
      %v895 = vld [vmem:[%s890 + $0x20] sm:$0xff]
      %v896 = vld [vmem:[%s890 + $0x28] sm:$0xff]
      %v897 = vld [vmem:[%s890 + $0x30] sm:$0xff]
      %v898 = vld [vmem:[%s890 + $0x38] sm:$0xff]
      %v899 = vld [vmem:[%s890 + $0x40] sm:$0xff]
      %v900 = vld [vmem:[%s890 + $0x48] sm:$0xff]
      %v901 = vld [vmem:[%s890 + $0x50] sm:$0xff]
      %v902 = vld [vmem:[%s890 + $0x58] sm:$0xff]
      %v903 = vld [vmem:[%s890 + $0x60] sm:$0xff]
      %v904 = vld [vmem:[%s890 + $0x68] sm:$0xff]
      %v905 = vld [vmem:[%s890 + $0x70] sm:$0xff]
      %v906 = vld [vmem:[%s890 + $0x78] sm:$0xff]
      %907 = vmatprep.subr.mxu0 0.0
      %908 = vmatpush1.msra.mxu0 %v891
      %909 = vmatprep.subr.mxu0 0.0
      %910 = vmatpush1.msra.mxu0 %v892
      %911 = vmatprep.subr.mxu0 0.0
      %912 = vmatpush1.msra.mxu0 %v893
      %913 = vmatprep.subr.mxu0 0.0
      %914 = vmatpush1.msra.mxu0 %v894
      %915 = vmatprep.subr.mxu0 0.0
      %916 = vmatpush1.msra.mxu0 %v895
      %917 = vmatprep.subr.mxu0 0.0
      %918 = vmatpush1.msra.mxu0 %v896
      %919 = vmatprep.subr.mxu0 0.0
      %920 = vmatpush1.msra.mxu0 %v897
      %921 = vmatprep.subr.mxu0 0.0
      %922 = vmatpush1.msra.mxu0 %v898
      %923 = vmatprep.subr.mxu0 0.0
      %924 = vmatpush1.msra.mxu0 %v899
      %925 = vmatprep.subr.mxu0 0.0
      %926 = vmatpush1.msra.mxu0 %v900
      %927 = vmatprep.subr.mxu0 0.0
      %928 = vmatpush1.msra.mxu0 %v901
      %929 = vmatprep.subr.mxu0 0.0
      %930 = vmatpush1.msra.mxu0 %v902
      %931 = vmatprep.subr.mxu0 0.0
      %932 = vmatpush1.msra.mxu0 %v903
      %933 = vmatprep.subr.mxu0 0.0
      %934 = vmatpush1.msra.mxu0 %v904
      %935 = vmatprep.subr.mxu0 0.0
      %936 = vmatpush1.msra.mxu0 %v905
      %937 = vmatprep.subr.mxu0 0.0
      %938 = vmatpush1.msra.mxu0 %v906
      %939 = vmatprep.subr.mxu0 0.0
      %940 = vmatpush1.msra.mxu0 0.0
      %941 = vmatprep.subr.mxu0 0.0
      %942 = vmatpush1.msra.mxu0 0.0
      %943 = vmatprep.subr.mxu0 0.0
      %944 = vmatpush1.msra.mxu0 0.0
      %945 = vmatprep.subr.mxu0 0.0
      %946 = vmatpush1.msra.mxu0 0.0
      %947 = vmatprep.subr.mxu0 0.0
      %948 = vmatpush1.msra.mxu0 0.0
      %949 = vmatprep.subr.mxu0 0.0
      %950 = vmatpush1.msra.mxu0 0.0
      %951 = vmatprep.subr.mxu0 0.0
      %952 = vmatpush1.msra.mxu0 0.0
      %953 = vmatprep.subr.mxu0 0.0
      %954 = vmatpush1.msra.mxu0 0.0
      %955 = vmatprep.subr.mxu0 0.0
      %956 = vmatpush1.msra.mxu0 0.0
      %957 = vmatprep.subr.mxu0 0.0
      %958 = vmatpush1.msra.mxu0 0.0
      %959 = vmatprep.subr.mxu0 0.0
      %960 = vmatpush1.msra.mxu0 0.0
      %961 = vmatprep.subr.mxu0 0.0
      %962 = vmatpush1.msra.mxu0 0.0
      %963 = vmatprep.subr.mxu0 0.0
      %964 = vmatpush1.msra.mxu0 0.0
      %965 = vmatprep.subr.mxu0 0.0
      %966 = vmatpush1.msra.mxu0 0.0
      %967 = vmatprep.subr.mxu0 0.0
      %968 = vmatpush1.msra.mxu0 0.0
      %969 = vmatprep.subr.mxu0 0.0
      %970 = vmatpush1.msra.mxu0 0.0
      %971 = vmatprep.mubr.f32.mxu0 0.0
      %972 = vmatmul.mubr.f32.gmra.mrb[0].mxu0 %v887
      %v973 = vpop.f32.mrb[0].mxu0
      %v974 = vadd.f32 0.0, %v973
      %v975 = vpop.f32.mrb[0].mxu0
      %976 = vmatprep.mubr.f32.mxu0 0.0
      %977 = vmatmul.mubr.f32.gmra.mrb[0].mxu0 %v888
      %v978 = vpop.f32.mrb[0].mxu0
      %v979 = vadd.f32 0.0, %v978
      %v980 = vpop.f32.mrb[0].mxu0
      %981 = vmatprep.mubr.f32.mxu0 0.0
      %982 = vmatmul.mubr.f32.gmra.mrb[0].mxu0 %v889
      %v983 = vpop.f32.mrb[0].mxu0
      %v984 = vadd.f32 0.0, %v983
      %v985 = vpop.f32.mrb[0].mxu0
      %986 = vdwg.mxu0
      %v987 = vadd.f32 %v884, %v974
      %v988 = vadd.f32 %v885, %v979
      %v989 = vadd.f32 %v886, %v984
      %v990 = vld [vmem:[%s166 + $0x4] sm:$0xff]
      %v991 = vld [vmem:[%s166 + $0xc] sm:$0xff]
      %v992 = vld [vmem:[%s166 + $0x14] sm:$0xf]
      %s993 = scalar_lea.vmem %s1, 1024
      %v994 = vld [vmem:[%s993] sm:$0xff]
      %v995 = vld [vmem:[%s993 + $0x8] sm:$0xff]
      %v996 = vld [vmem:[%s993 + $0x10] sm:$0xff]
      %v997 = vld [vmem:[%s993 + $0x18] sm:$0xff]
      %v998 = vld [vmem:[%s993 + $0x20] sm:$0xff]
      %v999 = vld [vmem:[%s993 + $0x28] sm:$0xff]
      %v1000 = vld [vmem:[%s993 + $0x30] sm:$0xff]
      %v1001 = vld [vmem:[%s993 + $0x38] sm:$0xff]
      %v1002 = vld [vmem:[%s993 + $0x40] sm:$0xff]
      %v1003 = vld [vmem:[%s993 + $0x48] sm:$0xff]
      %v1004 = vld [vmem:[%s993 + $0x50] sm:$0xff]
      %v1005 = vld [vmem:[%s993 + $0x58] sm:$0xff]
      %v1006 = vld [vmem:[%s993 + $0x60] sm:$0xff]
      %v1007 = vld [vmem:[%s993 + $0x68] sm:$0xff]
      %v1008 = vld [vmem:[%s993 + $0x70] sm:$0xff]
      %v1009 = vld [vmem:[%s993 + $0x78] sm:$0xff]
      %1010 = vmatprep.subr.mxu0 0.0
      %1011 = vmatpush1.msra.mxu0 %v994
      %1012 = vmatprep.subr.mxu0 0.0
      %1013 = vmatpush1.msra.mxu0 %v995
      %1014 = vmatprep.subr.mxu0 0.0
      %1015 = vmatpush1.msra.mxu0 %v996
      %1016 = vmatprep.subr.mxu0 0.0
      %1017 = vmatpush1.msra.mxu0 %v997
      %1018 = vmatprep.subr.mxu0 0.0
      %1019 = vmatpush1.msra.mxu0 %v998
      %1020 = vmatprep.subr.mxu0 0.0
      %1021 = vmatpush1.msra.mxu0 %v999
      %1022 = vmatprep.subr.mxu0 0.0
      %1023 = vmatpush1.msra.mxu0 %v1000
      %1024 = vmatprep.subr.mxu0 0.0
      %1025 = vmatpush1.msra.mxu0 %v1001
      %1026 = vmatprep.subr.mxu0 0.0
      %1027 = vmatpush1.msra.mxu0 %v1002
      %1028 = vmatprep.subr.mxu0 0.0
      %1029 = vmatpush1.msra.mxu0 %v1003
      %1030 = vmatprep.subr.mxu0 0.0
      %1031 = vmatpush1.msra.mxu0 %v1004
      %1032 = vmatprep.subr.mxu0 0.0
      %1033 = vmatpush1.msra.mxu0 %v1005
      %1034 = vmatprep.subr.mxu0 0.0
      %1035 = vmatpush1.msra.mxu0 %v1006
      %1036 = vmatprep.subr.mxu0 0.0
      %1037 = vmatpush1.msra.mxu0 %v1007
      %1038 = vmatprep.subr.mxu0 0.0
      %1039 = vmatpush1.msra.mxu0 %v1008
      %1040 = vmatprep.subr.mxu0 0.0
      %1041 = vmatpush1.msra.mxu0 %v1009
      %1042 = vmatprep.subr.mxu0 0.0
      %1043 = vmatpush1.msra.mxu0 0.0
      %1044 = vmatprep.subr.mxu0 0.0
      %1045 = vmatpush1.msra.mxu0 0.0
      %1046 = vmatprep.subr.mxu0 0.0
      %1047 = vmatpush1.msra.mxu0 0.0
      %1048 = vmatprep.subr.mxu0 0.0
      %1049 = vmatpush1.msra.mxu0 0.0
      %1050 = vmatprep.subr.mxu0 0.0
      %1051 = vmatpush1.msra.mxu0 0.0
      %1052 = vmatprep.subr.mxu0 0.0
      %1053 = vmatpush1.msra.mxu0 0.0
      %1054 = vmatprep.subr.mxu0 0.0
      %1055 = vmatpush1.msra.mxu0 0.0
      %1056 = vmatprep.subr.mxu0 0.0
      %1057 = vmatpush1.msra.mxu0 0.0
      %1058 = vmatprep.subr.mxu0 0.0
      %1059 = vmatpush1.msra.mxu0 0.0
      %1060 = vmatprep.subr.mxu0 0.0
      %1061 = vmatpush1.msra.mxu0 0.0
      %1062 = vmatprep.subr.mxu0 0.0
      %1063 = vmatpush1.msra.mxu0 0.0
      %1064 = vmatprep.subr.mxu0 0.0
      %1065 = vmatpush1.msra.mxu0 0.0
      %1066 = vmatprep.subr.mxu0 0.0
      %1067 = vmatpush1.msra.mxu0 0.0
      %1068 = vmatprep.subr.mxu0 0.0
      %1069 = vmatpush1.msra.mxu0 0.0
      %1070 = vmatprep.subr.mxu0 0.0
      %1071 = vmatpush1.msra.mxu0 0.0
      %1072 = vmatprep.subr.mxu0 0.0
      %1073 = vmatpush1.msra.mxu0 0.0
      %1074 = vmatprep.mubr.f32.mxu0 0.0
      %1075 = vmatmul.mubr.f32.gmra.mrb[0].mxu0 %v990
      %v1076 = vpop.f32.mrb[0].mxu0
      %v1077 = vadd.f32 0.0, %v1076
      %v1078 = vpop.f32.mrb[0].mxu0
      %1079 = vmatprep.mubr.f32.mxu0 0.0
      %1080 = vmatmul.mubr.f32.gmra.mrb[0].mxu0 %v991
      %v1081 = vpop.f32.mrb[0].mxu0
      %v1082 = vadd.f32 0.0, %v1081
      %v1083 = vpop.f32.mrb[0].mxu0
      %1084 = vmatprep.mubr.f32.mxu0 0.0
      %1085 = vmatmul.mubr.f32.gmra.mrb[0].mxu0 %v992
      %v1086 = vpop.f32.mrb[0].mxu0
      %v1087 = vadd.f32 0.0, %v1086
      %v1088 = vpop.f32.mrb[0].mxu0
      %1089 = vdwg.mxu0
      %v1090 = vadd.f32 %v987, %v1077
      %v1091 = vadd.f32 %v988, %v1082
      %v1092 = vadd.f32 %v989, %v1087
      %v1093 = vld [vmem:[%s191 + $0x4] sm:$0xff]
      %v1094 = vld [vmem:[%s191 + $0xc] sm:$0xff]
      %v1095 = vld [vmem:[%s191 + $0x14] sm:$0xf]
      %s1096 = scalar_lea.vmem %s1, 1152
      %v1097 = vld [vmem:[%s1096] sm:$0xff]
      %v1098 = vld [vmem:[%s1096 + $0x8] sm:$0xff]
      %v1099 = vld [vmem:[%s1096 + $0x10] sm:$0xff]
      %v1100 = vld [vmem:[%s1096 + $0x18] sm:$0xff]
      %v1101 = vld [vmem:[%s1096 + $0x20] sm:$0xff]
      %v1102 = vld [vmem:[%s1096 + $0x28] sm:$0xff]
      %v1103 = vld [vmem:[%s1096 + $0x30] sm:$0xff]
      %v1104 = vld [vmem:[%s1096 + $0x38] sm:$0xff]
      %v1105 = vld [vmem:[%s1096 + $0x40] sm:$0xff]
      %v1106 = vld [vmem:[%s1096 + $0x48] sm:$0xff]
      %v1107 = vld [vmem:[%s1096 + $0x50] sm:$0xff]
      %v1108 = vld [vmem:[%s1096 + $0x58] sm:$0xff]
      %v1109 = vld [vmem:[%s1096 + $0x60] sm:$0xff]
      %v1110 = vld [vmem:[%s1096 + $0x68] sm:$0xff]
      %v1111 = vld [vmem:[%s1096 + $0x70] sm:$0xff]
      %v1112 = vld [vmem:[%s1096 + $0x78] sm:$0xff]
      %1113 = vmatprep.subr.mxu0 0.0
      %1114 = vmatpush1.msra.mxu0 %v1097
      %1115 = vmatprep.subr.mxu0 0.0
      %1116 = vmatpush1.msra.mxu0 %v1098
      %1117 = vmatprep.subr.mxu0 0.0
      %1118 = vmatpush1.msra.mxu0 %v1099
      %1119 = vmatprep.subr.mxu0 0.0
      %1120 = vmatpush1.msra.mxu0 %v1100
      %1121 = vmatprep.subr.mxu0 0.0
      %1122 = vmatpush1.msra.mxu0 %v1101
      %1123 = vmatprep.subr.mxu0 0.0
      %1124 = vmatpush1.msra.mxu0 %v1102
      %1125 = vmatprep.subr.mxu0 0.0
      %1126 = vmatpush1.msra.mxu0 %v1103
      %1127 = vmatprep.subr.mxu0 0.0
      %1128 = vmatpush1.msra.mxu0 %v1104
      %1129 = vmatprep.subr.mxu0 0.0
      %1130 = vmatpush1.msra.mxu0 %v1105
      %1131 = vmatprep.subr.mxu0 0.0
      %1132 = vmatpush1.msra.mxu0 %v1106
      %1133 = vmatprep.subr.mxu0 0.0
      %1134 = vmatpush1.msra.mxu0 %v1107
      %1135 = vmatprep.subr.mxu0 0.0
      %1136 = vmatpush1.msra.mxu0 %v1108
      %1137 = vmatprep.subr.mxu0 0.0
      %1138 = vmatpush1.msra.mxu0 %v1109
      %1139 = vmatprep.subr.mxu0 0.0
      %1140 = vmatpush1.msra.mxu0 %v1110
      %1141 = vmatprep.subr.mxu0 0.0
      %1142 = vmatpush1.msra.mxu0 %v1111
      %1143 = vmatprep.subr.mxu0 0.0
      %1144 = vmatpush1.msra.mxu0 %v1112
      %1145 = vmatprep.subr.mxu0 0.0
      %1146 = vmatpush1.msra.mxu0 0.0
      %1147 = vmatprep.subr.mxu0 0.0
      %1148 = vmatpush1.msra.mxu0 0.0
      %1149 = vmatprep.subr.mxu0 0.0
      %1150 = vmatpush1.msra.mxu0 0.0
      %1151 = vmatprep.subr.mxu0 0.0
      %1152 = vmatpush1.msra.mxu0 0.0
      %1153 = vmatprep.subr.mxu0 0.0
      %1154 = vmatpush1.msra.mxu0 0.0
      %1155 = vmatprep.subr.mxu0 0.0
      %1156 = vmatpush1.msra.mxu0 0.0
      %1157 = vmatprep.subr.mxu0 0.0
      %1158 = vmatpush1.msra.mxu0 0.0
      %1159 = vmatprep.subr.mxu0 0.0
      %1160 = vmatpush1.msra.mxu0 0.0
      %1161 = vmatprep.subr.mxu0 0.0
      %1162 = vmatpush1.msra.mxu0 0.0
      %1163 = vmatprep.subr.mxu0 0.0
      %1164 = vmatpush1.msra.mxu0 0.0
      %1165 = vmatprep.subr.mxu0 0.0
      %1166 = vmatpush1.msra.mxu0 0.0
      %1167 = vmatprep.subr.mxu0 0.0
      %1168 = vmatpush1.msra.mxu0 0.0
      %1169 = vmatprep.subr.mxu0 0.0
      %1170 = vmatpush1.msra.mxu0 0.0
      %1171 = vmatprep.subr.mxu0 0.0
      %1172 = vmatpush1.msra.mxu0 0.0
      %1173 = vmatprep.subr.mxu0 0.0
      %1174 = vmatpush1.msra.mxu0 0.0
      %1175 = vmatprep.subr.mxu0 0.0
      %1176 = vmatpush1.msra.mxu0 0.0
      %1177 = vmatprep.mubr.f32.mxu0 0.0
      %1178 = vmatmul.mubr.f32.gmra.mrb[0].mxu0 %v1093
      %v1179 = vpop.f32.mrb[0].mxu0
      %v1180 = vadd.f32 0.0, %v1179
      %v1181 = vpop.f32.mrb[0].mxu0
      %1182 = vmatprep.mubr.f32.mxu0 0.0
      %1183 = vmatmul.mubr.f32.gmra.mrb[0].mxu0 %v1094
      %v1184 = vpop.f32.mrb[0].mxu0
      %v1185 = vadd.f32 0.0, %v1184
      %v1186 = vpop.f32.mrb[0].mxu0
      %1187 = vmatprep.mubr.f32.mxu0 0.0
      %1188 = vmatmul.mubr.f32.gmra.mrb[0].mxu0 %v1095
      %v1189 = vpop.f32.mrb[0].mxu0
      %v1190 = vadd.f32 0.0, %v1189
      %v1191 = vpop.f32.mrb[0].mxu0
      %1192 = vdwg.mxu0
      %v1193 = vadd.f32 %v1090, %v1180
      %v1194 = vadd.f32 %v1091, %v1185
      %v1195 = vadd.f32 %v1092, %v1190
      %v1196 = vld [vmem:[%s166 + $0x5] sm:$0xff]
      %v1197 = vld [vmem:[%s166 + $0xd] sm:$0xff]
      %v1198 = vld [vmem:[%s166 + $0x15] sm:$0xf]
      %s1199 = scalar_lea.vmem %s1, 1280
      %v1200 = vld [vmem:[%s1199] sm:$0xff]
      %v1201 = vld [vmem:[%s1199 + $0x8] sm:$0xff]
      %v1202 = vld [vmem:[%s1199 + $0x10] sm:$0xff]
      %v1203 = vld [vmem:[%s1199 + $0x18] sm:$0xff]
      %v1204 = vld [vmem:[%s1199 + $0x20] sm:$0xff]
      %v1205 = vld [vmem:[%s1199 + $0x28] sm:$0xff]
      %v1206 = vld [vmem:[%s1199 + $0x30] sm:$0xff]
      %v1207 = vld [vmem:[%s1199 + $0x38] sm:$0xff]
      %v1208 = vld [vmem:[%s1199 + $0x40] sm:$0xff]
      %v1209 = vld [vmem:[%s1199 + $0x48] sm:$0xff]
      %v1210 = vld [vmem:[%s1199 + $0x50] sm:$0xff]
      %v1211 = vld [vmem:[%s1199 + $0x58] sm:$0xff]
      %v1212 = vld [vmem:[%s1199 + $0x60] sm:$0xff]
      %v1213 = vld [vmem:[%s1199 + $0x68] sm:$0xff]
      %v1214 = vld [vmem:[%s1199 + $0x70] sm:$0xff]
      %v1215 = vld [vmem:[%s1199 + $0x78] sm:$0xff]
      %1216 = vmatprep.subr.mxu0 0.0
      %1217 = vmatpush1.msra.mxu0 %v1200
      %1218 = vmatprep.subr.mxu0 0.0
      %1219 = vmatpush1.msra.mxu0 %v1201
      %1220 = vmatprep.subr.mxu0 0.0
      %1221 = vmatpush1.msra.mxu0 %v1202
      %1222 = vmatprep.subr.mxu0 0.0
      %1223 = vmatpush1.msra.mxu0 %v1203
      %1224 = vmatprep.subr.mxu0 0.0
      %1225 = vmatpush1.msra.mxu0 %v1204
      %1226 = vmatprep.subr.mxu0 0.0
      %1227 = vmatpush1.msra.mxu0 %v1205
      %1228 = vmatprep.subr.mxu0 0.0
      %1229 = vmatpush1.msra.mxu0 %v1206
      %1230 = vmatprep.subr.mxu0 0.0
      %1231 = vmatpush1.msra.mxu0 %v1207
      %1232 = vmatprep.subr.mxu0 0.0
      %1233 = vmatpush1.msra.mxu0 %v1208
      %1234 = vmatprep.subr.mxu0 0.0
      %1235 = vmatpush1.msra.mxu0 %v1209
      %1236 = vmatprep.subr.mxu0 0.0
      %1237 = vmatpush1.msra.mxu0 %v1210
      %1238 = vmatprep.subr.mxu0 0.0
      %1239 = vmatpush1.msra.mxu0 %v1211
      %1240 = vmatprep.subr.mxu0 0.0
      %1241 = vmatpush1.msra.mxu0 %v1212
      %1242 = vmatprep.subr.mxu0 0.0
      %1243 = vmatpush1.msra.mxu0 %v1213
      %1244 = vmatprep.subr.mxu0 0.0
      %1245 = vmatpush1.msra.mxu0 %v1214
      %1246 = vmatprep.subr.mxu0 0.0
      %1247 = vmatpush1.msra.mxu0 %v1215
      %1248 = vmatprep.subr.mxu0 0.0
      %1249 = vmatpush1.msra.mxu0 0.0
      %1250 = vmatprep.subr.mxu0 0.0
      %1251 = vmatpush1.msra.mxu0 0.0
      %1252 = vmatprep.subr.mxu0 0.0
      %1253 = vmatpush1.msra.mxu0 0.0
      %1254 = vmatprep.subr.mxu0 0.0
      %1255 = vmatpush1.msra.mxu0 0.0
      %1256 = vmatprep.subr.mxu0 0.0
      %1257 = vmatpush1.msra.mxu0 0.0
      %1258 = vmatprep.subr.mxu0 0.0
      %1259 = vmatpush1.msra.mxu0 0.0
      %1260 = vmatprep.subr.mxu0 0.0
      %1261 = vmatpush1.msra.mxu0 0.0
      %1262 = vmatprep.subr.mxu0 0.0
      %1263 = vmatpush1.msra.mxu0 0.0
      %1264 = vmatprep.subr.mxu0 0.0
      %1265 = vmatpush1.msra.mxu0 0.0
      %1266 = vmatprep.subr.mxu0 0.0
      %1267 = vmatpush1.msra.mxu0 0.0
      %1268 = vmatprep.subr.mxu0 0.0
      %1269 = vmatpush1.msra.mxu0 0.0
      %1270 = vmatprep.subr.mxu0 0.0
      %1271 = vmatpush1.msra.mxu0 0.0
      %1272 = vmatprep.subr.mxu0 0.0
      %1273 = vmatpush1.msra.mxu0 0.0
      %1274 = vmatprep.subr.mxu0 0.0
      %1275 = vmatpush1.msra.mxu0 0.0
      %1276 = vmatprep.subr.mxu0 0.0
      %1277 = vmatpush1.msra.mxu0 0.0
      %1278 = vmatprep.subr.mxu0 0.0
      %1279 = vmatpush1.msra.mxu0 0.0
      %1280 = vmatprep.mubr.f32.mxu0 0.0
      %1281 = vmatmul.mubr.f32.gmra.mrb[0].mxu0 %v1196
      %v1282 = vpop.f32.mrb[0].mxu0
      %v1283 = vadd.f32 0.0, %v1282
      %v1284 = vpop.f32.mrb[0].mxu0
      %1285 = vmatprep.mubr.f32.mxu0 0.0
      %1286 = vmatmul.mubr.f32.gmra.mrb[0].mxu0 %v1197
      %v1287 = vpop.f32.mrb[0].mxu0
      %v1288 = vadd.f32 0.0, %v1287
      %v1289 = vpop.f32.mrb[0].mxu0
      %1290 = vmatprep.mubr.f32.mxu0 0.0
      %1291 = vmatmul.mubr.f32.gmra.mrb[0].mxu0 %v1198
      %v1292 = vpop.f32.mrb[0].mxu0
      %v1293 = vadd.f32 0.0, %v1292
      %v1294 = vpop.f32.mrb[0].mxu0
      %1295 = vdwg.mxu0
      %v1296 = vadd.f32 %v1193, %v1283
      %v1297 = vadd.f32 %v1194, %v1288
      %v1298 = vadd.f32 %v1195, %v1293
      %v1299 = vld [vmem:[%s191 + $0x5] sm:$0xff]
      %v1300 = vld [vmem:[%s191 + $0xd] sm:$0xff]
      %v1301 = vld [vmem:[%s191 + $0x15] sm:$0xf]
      %s1302 = scalar_lea.vmem %s1, 1408
      %v1303 = vld [vmem:[%s1302] sm:$0xff]
      %v1304 = vld [vmem:[%s1302 + $0x8] sm:$0xff]
      %v1305 = vld [vmem:[%s1302 + $0x10] sm:$0xff]
      %v1306 = vld [vmem:[%s1302 + $0x18] sm:$0xff]
      %v1307 = vld [vmem:[%s1302 + $0x20] sm:$0xff]
      %v1308 = vld [vmem:[%s1302 + $0x28] sm:$0xff]
      %v1309 = vld [vmem:[%s1302 + $0x30] sm:$0xff]
      %v1310 = vld [vmem:[%s1302 + $0x38] sm:$0xff]
      %v1311 = vld [vmem:[%s1302 + $0x40] sm:$0xff]
      %v1312 = vld [vmem:[%s1302 + $0x48] sm:$0xff]
      %v1313 = vld [vmem:[%s1302 + $0x50] sm:$0xff]
      %v1314 = vld [vmem:[%s1302 + $0x58] sm:$0xff]
      %v1315 = vld [vmem:[%s1302 + $0x60] sm:$0xff]
      %v1316 = vld [vmem:[%s1302 + $0x68] sm:$0xff]
      %v1317 = vld [vmem:[%s1302 + $0x70] sm:$0xff]
      %v1318 = vld [vmem:[%s1302 + $0x78] sm:$0xff]
      %1319 = vmatprep.subr.mxu0 0.0
      %1320 = vmatpush1.msra.mxu0 %v1303
      %1321 = vmatprep.subr.mxu0 0.0
      %1322 = vmatpush1.msra.mxu0 %v1304
      %1323 = vmatprep.subr.mxu0 0.0
      %1324 = vmatpush1.msra.mxu0 %v1305
      %1325 = vmatprep.subr.mxu0 0.0
      %1326 = vmatpush1.msra.mxu0 %v1306
      %1327 = vmatprep.subr.mxu0 0.0
      %1328 = vmatpush1.msra.mxu0 %v1307
      %1329 = vmatprep.subr.mxu0 0.0
      %1330 = vmatpush1.msra.mxu0 %v1308
      %1331 = vmatprep.subr.mxu0 0.0
      %1332 = vmatpush1.msra.mxu0 %v1309
      %1333 = vmatprep.subr.mxu0 0.0
      %1334 = vmatpush1.msra.mxu0 %v1310
      %1335 = vmatprep.subr.mxu0 0.0
      %1336 = vmatpush1.msra.mxu0 %v1311
      %1337 = vmatprep.subr.mxu0 0.0
      %1338 = vmatpush1.msra.mxu0 %v1312
      %1339 = vmatprep.subr.mxu0 0.0
      %1340 = vmatpush1.msra.mxu0 %v1313
      %1341 = vmatprep.subr.mxu0 0.0
      %1342 = vmatpush1.msra.mxu0 %v1314
      %1343 = vmatprep.subr.mxu0 0.0
      %1344 = vmatpush1.msra.mxu0 %v1315
      %1345 = vmatprep.subr.mxu0 0.0
      %1346 = vmatpush1.msra.mxu0 %v1316
      %1347 = vmatprep.subr.mxu0 0.0
      %1348 = vmatpush1.msra.mxu0 %v1317
      %1349 = vmatprep.subr.mxu0 0.0
      %1350 = vmatpush1.msra.mxu0 %v1318
      %1351 = vmatprep.subr.mxu0 0.0
      %1352 = vmatpush1.msra.mxu0 0.0
      %1353 = vmatprep.subr.mxu0 0.0
      %1354 = vmatpush1.msra.mxu0 0.0
      %1355 = vmatprep.subr.mxu0 0.0
      %1356 = vmatpush1.msra.mxu0 0.0
      %1357 = vmatprep.subr.mxu0 0.0
      %1358 = vmatpush1.msra.mxu0 0.0
      %1359 = vmatprep.subr.mxu0 0.0
      %1360 = vmatpush1.msra.mxu0 0.0
      %1361 = vmatprep.subr.mxu0 0.0
      %1362 = vmatpush1.msra.mxu0 0.0
      %1363 = vmatprep.subr.mxu0 0.0
      %1364 = vmatpush1.msra.mxu0 0.0
      %1365 = vmatprep.subr.mxu0 0.0
      %1366 = vmatpush1.msra.mxu0 0.0
      %1367 = vmatprep.subr.mxu0 0.0
      %1368 = vmatpush1.msra.mxu0 0.0
      %1369 = vmatprep.subr.mxu0 0.0
      %1370 = vmatpush1.msra.mxu0 0.0
      %1371 = vmatprep.subr.mxu0 0.0
      %1372 = vmatpush1.msra.mxu0 0.0
      %1373 = vmatprep.subr.mxu0 0.0
      %1374 = vmatpush1.msra.mxu0 0.0
      %1375 = vmatprep.subr.mxu0 0.0
      %1376 = vmatpush1.msra.mxu0 0.0
      %1377 = vmatprep.subr.mxu0 0.0
      %1378 = vmatpush1.msra.mxu0 0.0
      %1379 = vmatprep.subr.mxu0 0.0
      %1380 = vmatpush1.msra.mxu0 0.0
      %1381 = vmatprep.subr.mxu0 0.0
      %1382 = vmatpush1.msra.mxu0 0.0
      %1383 = vmatprep.mubr.f32.mxu0 0.0
      %1384 = vmatmul.mubr.f32.gmra.mrb[0].mxu0 %v1299
      %v1385 = vpop.f32.mrb[0].mxu0
      %v1386 = vadd.f32 0.0, %v1385
      %v1387 = vpop.f32.mrb[0].mxu0
      %1388 = vmatprep.mubr.f32.mxu0 0.0
      %1389 = vmatmul.mubr.f32.gmra.mrb[0].mxu0 %v1300
      %v1390 = vpop.f32.mrb[0].mxu0
      %v1391 = vadd.f32 0.0, %v1390
      %v1392 = vpop.f32.mrb[0].mxu0
      %1393 = vmatprep.mubr.f32.mxu0 0.0
      %1394 = vmatmul.mubr.f32.gmra.mrb[0].mxu0 %v1301
      %v1395 = vpop.f32.mrb[0].mxu0
      %v1396 = vadd.f32 0.0, %v1395
      %v1397 = vpop.f32.mrb[0].mxu0
      %1398 = vdwg.mxu0
      %v1399 = vadd.f32 %v1296, %v1386
      %v1400 = vadd.f32 %v1297, %v1391
      %v1401 = vadd.f32 %v1298, %v1396
      %v1402 = vld [vmem:[%s166 + $0x6] sm:$0xff]
      %v1403 = vld [vmem:[%s166 + $0xe] sm:$0xff]
      %v1404 = vld [vmem:[%s166 + $0x16] sm:$0xf]
      %s1405 = scalar_lea.vmem %s1, 1536
      %v1406 = vld [vmem:[%s1405] sm:$0xff]
      %v1407 = vld [vmem:[%s1405 + $0x8] sm:$0xff]
      %v1408 = vld [vmem:[%s1405 + $0x10] sm:$0xff]
      %v1409 = vld [vmem:[%s1405 + $0x18] sm:$0xff]
      %v1410 = vld [vmem:[%s1405 + $0x20] sm:$0xff]
      %v1411 = vld [vmem:[%s1405 + $0x28] sm:$0xff]
      %v1412 = vld [vmem:[%s1405 + $0x30] sm:$0xff]
      %v1413 = vld [vmem:[%s1405 + $0x38] sm:$0xff]
      %v1414 = vld [vmem:[%s1405 + $0x40] sm:$0xff]
      %v1415 = vld [vmem:[%s1405 + $0x48] sm:$0xff]
      %v1416 = vld [vmem:[%s1405 + $0x50] sm:$0xff]
      %v1417 = vld [vmem:[%s1405 + $0x58] sm:$0xff]
      %v1418 = vld [vmem:[%s1405 + $0x60] sm:$0xff]
      %v1419 = vld [vmem:[%s1405 + $0x68] sm:$0xff]
      %v1420 = vld [vmem:[%s1405 + $0x70] sm:$0xff]
      %v1421 = vld [vmem:[%s1405 + $0x78] sm:$0xff]
      %1422 = vmatprep.subr.mxu0 0.0
      %1423 = vmatpush1.msra.mxu0 %v1406
      %1424 = vmatprep.subr.mxu0 0.0
      %1425 = vmatpush1.msra.mxu0 %v1407
      %1426 = vmatprep.subr.mxu0 0.0
      %1427 = vmatpush1.msra.mxu0 %v1408
      %1428 = vmatprep.subr.mxu0 0.0
      %1429 = vmatpush1.msra.mxu0 %v1409
      %1430 = vmatprep.subr.mxu0 0.0
      %1431 = vmatpush1.msra.mxu0 %v1410
      %1432 = vmatprep.subr.mxu0 0.0
      %1433 = vmatpush1.msra.mxu0 %v1411
      %1434 = vmatprep.subr.mxu0 0.0
      %1435 = vmatpush1.msra.mxu0 %v1412
      %1436 = vmatprep.subr.mxu0 0.0
      %1437 = vmatpush1.msra.mxu0 %v1413
      %1438 = vmatprep.subr.mxu0 0.0
      %1439 = vmatpush1.msra.mxu0 %v1414
      %1440 = vmatprep.subr.mxu0 0.0
      %1441 = vmatpush1.msra.mxu0 %v1415
      %1442 = vmatprep.subr.mxu0 0.0
      %1443 = vmatpush1.msra.mxu0 %v1416
      %1444 = vmatprep.subr.mxu0 0.0
      %1445 = vmatpush1.msra.mxu0 %v1417
      %1446 = vmatprep.subr.mxu0 0.0
      %1447 = vmatpush1.msra.mxu0 %v1418
      %1448 = vmatprep.subr.mxu0 0.0
      %1449 = vmatpush1.msra.mxu0 %v1419
      %1450 = vmatprep.subr.mxu0 0.0
      %1451 = vmatpush1.msra.mxu0 %v1420
      %1452 = vmatprep.subr.mxu0 0.0
      %1453 = vmatpush1.msra.mxu0 %v1421
      %1454 = vmatprep.subr.mxu0 0.0
      %1455 = vmatpush1.msra.mxu0 0.0
      %1456 = vmatprep.subr.mxu0 0.0
      %1457 = vmatpush1.msra.mxu0 0.0
      %1458 = vmatprep.subr.mxu0 0.0
      %1459 = vmatpush1.msra.mxu0 0.0
      %1460 = vmatprep.subr.mxu0 0.0
      %1461 = vmatpush1.msra.mxu0 0.0
      %1462 = vmatprep.subr.mxu0 0.0
      %1463 = vmatpush1.msra.mxu0 0.0
      %1464 = vmatprep.subr.mxu0 0.0
      %1465 = vmatpush1.msra.mxu0 0.0
      %1466 = vmatprep.subr.mxu0 0.0
      %1467 = vmatpush1.msra.mxu0 0.0
      %1468 = vmatprep.subr.mxu0 0.0
      %1469 = vmatpush1.msra.mxu0 0.0
      %1470 = vmatprep.subr.mxu0 0.0
      %1471 = vmatpush1.msra.mxu0 0.0
      %1472 = vmatprep.subr.mxu0 0.0
      %1473 = vmatpush1.msra.mxu0 0.0
      %1474 = vmatprep.subr.mxu0 0.0
      %1475 = vmatpush1.msra.mxu0 0.0
      %1476 = vmatprep.subr.mxu0 0.0
      %1477 = vmatpush1.msra.mxu0 0.0
      %1478 = vmatprep.subr.mxu0 0.0
      %1479 = vmatpush1.msra.mxu0 0.0
      %1480 = vmatprep.subr.mxu0 0.0
      %1481 = vmatpush1.msra.mxu0 0.0
      %1482 = vmatprep.subr.mxu0 0.0
      %1483 = vmatpush1.msra.mxu0 0.0
      %1484 = vmatprep.subr.mxu0 0.0
      %1485 = vmatpush1.msra.mxu0 0.0
      %1486 = vmatprep.mubr.f32.mxu0 0.0
      %1487 = vmatmul.mubr.f32.gmra.mrb[0].mxu0 %v1402
      %v1488 = vpop.f32.mrb[0].mxu0
      %v1489 = vadd.f32 0.0, %v1488
      %v1490 = vpop.f32.mrb[0].mxu0
      %1491 = vmatprep.mubr.f32.mxu0 0.0
      %1492 = vmatmul.mubr.f32.gmra.mrb[0].mxu0 %v1403
      %v1493 = vpop.f32.mrb[0].mxu0
      %v1494 = vadd.f32 0.0, %v1493
      %v1495 = vpop.f32.mrb[0].mxu0
      %1496 = vmatprep.mubr.f32.mxu0 0.0
      %1497 = vmatmul.mubr.f32.gmra.mrb[0].mxu0 %v1404
      %v1498 = vpop.f32.mrb[0].mxu0
      %v1499 = vadd.f32 0.0, %v1498
      %v1500 = vpop.f32.mrb[0].mxu0
      %1501 = vdwg.mxu0
      %v1502 = vadd.f32 %v1399, %v1489
      %v1503 = vadd.f32 %v1400, %v1494
      %v1504 = vadd.f32 %v1401, %v1499
      %v1505 = vld [vmem:[%s191 + $0x6] sm:$0xff]
      %v1506 = vld [vmem:[%s191 + $0xe] sm:$0xff]
      %v1507 = vld [vmem:[%s191 + $0x16] sm:$0xf]
      %s1508 = scalar_lea.vmem %s1, 1664
      %v1509 = vld [vmem:[%s1508] sm:$0xff]
      %v1510 = vld [vmem:[%s1508 + $0x8] sm:$0xff]
      %v1511 = vld [vmem:[%s1508 + $0x10] sm:$0xff]
      %v1512 = vld [vmem:[%s1508 + $0x18] sm:$0xff]
      %v1513 = vld [vmem:[%s1508 + $0x20] sm:$0xff]
      %v1514 = vld [vmem:[%s1508 + $0x28] sm:$0xff]
      %v1515 = vld [vmem:[%s1508 + $0x30] sm:$0xff]
      %v1516 = vld [vmem:[%s1508 + $0x38] sm:$0xff]
      %v1517 = vld [vmem:[%s1508 + $0x40] sm:$0xff]
      %v1518 = vld [vmem:[%s1508 + $0x48] sm:$0xff]
      %v1519 = vld [vmem:[%s1508 + $0x50] sm:$0xff]
      %v1520 = vld [vmem:[%s1508 + $0x58] sm:$0xff]
      %v1521 = vld [vmem:[%s1508 + $0x60] sm:$0xff]
      %v1522 = vld [vmem:[%s1508 + $0x68] sm:$0xff]
      %v1523 = vld [vmem:[%s1508 + $0x70] sm:$0xff]
      %v1524 = vld [vmem:[%s1508 + $0x78] sm:$0xff]
      %1525 = vmatprep.subr.mxu0 0.0
      %1526 = vmatpush1.msra.mxu0 %v1509
      %1527 = vmatprep.subr.mxu0 0.0
      %1528 = vmatpush1.msra.mxu0 %v1510
      %1529 = vmatprep.subr.mxu0 0.0
      %1530 = vmatpush1.msra.mxu0 %v1511
      %1531 = vmatprep.subr.mxu0 0.0
      %1532 = vmatpush1.msra.mxu0 %v1512
      %1533 = vmatprep.subr.mxu0 0.0
      %1534 = vmatpush1.msra.mxu0 %v1513
      %1535 = vmatprep.subr.mxu0 0.0
      %1536 = vmatpush1.msra.mxu0 %v1514
      %1537 = vmatprep.subr.mxu0 0.0
      %1538 = vmatpush1.msra.mxu0 %v1515
      %1539 = vmatprep.subr.mxu0 0.0
      %1540 = vmatpush1.msra.mxu0 %v1516
      %1541 = vmatprep.subr.mxu0 0.0
      %1542 = vmatpush1.msra.mxu0 %v1517
      %1543 = vmatprep.subr.mxu0 0.0
      %1544 = vmatpush1.msra.mxu0 %v1518
      %1545 = vmatprep.subr.mxu0 0.0
      %1546 = vmatpush1.msra.mxu0 %v1519
      %1547 = vmatprep.subr.mxu0 0.0
      %1548 = vmatpush1.msra.mxu0 %v1520
      %1549 = vmatprep.subr.mxu0 0.0
      %1550 = vmatpush1.msra.mxu0 %v1521
      %1551 = vmatprep.subr.mxu0 0.0
      %1552 = vmatpush1.msra.mxu0 %v1522
      %1553 = vmatprep.subr.mxu0 0.0
      %1554 = vmatpush1.msra.mxu0 %v1523
      %1555 = vmatprep.subr.mxu0 0.0
      %1556 = vmatpush1.msra.mxu0 %v1524
      %1557 = vmatprep.subr.mxu0 0.0
      %1558 = vmatpush1.msra.mxu0 0.0
      %1559 = vmatprep.subr.mxu0 0.0
      %1560 = vmatpush1.msra.mxu0 0.0
      %1561 = vmatprep.subr.mxu0 0.0
      %1562 = vmatpush1.msra.mxu0 0.0
      %1563 = vmatprep.subr.mxu0 0.0
      %1564 = vmatpush1.msra.mxu0 0.0
      %1565 = vmatprep.subr.mxu0 0.0
      %1566 = vmatpush1.msra.mxu0 0.0
      %1567 = vmatprep.subr.mxu0 0.0
      %1568 = vmatpush1.msra.mxu0 0.0
      %1569 = vmatprep.subr.mxu0 0.0
      %1570 = vmatpush1.msra.mxu0 0.0
      %1571 = vmatprep.subr.mxu0 0.0
      %1572 = vmatpush1.msra.mxu0 0.0
      %1573 = vmatprep.subr.mxu0 0.0
      %1574 = vmatpush1.msra.mxu0 0.0
      %1575 = vmatprep.subr.mxu0 0.0
      %1576 = vmatpush1.msra.mxu0 0.0
      %1577 = vmatprep.subr.mxu0 0.0
      %1578 = vmatpush1.msra.mxu0 0.0
      %1579 = vmatprep.subr.mxu0 0.0
      %1580 = vmatpush1.msra.mxu0 0.0
      %1581 = vmatprep.subr.mxu0 0.0
      %1582 = vmatpush1.msra.mxu0 0.0
      %1583 = vmatprep.subr.mxu0 0.0
      %1584 = vmatpush1.msra.mxu0 0.0
      %1585 = vmatprep.subr.mxu0 0.0
      %1586 = vmatpush1.msra.mxu0 0.0
      %1587 = vmatprep.subr.mxu0 0.0
      %1588 = vmatpush1.msra.mxu0 0.0
      %1589 = vmatprep.mubr.f32.mxu0 0.0
      %1590 = vmatmul.mubr.f32.gmra.mrb[0].mxu0 %v1505
      %v1591 = vpop.f32.mrb[0].mxu0
      %v1592 = vadd.f32 0.0, %v1591
      %v1593 = vpop.f32.mrb[0].mxu0
      %1594 = vmatprep.mubr.f32.mxu0 0.0
      %1595 = vmatmul.mubr.f32.gmra.mrb[0].mxu0 %v1506
      %v1596 = vpop.f32.mrb[0].mxu0
      %v1597 = vadd.f32 0.0, %v1596
      %v1598 = vpop.f32.mrb[0].mxu0
      %1599 = vmatprep.mubr.f32.mxu0 0.0
      %1600 = vmatmul.mubr.f32.gmra.mrb[0].mxu0 %v1507
      %v1601 = vpop.f32.mrb[0].mxu0
      %v1602 = vadd.f32 0.0, %v1601
      %v1603 = vpop.f32.mrb[0].mxu0
      %1604 = vdwg.mxu0
      %v1605 = vadd.f32 %v1502, %v1592
      %v1606 = vadd.f32 %v1503, %v1597
      %v1607 = vadd.f32 %v1504, %v1602
      %v1608 = vld [vmem:[%s166 + $0x7] sm:$0xff]
      %v1609 = vld [vmem:[%s166 + $0xf] sm:$0xff]
      %v1610 = vld [vmem:[%s166 + $0x17] sm:$0xf]
      %s1611 = scalar_lea.vmem %s1, 1792
      %v1612 = vld [vmem:[%s1611] sm:$0xff]
      %v1613 = vld [vmem:[%s1611 + $0x8] sm:$0xff]
      %v1614 = vld [vmem:[%s1611 + $0x10] sm:$0xff]
      %v1615 = vld [vmem:[%s1611 + $0x18] sm:$0xff]
      %v1616 = vld [vmem:[%s1611 + $0x20] sm:$0xff]
      %v1617 = vld [vmem:[%s1611 + $0x28] sm:$0xff]
      %v1618 = vld [vmem:[%s1611 + $0x30] sm:$0xff]
      %v1619 = vld [vmem:[%s1611 + $0x38] sm:$0xff]
      %v1620 = vld [vmem:[%s1611 + $0x40] sm:$0xff]
      %v1621 = vld [vmem:[%s1611 + $0x48] sm:$0xff]
      %v1622 = vld [vmem:[%s1611 + $0x50] sm:$0xff]
      %v1623 = vld [vmem:[%s1611 + $0x58] sm:$0xff]
      %v1624 = vld [vmem:[%s1611 + $0x60] sm:$0xff]
      %v1625 = vld [vmem:[%s1611 + $0x68] sm:$0xff]
      %v1626 = vld [vmem:[%s1611 + $0x70] sm:$0xff]
      %v1627 = vld [vmem:[%s1611 + $0x78] sm:$0xff]
      %1628 = vmatprep.subr.mxu0 0.0
      %1629 = vmatpush1.msra.mxu0 %v1612
      %1630 = vmatprep.subr.mxu0 0.0
      %1631 = vmatpush1.msra.mxu0 %v1613
      %1632 = vmatprep.subr.mxu0 0.0
      %1633 = vmatpush1.msra.mxu0 %v1614
      %1634 = vmatprep.subr.mxu0 0.0
      %1635 = vmatpush1.msra.mxu0 %v1615
      %1636 = vmatprep.subr.mxu0 0.0
      %1637 = vmatpush1.msra.mxu0 %v1616
      %1638 = vmatprep.subr.mxu0 0.0
      %1639 = vmatpush1.msra.mxu0 %v1617
      %1640 = vmatprep.subr.mxu0 0.0
      %1641 = vmatpush1.msra.mxu0 %v1618
      %1642 = vmatprep.subr.mxu0 0.0
      %1643 = vmatpush1.msra.mxu0 %v1619
      %1644 = vmatprep.subr.mxu0 0.0
      %1645 = vmatpush1.msra.mxu0 %v1620
      %1646 = vmatprep.subr.mxu0 0.0
      %1647 = vmatpush1.msra.mxu0 %v1621
      %1648 = vmatprep.subr.mxu0 0.0
      %1649 = vmatpush1.msra.mxu0 %v1622
      %1650 = vmatprep.subr.mxu0 0.0
      %1651 = vmatpush1.msra.mxu0 %v1623
      %1652 = vmatprep.subr.mxu0 0.0
      %1653 = vmatpush1.msra.mxu0 %v1624
      %1654 = vmatprep.subr.mxu0 0.0
      %1655 = vmatpush1.msra.mxu0 %v1625
      %1656 = vmatprep.subr.mxu0 0.0
      %1657 = vmatpush1.msra.mxu0 %v1626
      %1658 = vmatprep.subr.mxu0 0.0
      %1659 = vmatpush1.msra.mxu0 %v1627
      %1660 = vmatprep.subr.mxu0 0.0
      %1661 = vmatpush1.msra.mxu0 0.0
      %1662 = vmatprep.subr.mxu0 0.0
      %1663 = vmatpush1.msra.mxu0 0.0
      %1664 = vmatprep.subr.mxu0 0.0
      %1665 = vmatpush1.msra.mxu0 0.0
      %1666 = vmatprep.subr.mxu0 0.0
      %1667 = vmatpush1.msra.mxu0 0.0
      %1668 = vmatprep.subr.mxu0 0.0
      %1669 = vmatpush1.msra.mxu0 0.0
      %1670 = vmatprep.subr.mxu0 0.0
      %1671 = vmatpush1.msra.mxu0 0.0
      %1672 = vmatprep.subr.mxu0 0.0
      %1673 = vmatpush1.msra.mxu0 0.0
      %1674 = vmatprep.subr.mxu0 0.0
      %1675 = vmatpush1.msra.mxu0 0.0
      %1676 = vmatprep.subr.mxu0 0.0
      %1677 = vmatpush1.msra.mxu0 0.0
      %1678 = vmatprep.subr.mxu0 0.0
      %1679 = vmatpush1.msra.mxu0 0.0
      %1680 = vmatprep.subr.mxu0 0.0
      %1681 = vmatpush1.msra.mxu0 0.0
      %1682 = vmatprep.subr.mxu0 0.0
      %1683 = vmatpush1.msra.mxu0 0.0
      %1684 = vmatprep.subr.mxu0 0.0
      %1685 = vmatpush1.msra.mxu0 0.0
      %1686 = vmatprep.subr.mxu0 0.0
      %1687 = vmatpush1.msra.mxu0 0.0
      %1688 = vmatprep.subr.mxu0 0.0
      %1689 = vmatpush1.msra.mxu0 0.0
      %1690 = vmatprep.subr.mxu0 0.0
      %1691 = vmatpush1.msra.mxu0 0.0
      %1692 = vmatprep.mubr.f32.mxu0 0.0
      %1693 = vmatmul.mubr.f32.gmra.mrb[0].mxu0 %v1608
      %v1694 = vpop.f32.mrb[0].mxu0
      %v1695 = vadd.f32 0.0, %v1694
      %v1696 = vpop.f32.mrb[0].mxu0
      %1697 = vmatprep.mubr.f32.mxu0 0.0
      %1698 = vmatmul.mubr.f32.gmra.mrb[0].mxu0 %v1609
      %v1699 = vpop.f32.mrb[0].mxu0
      %v1700 = vadd.f32 0.0, %v1699
      %v1701 = vpop.f32.mrb[0].mxu0
      %1702 = vmatprep.mubr.f32.mxu0 0.0
      %1703 = vmatmul.mubr.f32.gmra.mrb[0].mxu0 %v1610
      %v1704 = vpop.f32.mrb[0].mxu0
      %v1705 = vadd.f32 0.0, %v1704
      %v1706 = vpop.f32.mrb[0].mxu0
      %1707 = vdwg.mxu0
      %v1708 = vadd.f32 %v1605, %v1695
      %v1709 = vadd.f32 %v1606, %v1700
      %v1710 = vadd.f32 %v1607, %v1705
      %v1711 = vld [vmem:[%s191 + $0x7] sm:$0xff]
      %v1712 = vld [vmem:[%s191 + $0xf] sm:$0xff]
      %v1713 = vld [vmem:[%s191 + $0x17] sm:$0xf]
      %s1714 = scalar_lea.vmem %s1, 1920
      %v1715 = vld [vmem:[%s1714] sm:$0xff]
      %v1716 = vld [vmem:[%s1714 + $0x8] sm:$0xff]
      %v1717 = vld [vmem:[%s1714 + $0x10] sm:$0xff]
      %v1718 = vld [vmem:[%s1714 + $0x18] sm:$0xff]
      %v1719 = vld [vmem:[%s1714 + $0x20] sm:$0xff]
      %v1720 = vld [vmem:[%s1714 + $0x28] sm:$0xff]
      %v1721 = vld [vmem:[%s1714 + $0x30] sm:$0xff]
      %v1722 = vld [vmem:[%s1714 + $0x38] sm:$0xff]
      %v1723 = vld [vmem:[%s1714 + $0x40] sm:$0xff]
      %v1724 = vld [vmem:[%s1714 + $0x48] sm:$0xff]
      %v1725 = vld [vmem:[%s1714 + $0x50] sm:$0xff]
      %v1726 = vld [vmem:[%s1714 + $0x58] sm:$0xff]
      %v1727 = vld [vmem:[%s1714 + $0x60] sm:$0xff]
      %v1728 = vld [vmem:[%s1714 + $0x68] sm:$0xff]
      %v1729 = vld [vmem:[%s1714 + $0x70] sm:$0xff]
      %v1730 = vld [vmem:[%s1714 + $0x78] sm:$0xff]
      %1731 = vmatprep.subr.mxu0 0.0
      %1732 = vmatpush1.msra.mxu0 %v1715
      %1733 = vmatprep.subr.mxu0 0.0
      %1734 = vmatpush1.msra.mxu0 %v1716
      %1735 = vmatprep.subr.mxu0 0.0
      %1736 = vmatpush1.msra.mxu0 %v1717
      %1737 = vmatprep.subr.mxu0 0.0
      %1738 = vmatpush1.msra.mxu0 %v1718
      %1739 = vmatprep.subr.mxu0 0.0
      %1740 = vmatpush1.msra.mxu0 %v1719
      %1741 = vmatprep.subr.mxu0 0.0
      %1742 = vmatpush1.msra.mxu0 %v1720
      %1743 = vmatprep.subr.mxu0 0.0
      %1744 = vmatpush1.msra.mxu0 %v1721
      %1745 = vmatprep.subr.mxu0 0.0
      %1746 = vmatpush1.msra.mxu0 %v1722
      %1747 = vmatprep.subr.mxu0 0.0
      %1748 = vmatpush1.msra.mxu0 %v1723
      %1749 = vmatprep.subr.mxu0 0.0
      %1750 = vmatpush1.msra.mxu0 %v1724
      %1751 = vmatprep.subr.mxu0 0.0
      %1752 = vmatpush1.msra.mxu0 %v1725
      %1753 = vmatprep.subr.mxu0 0.0
      %1754 = vmatpush1.msra.mxu0 %v1726
      %1755 = vmatprep.subr.mxu0 0.0
      %1756 = vmatpush1.msra.mxu0 %v1727
      %1757 = vmatprep.subr.mxu0 0.0
      %1758 = vmatpush1.msra.mxu0 %v1728
      %1759 = vmatprep.subr.mxu0 0.0
      %1760 = vmatpush1.msra.mxu0 %v1729
      %1761 = vmatprep.subr.mxu0 0.0
      %1762 = vmatpush1.msra.mxu0 %v1730
      %1763 = vmatprep.subr.mxu0 0.0
      %1764 = vmatpush1.msra.mxu0 0.0
      %1765 = vmatprep.subr.mxu0 0.0
      %1766 = vmatpush1.msra.mxu0 0.0
      %1767 = vmatprep.subr.mxu0 0.0
      %1768 = vmatpush1.msra.mxu0 0.0
      %1769 = vmatprep.subr.mxu0 0.0
      %1770 = vmatpush1.msra.mxu0 0.0
      %1771 = vmatprep.subr.mxu0 0.0
      %1772 = vmatpush1.msra.mxu0 0.0
      %1773 = vmatprep.subr.mxu0 0.0
      %1774 = vmatpush1.msra.mxu0 0.0
      %1775 = vmatprep.subr.mxu0 0.0
      %1776 = vmatpush1.msra.mxu0 0.0
      %1777 = vmatprep.subr.mxu0 0.0
      %1778 = vmatpush1.msra.mxu0 0.0
      %1779 = vmatprep.subr.mxu0 0.0
      %1780 = vmatpush1.msra.mxu0 0.0
      %1781 = vmatprep.subr.mxu0 0.0
      %1782 = vmatpush1.msra.mxu0 0.0
      %1783 = vmatprep.subr.mxu0 0.0
      %1784 = vmatpush1.msra.mxu0 0.0
      %1785 = vmatprep.subr.mxu0 0.0
      %1786 = vmatpush1.msra.mxu0 0.0
      %1787 = vmatprep.subr.mxu0 0.0
      %1788 = vmatpush1.msra.mxu0 0.0
      %1789 = vmatprep.subr.mxu0 0.0
      %1790 = vmatpush1.msra.mxu0 0.0
      %1791 = vmatprep.subr.mxu0 0.0
      %1792 = vmatpush1.msra.mxu0 0.0
      %1793 = vmatprep.subr.mxu0 0.0
      %1794 = vmatpush1.msra.mxu0 0.0
      %1795 = vmatprep.mubr.f32.mxu0 0.0
      %1796 = vmatmul.mubr.f32.gmra.mrb[0].mxu0 %v1711
      %v1797 = vpop.f32.mrb[0].mxu0
      %v1798 = vadd.f32 0.0, %v1797
      %v1799 = vpop.f32.mrb[0].mxu0
      %1800 = vmatprep.mubr.f32.mxu0 0.0
      %1801 = vmatmul.mubr.f32.gmra.mrb[0].mxu0 %v1712
      %v1802 = vpop.f32.mrb[0].mxu0
      %v1803 = vadd.f32 0.0, %v1802
      %v1804 = vpop.f32.mrb[0].mxu0
      %1805 = vmatprep.mubr.f32.mxu0 0.0
      %1806 = vmatmul.mubr.f32.gmra.mrb[0].mxu0 %v1713
      %v1807 = vpop.f32.mrb[0].mxu0
      %v1808 = vadd.f32 0.0, %v1807
      %v1809 = vpop.f32.mrb[0].mxu0
      %1810 = vdwg.mxu0
      %v1811 = vadd.f32 %v1708, %v1798
      %v1812 = vadd.f32 %v1709, %v1803
      %v1813 = vadd.f32 %v1710, %v1808
      %v1814 = vld [vmem:[%s166 + $0x8] sm:$0xff]
      %v1815 = vld [vmem:[%s166 + $0x10] sm:$0xff]
      %v1816 = vld [vmem:[%s166 + $0x18] sm:$0xf]
      %s1817 = scalar_lea.vmem %s1, 2048
      %v1818 = vld [vmem:[%s1817] sm:$0xff]
      %v1819 = vld [vmem:[%s1817 + $0x8] sm:$0xff]
      %v1820 = vld [vmem:[%s1817 + $0x10] sm:$0xff]
      %v1821 = vld [vmem:[%s1817 + $0x18] sm:$0xff]
      %v1822 = vld [vmem:[%s1817 + $0x20] sm:$0xff]
      %v1823 = vld [vmem:[%s1817 + $0x28] sm:$0xff]
      %v1824 = vld [vmem:[%s1817 + $0x30] sm:$0xff]
      %v1825 = vld [vmem:[%s1817 + $0x38] sm:$0xff]
      %v1826 = vld [vmem:[%s1817 + $0x40] sm:$0xff]
      %v1827 = vld [vmem:[%s1817 + $0x48] sm:$0xff]
      %v1828 = vld [vmem:[%s1817 + $0x50] sm:$0xff]
      %v1829 = vld [vmem:[%s1817 + $0x58] sm:$0xff]
      %v1830 = vld [vmem:[%s1817 + $0x60] sm:$0xff]
      %v1831 = vld [vmem:[%s1817 + $0x68] sm:$0xff]
      %v1832 = vld [vmem:[%s1817 + $0x70] sm:$0xff]
      %v1833 = vld [vmem:[%s1817 + $0x78] sm:$0xff]
      %1834 = vmatprep.subr.mxu0 0.0
      %1835 = vmatpush1.msra.mxu0 %v1818
      %1836 = vmatprep.subr.mxu0 0.0
      %1837 = vmatpush1.msra.mxu0 %v1819
      %1838 = vmatprep.subr.mxu0 0.0
      %1839 = vmatpush1.msra.mxu0 %v1820
      %1840 = vmatprep.subr.mxu0 0.0
      %1841 = vmatpush1.msra.mxu0 %v1821
      %1842 = vmatprep.subr.mxu0 0.0
      %1843 = vmatpush1.msra.mxu0 %v1822
      %1844 = vmatprep.subr.mxu0 0.0
      %1845 = vmatpush1.msra.mxu0 %v1823
      %1846 = vmatprep.subr.mxu0 0.0
      %1847 = vmatpush1.msra.mxu0 %v1824
      %1848 = vmatprep.subr.mxu0 0.0
      %1849 = vmatpush1.msra.mxu0 %v1825
      %1850 = vmatprep.subr.mxu0 0.0
      %1851 = vmatpush1.msra.mxu0 %v1826
      %1852 = vmatprep.subr.mxu0 0.0
      %1853 = vmatpush1.msra.mxu0 %v1827
      %1854 = vmatprep.subr.mxu0 0.0
      %1855 = vmatpush1.msra.mxu0 %v1828
      %1856 = vmatprep.subr.mxu0 0.0
      %1857 = vmatpush1.msra.mxu0 %v1829
      %1858 = vmatprep.subr.mxu0 0.0
      %1859 = vmatpush1.msra.mxu0 %v1830
      %1860 = vmatprep.subr.mxu0 0.0
      %1861 = vmatpush1.msra.mxu0 %v1831
      %1862 = vmatprep.subr.mxu0 0.0
      %1863 = vmatpush1.msra.mxu0 %v1832
      %1864 = vmatprep.subr.mxu0 0.0
      %1865 = vmatpush1.msra.mxu0 %v1833
      %1866 = vmatprep.subr.mxu0 0.0
      %1867 = vmatpush1.msra.mxu0 0.0
      %1868 = vmatprep.subr.mxu0 0.0
      %1869 = vmatpush1.msra.mxu0 0.0
      %1870 = vmatprep.subr.mxu0 0.0
      %1871 = vmatpush1.msra.mxu0 0.0
      %1872 = vmatprep.subr.mxu0 0.0
      %1873 = vmatpush1.msra.mxu0 0.0
      %1874 = vmatprep.subr.mxu0 0.0
      %1875 = vmatpush1.msra.mxu0 0.0
      %1876 = vmatprep.subr.mxu0 0.0
      %1877 = vmatpush1.msra.mxu0 0.0
      %1878 = vmatprep.subr.mxu0 0.0
      %1879 = vmatpush1.msra.mxu0 0.0
      %1880 = vmatprep.subr.mxu0 0.0
      %1881 = vmatpush1.msra.mxu0 0.0
      %1882 = vmatprep.subr.mxu0 0.0
      %1883 = vmatpush1.msra.mxu0 0.0
      %1884 = vmatprep.subr.mxu0 0.0
      %1885 = vmatpush1.msra.mxu0 0.0
      %1886 = vmatprep.subr.mxu0 0.0
      %1887 = vmatpush1.msra.mxu0 0.0
      %1888 = vmatprep.subr.mxu0 0.0
      %1889 = vmatpush1.msra.mxu0 0.0
      %1890 = vmatprep.subr.mxu0 0.0
      %1891 = vmatpush1.msra.mxu0 0.0
      %1892 = vmatprep.subr.mxu0 0.0
      %1893 = vmatpush1.msra.mxu0 0.0
      %1894 = vmatprep.subr.mxu0 0.0
      %1895 = vmatpush1.msra.mxu0 0.0
      %1896 = vmatprep.subr.mxu0 0.0
      %1897 = vmatpush1.msra.mxu0 0.0
      %1898 = vmatprep.mubr.f32.mxu0 0.0
      %1899 = vmatmul.mubr.f32.gmra.mrb[0].mxu0 %v1814
      %v1900 = vpop.f32.mrb[0].mxu0
      %v1901 = vadd.f32 0.0, %v1900
      %v1902 = vpop.f32.mrb[0].mxu0
      %1903 = vmatprep.mubr.f32.mxu0 0.0
      %1904 = vmatmul.mubr.f32.gmra.mrb[0].mxu0 %v1815
      %v1905 = vpop.f32.mrb[0].mxu0
      %v1906 = vadd.f32 0.0, %v1905
      %v1907 = vpop.f32.mrb[0].mxu0
      %1908 = vmatprep.mubr.f32.mxu0 0.0
      %1909 = vmatmul.mubr.f32.gmra.mrb[0].mxu0 %v1816
      %v1910 = vpop.f32.mrb[0].mxu0
      %v1911 = vadd.f32 0.0, %v1910
      %v1912 = vpop.f32.mrb[0].mxu0
      %1913 = vdwg.mxu0
      %v1914 = vadd.f32 %v1811, %v1901
      %v1915 = vadd.f32 %v1812, %v1906
      %v1916 = vadd.f32 %v1813, %v1911
      %v1917 = vld [vmem:[%s191 + $0x8] sm:$0xff]
      %v1918 = vld [vmem:[%s191 + $0x10] sm:$0xff]
      %v1919 = vld [vmem:[%s191 + $0x18] sm:$0xf]
      %s1920 = scalar_lea.vmem %s1, 2176
      %v1921 = vld [vmem:[%s1920] sm:$0xff]
      %v1922 = vld [vmem:[%s1920 + $0x8] sm:$0xff]
      %v1923 = vld [vmem:[%s1920 + $0x10] sm:$0xff]
      %v1924 = vld [vmem:[%s1920 + $0x18] sm:$0xff]
      %v1925 = vld [vmem:[%s1920 + $0x20] sm:$0xff]
      %v1926 = vld [vmem:[%s1920 + $0x28] sm:$0xff]
      %v1927 = vld [vmem:[%s1920 + $0x30] sm:$0xff]
      %v1928 = vld [vmem:[%s1920 + $0x38] sm:$0xff]
      %v1929 = vld [vmem:[%s1920 + $0x40] sm:$0xff]
      %v1930 = vld [vmem:[%s1920 + $0x48] sm:$0xff]
      %v1931 = vld [vmem:[%s1920 + $0x50] sm:$0xff]
      %v1932 = vld [vmem:[%s1920 + $0x58] sm:$0xff]
      %v1933 = vld [vmem:[%s1920 + $0x60] sm:$0xff]
      %v1934 = vld [vmem:[%s1920 + $0x68] sm:$0xff]
      %v1935 = vld [vmem:[%s1920 + $0x70] sm:$0xff]
      %v1936 = vld [vmem:[%s1920 + $0x78] sm:$0xff]
      %1937 = vmatprep.subr.mxu0 0.0
      %1938 = vmatpush1.msra.mxu0 %v1921
      %1939 = vmatprep.subr.mxu0 0.0
      %1940 = vmatpush1.msra.mxu0 %v1922
      %1941 = vmatprep.subr.mxu0 0.0
      %1942 = vmatpush1.msra.mxu0 %v1923
      %1943 = vmatprep.subr.mxu0 0.0
      %1944 = vmatpush1.msra.mxu0 %v1924
      %1945 = vmatprep.subr.mxu0 0.0
      %1946 = vmatpush1.msra.mxu0 %v1925
      %1947 = vmatprep.subr.mxu0 0.0
      %1948 = vmatpush1.msra.mxu0 %v1926
      %1949 = vmatprep.subr.mxu0 0.0
      %1950 = vmatpush1.msra.mxu0 %v1927
      %1951 = vmatprep.subr.mxu0 0.0
      %1952 = vmatpush1.msra.mxu0 %v1928
      %1953 = vmatprep.subr.mxu0 0.0
      %1954 = vmatpush1.msra.mxu0 %v1929
      %1955 = vmatprep.subr.mxu0 0.0
      %1956 = vmatpush1.msra.mxu0 %v1930
      %1957 = vmatprep.subr.mxu0 0.0
      %1958 = vmatpush1.msra.mxu0 %v1931
      %1959 = vmatprep.subr.mxu0 0.0
      %1960 = vmatpush1.msra.mxu0 %v1932
      %1961 = vmatprep.subr.mxu0 0.0
      %1962 = vmatpush1.msra.mxu0 %v1933
      %1963 = vmatprep.subr.mxu0 0.0
      %1964 = vmatpush1.msra.mxu0 %v1934
      %1965 = vmatprep.subr.mxu0 0.0
      %1966 = vmatpush1.msra.mxu0 %v1935
      %1967 = vmatprep.subr.mxu0 0.0
      %1968 = vmatpush1.msra.mxu0 %v1936
      %1969 = vmatprep.subr.mxu0 0.0
      %1970 = vmatpush1.msra.mxu0 0.0
      %1971 = vmatprep.subr.mxu0 0.0
      %1972 = vmatpush1.msra.mxu0 0.0
      %1973 = vmatprep.subr.mxu0 0.0
      %1974 = vmatpush1.msra.mxu0 0.0
      %1975 = vmatprep.subr.mxu0 0.0
      %1976 = vmatpush1.msra.mxu0 0.0
      %1977 = vmatprep.subr.mxu0 0.0
      %1978 = vmatpush1.msra.mxu0 0.0
      %1979 = vmatprep.subr.mxu0 0.0
      %1980 = vmatpush1.msra.mxu0 0.0
      %1981 = vmatprep.subr.mxu0 0.0
      %1982 = vmatpush1.msra.mxu0 0.0
      %1983 = vmatprep.subr.mxu0 0.0
      %1984 = vmatpush1.msra.mxu0 0.0
      %1985 = vmatprep.subr.mxu0 0.0
      %1986 = vmatpush1.msra.mxu0 0.0
      %1987 = vmatprep.subr.mxu0 0.0
      %1988 = vmatpush1.msra.mxu0 0.0
      %1989 = vmatprep.subr.mxu0 0.0
      %1990 = vmatpush1.msra.mxu0 0.0
      %1991 = vmatprep.subr.mxu0 0.0
      %1992 = vmatpush1.msra.mxu0 0.0
      %1993 = vmatprep.subr.mxu0 0.0
      %1994 = vmatpush1.msra.mxu0 0.0
      %1995 = vmatprep.subr.mxu0 0.0
      %1996 = vmatpush1.msra.mxu0 0.0
      %1997 = vmatprep.subr.mxu0 0.0
      %1998 = vmatpush1.msra.mxu0 0.0
      %1999 = vmatprep.subr.mxu0 0.0
      %2000 = vmatpush1.msra.mxu0 0.0
      %2001 = vmatprep.mubr.f32.mxu0 0.0
      %2002 = vmatmul.mubr.f32.gmra.mrb[0].mxu0 %v1917
      %v2003 = vpop.f32.mrb[0].mxu0
      %v2004 = vadd.f32 0.0, %v2003
      %v2005 = vpop.f32.mrb[0].mxu0
      %2006 = vmatprep.mubr.f32.mxu0 0.0
      %2007 = vmatmul.mubr.f32.gmra.mrb[0].mxu0 %v1918
      %v2008 = vpop.f32.mrb[0].mxu0
      %v2009 = vadd.f32 0.0, %v2008
      %v2010 = vpop.f32.mrb[0].mxu0
      %2011 = vmatprep.mubr.f32.mxu0 0.0
      %2012 = vmatmul.mubr.f32.gmra.mrb[0].mxu0 %v1919
      %v2013 = vpop.f32.mrb[0].mxu0
      %v2014 = vadd.f32 0.0, %v2013
      %v2015 = vpop.f32.mrb[0].mxu0
      %2016 = vdwg.mxu0
      %v2017 = vadd.f32 %v1914, %v2004
      %v2018 = vadd.f32 %v1915, %v2009
      %v2019 = vadd.f32 %v1916, %v2014
      %v2020 = vld [vmem:[%s166 + $0x9] sm:$0xff]
      %v2021 = vld [vmem:[%s166 + $0x11] sm:$0xff]
      %v2022 = vld [vmem:[%s166 + $0x19] sm:$0xf]
      %s2023 = scalar_lea.vmem %s1, 2304
      %v2024 = vld [vmem:[%s2023] sm:$0xff]
      %v2025 = vld [vmem:[%s2023 + $0x8] sm:$0xff]
      %v2026 = vld [vmem:[%s2023 + $0x10] sm:$0xff]
      %v2027 = vld [vmem:[%s2023 + $0x18] sm:$0xff]
      %v2028 = vld [vmem:[%s2023 + $0x20] sm:$0xff]
      %v2029 = vld [vmem:[%s2023 + $0x28] sm:$0xff]
      %v2030 = vld [vmem:[%s2023 + $0x30] sm:$0xff]
      %v2031 = vld [vmem:[%s2023 + $0x38] sm:$0xff]
      %v2032 = vld [vmem:[%s2023 + $0x40] sm:$0xff]
      %v2033 = vld [vmem:[%s2023 + $0x48] sm:$0xff]
      %v2034 = vld [vmem:[%s2023 + $0x50] sm:$0xff]
      %v2035 = vld [vmem:[%s2023 + $0x58] sm:$0xff]
      %v2036 = vld [vmem:[%s2023 + $0x60] sm:$0xff]
      %v2037 = vld [vmem:[%s2023 + $0x68] sm:$0xff]
      %v2038 = vld [vmem:[%s2023 + $0x70] sm:$0xff]
      %v2039 = vld [vmem:[%s2023 + $0x78] sm:$0xff]
      %2040 = vmatprep.subr.mxu0 0.0
      %2041 = vmatpush1.msra.mxu0 %v2024
      %2042 = vmatprep.subr.mxu0 0.0
      %2043 = vmatpush1.msra.mxu0 %v2025
      %2044 = vmatprep.subr.mxu0 0.0
      %2045 = vmatpush1.msra.mxu0 %v2026
      %2046 = vmatprep.subr.mxu0 0.0
      %2047 = vmatpush1.msra.mxu0 %v2027
      %2048 = vmatprep.subr.mxu0 0.0
      %2049 = vmatpush1.msra.mxu0 %v2028
      %2050 = vmatprep.subr.mxu0 0.0
      %2051 = vmatpush1.msra.mxu0 %v2029
      %2052 = vmatprep.subr.mxu0 0.0
      %2053 = vmatpush1.msra.mxu0 %v2030
      %2054 = vmatprep.subr.mxu0 0.0
      %2055 = vmatpush1.msra.mxu0 %v2031
      %2056 = vmatprep.subr.mxu0 0.0
      %2057 = vmatpush1.msra.mxu0 %v2032
      %2058 = vmatprep.subr.mxu0 0.0
      %2059 = vmatpush1.msra.mxu0 %v2033
      %2060 = vmatprep.subr.mxu0 0.0
      %2061 = vmatpush1.msra.mxu0 %v2034
      %2062 = vmatprep.subr.mxu0 0.0
      %2063 = vmatpush1.msra.mxu0 %v2035
      %2064 = vmatprep.subr.mxu0 0.0
      %2065 = vmatpush1.msra.mxu0 %v2036
      %2066 = vmatprep.subr.mxu0 0.0
      %2067 = vmatpush1.msra.mxu0 %v2037
      %2068 = vmatprep.subr.mxu0 0.0
      %2069 = vmatpush1.msra.mxu0 %v2038
      %2070 = vmatprep.subr.mxu0 0.0
      %2071 = vmatpush1.msra.mxu0 %v2039
      %2072 = vmatprep.subr.mxu0 0.0
      %2073 = vmatpush1.msra.mxu0 0.0
      %2074 = vmatprep.subr.mxu0 0.0
      %2075 = vmatpush1.msra.mxu0 0.0
      %2076 = vmatprep.subr.mxu0 0.0
      %2077 = vmatpush1.msra.mxu0 0.0
      %2078 = vmatprep.subr.mxu0 0.0
      %2079 = vmatpush1.msra.mxu0 0.0
      %2080 = vmatprep.subr.mxu0 0.0
      %2081 = vmatpush1.msra.mxu0 0.0
      %2082 = vmatprep.subr.mxu0 0.0
      %2083 = vmatpush1.msra.mxu0 0.0
      %2084 = vmatprep.subr.mxu0 0.0
      %2085 = vmatpush1.msra.mxu0 0.0
      %2086 = vmatprep.subr.mxu0 0.0
      %2087 = vmatpush1.msra.mxu0 0.0
      %2088 = vmatprep.subr.mxu0 0.0
      %2089 = vmatpush1.msra.mxu0 0.0
      %2090 = vmatprep.subr.mxu0 0.0
      %2091 = vmatpush1.msra.mxu0 0.0
      %2092 = vmatprep.subr.mxu0 0.0
      %2093 = vmatpush1.msra.mxu0 0.0
      %2094 = vmatprep.subr.mxu0 0.0
      %2095 = vmatpush1.msra.mxu0 0.0
      %2096 = vmatprep.subr.mxu0 0.0
      %2097 = vmatpush1.msra.mxu0 0.0
      %2098 = vmatprep.subr.mxu0 0.0
      %2099 = vmatpush1.msra.mxu0 0.0
      %2100 = vmatprep.subr.mxu0 0.0
      %2101 = vmatpush1.msra.mxu0 0.0
      %2102 = vmatprep.subr.mxu0 0.0
      %2103 = vmatpush1.msra.mxu0 0.0
      %2104 = vmatprep.mubr.f32.mxu0 0.0
      %2105 = vmatmul.mubr.f32.gmra.mrb[0].mxu0 %v2020
      %v2106 = vpop.f32.mrb[0].mxu0
      %v2107 = vadd.f32 0.0, %v2106
      %v2108 = vpop.f32.mrb[0].mxu0
      %2109 = vmatprep.mubr.f32.mxu0 0.0
      %2110 = vmatmul.mubr.f32.gmra.mrb[0].mxu0 %v2021
      %v2111 = vpop.f32.mrb[0].mxu0
      %v2112 = vadd.f32 0.0, %v2111
      %v2113 = vpop.f32.mrb[0].mxu0
      %2114 = vmatprep.mubr.f32.mxu0 0.0
      %2115 = vmatmul.mubr.f32.gmra.mrb[0].mxu0 %v2022
      %v2116 = vpop.f32.mrb[0].mxu0
      %v2117 = vadd.f32 0.0, %v2116
      %v2118 = vpop.f32.mrb[0].mxu0
      %2119 = vdwg.mxu0
      %v2120 = vadd.f32 %v2017, %v2107
      %v2121 = vadd.f32 %v2018, %v2112
      %v2122 = vadd.f32 %v2019, %v2117
      %v2123 = vld [vmem:[%s191 + $0x9] sm:$0xff]
      %v2124 = vld [vmem:[%s191 + $0x11] sm:$0xff]
      %v2125 = vld [vmem:[%s191 + $0x19] sm:$0xf]
      %s2126 = scalar_lea.vmem %s1, 2432
      %v2127 = vld [vmem:[%s2126] sm:$0xff]
      %v2128 = vld [vmem:[%s2126 + $0x8] sm:$0xff]
      %v2129 = vld [vmem:[%s2126 + $0x10] sm:$0xff]
      %v2130 = vld [vmem:[%s2126 + $0x18] sm:$0xff]
      %v2131 = vld [vmem:[%s2126 + $0x20] sm:$0xff]
      %v2132 = vld [vmem:[%s2126 + $0x28] sm:$0xff]
      %v2133 = vld [vmem:[%s2126 + $0x30] sm:$0xff]
      %v2134 = vld [vmem:[%s2126 + $0x38] sm:$0xff]
      %v2135 = vld [vmem:[%s2126 + $0x40] sm:$0xff]
      %v2136 = vld [vmem:[%s2126 + $0x48] sm:$0xff]
      %v2137 = vld [vmem:[%s2126 + $0x50] sm:$0xff]
      %v2138 = vld [vmem:[%s2126 + $0x58] sm:$0xff]
      %v2139 = vld [vmem:[%s2126 + $0x60] sm:$0xff]
      %v2140 = vld [vmem:[%s2126 + $0x68] sm:$0xff]
      %v2141 = vld [vmem:[%s2126 + $0x70] sm:$0xff]
      %v2142 = vld [vmem:[%s2126 + $0x78] sm:$0xff]
      %2143 = vmatprep.subr.mxu0 0.0
      %2144 = vmatpush1.msra.mxu0 %v2127
      %2145 = vmatprep.subr.mxu0 0.0
      %2146 = vmatpush1.msra.mxu0 %v2128
      %2147 = vmatprep.subr.mxu0 0.0
      %2148 = vmatpush1.msra.mxu0 %v2129
      %2149 = vmatprep.subr.mxu0 0.0
      %2150 = vmatpush1.msra.mxu0 %v2130
      %2151 = vmatprep.subr.mxu0 0.0
      %2152 = vmatpush1.msra.mxu0 %v2131
      %2153 = vmatprep.subr.mxu0 0.0
      %2154 = vmatpush1.msra.mxu0 %v2132
      %2155 = vmatprep.subr.mxu0 0.0
      %2156 = vmatpush1.msra.mxu0 %v2133
      %2157 = vmatprep.subr.mxu0 0.0
      %2158 = vmatpush1.msra.mxu0 %v2134
      %2159 = vmatprep.subr.mxu0 0.0
      %2160 = vmatpush1.msra.mxu0 %v2135
      %2161 = vmatprep.subr.mxu0 0.0
      %2162 = vmatpush1.msra.mxu0 %v2136
      %2163 = vmatprep.subr.mxu0 0.0
      %2164 = vmatpush1.msra.mxu0 %v2137
      %2165 = vmatprep.subr.mxu0 0.0
      %2166 = vmatpush1.msra.mxu0 %v2138
      %2167 = vmatprep.subr.mxu0 0.0
      %2168 = vmatpush1.msra.mxu0 %v2139
      %2169 = vmatprep.subr.mxu0 0.0
      %2170 = vmatpush1.msra.mxu0 %v2140
      %2171 = vmatprep.subr.mxu0 0.0
      %2172 = vmatpush1.msra.mxu0 %v2141
      %2173 = vmatprep.subr.mxu0 0.0
      %2174 = vmatpush1.msra.mxu0 %v2142
      %2175 = vmatprep.subr.mxu0 0.0
      %2176 = vmatpush1.msra.mxu0 0.0
      %2177 = vmatprep.subr.mxu0 0.0
      %2178 = vmatpush1.msra.mxu0 0.0
      %2179 = vmatprep.subr.mxu0 0.0
      %2180 = vmatpush1.msra.mxu0 0.0
      %2181 = vmatprep.subr.mxu0 0.0
      %2182 = vmatpush1.msra.mxu0 0.0
      %2183 = vmatprep.subr.mxu0 0.0
      %2184 = vmatpush1.msra.mxu0 0.0
      %2185 = vmatprep.subr.mxu0 0.0
      %2186 = vmatpush1.msra.mxu0 0.0
      %2187 = vmatprep.subr.mxu0 0.0
      %2188 = vmatpush1.msra.mxu0 0.0
      %2189 = vmatprep.subr.mxu0 0.0
      %2190 = vmatpush1.msra.mxu0 0.0
      %2191 = vmatprep.subr.mxu0 0.0
      %2192 = vmatpush1.msra.mxu0 0.0
      %2193 = vmatprep.subr.mxu0 0.0
      %2194 = vmatpush1.msra.mxu0 0.0
      %2195 = vmatprep.subr.mxu0 0.0
      %2196 = vmatpush1.msra.mxu0 0.0
      %2197 = vmatprep.subr.mxu0 0.0
      %2198 = vmatpush1.msra.mxu0 0.0
      %2199 = vmatprep.subr.mxu0 0.0
      %2200 = vmatpush1.msra.mxu0 0.0
      %2201 = vmatprep.subr.mxu0 0.0
      %2202 = vmatpush1.msra.mxu0 0.0
      %2203 = vmatprep.subr.mxu0 0.0
      %2204 = vmatpush1.msra.mxu0 0.0
      %2205 = vmatprep.subr.mxu0 0.0
      %2206 = vmatpush1.msra.mxu0 0.0
      %2207 = vmatprep.mubr.f32.mxu0 0.0
      %2208 = vmatmul.mubr.f32.gmra.mrb[0].mxu0 %v2123
      %v2209 = vpop.f32.mrb[0].mxu0
      %v2210 = vadd.f32 0.0, %v2209
      %v2211 = vpop.f32.mrb[0].mxu0
      %2212 = vmatprep.mubr.f32.mxu0 0.0
      %2213 = vmatmul.mubr.f32.gmra.mrb[0].mxu0 %v2124
      %v2214 = vpop.f32.mrb[0].mxu0
      %v2215 = vadd.f32 0.0, %v2214
      %v2216 = vpop.f32.mrb[0].mxu0
      %2217 = vmatprep.mubr.f32.mxu0 0.0
      %2218 = vmatmul.mubr.f32.gmra.mrb[0].mxu0 %v2125
      %v2219 = vpop.f32.mrb[0].mxu0
      %v2220 = vadd.f32 0.0, %v2219
      %v2221 = vpop.f32.mrb[0].mxu0
      %2222 = vdwg.mxu0
      %v2223 = vadd.f32 %v2120, %v2210
      %v2224 = vadd.f32 %v2121, %v2215
      %v2225 = vadd.f32 %v2122, %v2220
      %v2226 = vld [vmem:[%s166 + $0xa] sm:$0xff]
      %v2227 = vld [vmem:[%s166 + $0x12] sm:$0xff]
      %v2228 = vld [vmem:[%s166 + $0x1a] sm:$0xf]
      %s2229 = scalar_lea.vmem %s1, 2560
      %v2230 = vld [vmem:[%s2229] sm:$0xff]
      %v2231 = vld [vmem:[%s2229 + $0x8] sm:$0xff]
      %v2232 = vld [vmem:[%s2229 + $0x10] sm:$0xff]
      %v2233 = vld [vmem:[%s2229 + $0x18] sm:$0xff]
      %v2234 = vld [vmem:[%s2229 + $0x20] sm:$0xff]
      %v2235 = vld [vmem:[%s2229 + $0x28] sm:$0xff]
      %v2236 = vld [vmem:[%s2229 + $0x30] sm:$0xff]
      %v2237 = vld [vmem:[%s2229 + $0x38] sm:$0xff]
      %v2238 = vld [vmem:[%s2229 + $0x40] sm:$0xff]
      %v2239 = vld [vmem:[%s2229 + $0x48] sm:$0xff]
      %v2240 = vld [vmem:[%s2229 + $0x50] sm:$0xff]
      %v2241 = vld [vmem:[%s2229 + $0x58] sm:$0xff]
      %v2242 = vld [vmem:[%s2229 + $0x60] sm:$0xff]
      %v2243 = vld [vmem:[%s2229 + $0x68] sm:$0xff]
      %v2244 = vld [vmem:[%s2229 + $0x70] sm:$0xff]
      %v2245 = vld [vmem:[%s2229 + $0x78] sm:$0xff]
      %2246 = vmatprep.subr.mxu0 0.0
      %2247 = vmatpush1.msra.mxu0 %v2230
      %2248 = vmatprep.subr.mxu0 0.0
      %2249 = vmatpush1.msra.mxu0 %v2231
      %2250 = vmatprep.subr.mxu0 0.0
      %2251 = vmatpush1.msra.mxu0 %v2232
      %2252 = vmatprep.subr.mxu0 0.0
      %2253 = vmatpush1.msra.mxu0 %v2233
      %2254 = vmatprep.subr.mxu0 0.0
      %2255 = vmatpush1.msra.mxu0 %v2234
      %2256 = vmatprep.subr.mxu0 0.0
      %2257 = vmatpush1.msra.mxu0 %v2235
      %2258 = vmatprep.subr.mxu0 0.0
      %2259 = vmatpush1.msra.mxu0 %v2236
      %2260 = vmatprep.subr.mxu0 0.0
      %2261 = vmatpush1.msra.mxu0 %v2237
      %2262 = vmatprep.subr.mxu0 0.0
      %2263 = vmatpush1.msra.mxu0 %v2238
      %2264 = vmatprep.subr.mxu0 0.0
      %2265 = vmatpush1.msra.mxu0 %v2239
      %2266 = vmatprep.subr.mxu0 0.0
      %2267 = vmatpush1.msra.mxu0 %v2240
      %2268 = vmatprep.subr.mxu0 0.0
      %2269 = vmatpush1.msra.mxu0 %v2241
      %2270 = vmatprep.subr.mxu0 0.0
      %2271 = vmatpush1.msra.mxu0 %v2242
      %2272 = vmatprep.subr.mxu0 0.0
      %2273 = vmatpush1.msra.mxu0 %v2243
      %2274 = vmatprep.subr.mxu0 0.0
      %2275 = vmatpush1.msra.mxu0 %v2244
      %2276 = vmatprep.subr.mxu0 0.0
      %2277 = vmatpush1.msra.mxu0 %v2245
      %2278 = vmatprep.subr.mxu0 0.0
      %2279 = vmatpush1.msra.mxu0 0.0
      %2280 = vmatprep.subr.mxu0 0.0
      %2281 = vmatpush1.msra.mxu0 0.0
      %2282 = vmatprep.subr.mxu0 0.0
      %2283 = vmatpush1.msra.mxu0 0.0
      %2284 = vmatprep.subr.mxu0 0.0
      %2285 = vmatpush1.msra.mxu0 0.0
      %2286 = vmatprep.subr.mxu0 0.0
      %2287 = vmatpush1.msra.mxu0 0.0
      %2288 = vmatprep.subr.mxu0 0.0
      %2289 = vmatpush1.msra.mxu0 0.0
      %2290 = vmatprep.subr.mxu0 0.0
      %2291 = vmatpush1.msra.mxu0 0.0
      %2292 = vmatprep.subr.mxu0 0.0
      %2293 = vmatpush1.msra.mxu0 0.0
      %2294 = vmatprep.subr.mxu0 0.0
      %2295 = vmatpush1.msra.mxu0 0.0
      %2296 = vmatprep.subr.mxu0 0.0
      %2297 = vmatpush1.msra.mxu0 0.0
      %2298 = vmatprep.subr.mxu0 0.0
      %2299 = vmatpush1.msra.mxu0 0.0
      %2300 = vmatprep.subr.mxu0 0.0
      %2301 = vmatpush1.msra.mxu0 0.0
      %2302 = vmatprep.subr.mxu0 0.0
      %2303 = vmatpush1.msra.mxu0 0.0
      %2304 = vmatprep.subr.mxu0 0.0
      %2305 = vmatpush1.msra.mxu0 0.0
      %2306 = vmatprep.subr.mxu0 0.0
      %2307 = vmatpush1.msra.mxu0 0.0
      %2308 = vmatprep.subr.mxu0 0.0
      %2309 = vmatpush1.msra.mxu0 0.0
      %2310 = vmatprep.mubr.f32.mxu0 0.0
      %2311 = vmatmul.mubr.f32.gmra.mrb[0].mxu0 %v2226
      %v2312 = vpop.f32.mrb[0].mxu0
      %v2313 = vadd.f32 0.0, %v2312
      %v2314 = vpop.f32.mrb[0].mxu0
      %2315 = vmatprep.mubr.f32.mxu0 0.0
      %2316 = vmatmul.mubr.f32.gmra.mrb[0].mxu0 %v2227
      %v2317 = vpop.f32.mrb[0].mxu0
      %v2318 = vadd.f32 0.0, %v2317
      %v2319 = vpop.f32.mrb[0].mxu0
      %2320 = vmatprep.mubr.f32.mxu0 0.0
      %2321 = vmatmul.mubr.f32.gmra.mrb[0].mxu0 %v2228
      %v2322 = vpop.f32.mrb[0].mxu0
      %v2323 = vadd.f32 0.0, %v2322
      %v2324 = vpop.f32.mrb[0].mxu0
      %2325 = vdwg.mxu0
      %v2326 = vadd.f32 %v2223, %v2313
      %v2327 = vadd.f32 %v2224, %v2318
      %v2328 = vadd.f32 %v2225, %v2323
      %v2329 = vld [vmem:[%s191 + $0xa] sm:$0xff]
      %v2330 = vld [vmem:[%s191 + $0x12] sm:$0xff]
      %v2331 = vld [vmem:[%s191 + $0x1a] sm:$0xf]
      %s2332 = scalar_lea.vmem %s1, 2688
      %v2333 = vld [vmem:[%s2332] sm:$0xff]
      %v2334 = vld [vmem:[%s2332 + $0x8] sm:$0xff]
      %v2335 = vld [vmem:[%s2332 + $0x10] sm:$0xff]
      %v2336 = vld [vmem:[%s2332 + $0x18] sm:$0xff]
      %v2337 = vld [vmem:[%s2332 + $0x20] sm:$0xff]
      %v2338 = vld [vmem:[%s2332 + $0x28] sm:$0xff]
      %v2339 = vld [vmem:[%s2332 + $0x30] sm:$0xff]
      %v2340 = vld [vmem:[%s2332 + $0x38] sm:$0xff]
      %v2341 = vld [vmem:[%s2332 + $0x40] sm:$0xff]
      %v2342 = vld [vmem:[%s2332 + $0x48] sm:$0xff]
      %v2343 = vld [vmem:[%s2332 + $0x50] sm:$0xff]
      %v2344 = vld [vmem:[%s2332 + $0x58] sm:$0xff]
      %v2345 = vld [vmem:[%s2332 + $0x60] sm:$0xff]
      %v2346 = vld [vmem:[%s2332 + $0x68] sm:$0xff]
      %v2347 = vld [vmem:[%s2332 + $0x70] sm:$0xff]
      %v2348 = vld [vmem:[%s2332 + $0x78] sm:$0xff]
      %2349 = vmatprep.subr.mxu0 0.0
      %2350 = vmatpush1.msra.mxu0 %v2333
      %2351 = vmatprep.subr.mxu0 0.0
      %2352 = vmatpush1.msra.mxu0 %v2334
      %2353 = vmatprep.subr.mxu0 0.0
      %2354 = vmatpush1.msra.mxu0 %v2335
      %2355 = vmatprep.subr.mxu0 0.0
      %2356 = vmatpush1.msra.mxu0 %v2336
      %2357 = vmatprep.subr.mxu0 0.0
      %2358 = vmatpush1.msra.mxu0 %v2337
      %2359 = vmatprep.subr.mxu0 0.0
      %2360 = vmatpush1.msra.mxu0 %v2338
      %2361 = vmatprep.subr.mxu0 0.0
      %2362 = vmatpush1.msra.mxu0 %v2339
      %2363 = vmatprep.subr.mxu0 0.0
      %2364 = vmatpush1.msra.mxu0 %v2340
      %2365 = vmatprep.subr.mxu0 0.0
      %2366 = vmatpush1.msra.mxu0 %v2341
      %2367 = vmatprep.subr.mxu0 0.0
      %2368 = vmatpush1.msra.mxu0 %v2342
      %2369 = vmatprep.subr.mxu0 0.0
      %2370 = vmatpush1.msra.mxu0 %v2343
      %2371 = vmatprep.subr.mxu0 0.0
      %2372 = vmatpush1.msra.mxu0 %v2344
      %2373 = vmatprep.subr.mxu0 0.0
      %2374 = vmatpush1.msra.mxu0 %v2345
      %2375 = vmatprep.subr.mxu0 0.0
      %2376 = vmatpush1.msra.mxu0 %v2346
      %2377 = vmatprep.subr.mxu0 0.0
      %2378 = vmatpush1.msra.mxu0 %v2347
      %2379 = vmatprep.subr.mxu0 0.0
      %2380 = vmatpush1.msra.mxu0 %v2348
      %2381 = vmatprep.subr.mxu0 0.0
      %2382 = vmatpush1.msra.mxu0 0.0
      %2383 = vmatprep.subr.mxu0 0.0
      %2384 = vmatpush1.msra.mxu0 0.0
      %2385 = vmatprep.subr.mxu0 0.0
      %2386 = vmatpush1.msra.mxu0 0.0
      %2387 = vmatprep.subr.mxu0 0.0
      %2388 = vmatpush1.msra.mxu0 0.0
      %2389 = vmatprep.subr.mxu0 0.0
      %2390 = vmatpush1.msra.mxu0 0.0
      %2391 = vmatprep.subr.mxu0 0.0
      %2392 = vmatpush1.msra.mxu0 0.0
      %2393 = vmatprep.subr.mxu0 0.0
      %2394 = vmatpush1.msra.mxu0 0.0
      %2395 = vmatprep.subr.mxu0 0.0
      %2396 = vmatpush1.msra.mxu0 0.0
      %2397 = vmatprep.subr.mxu0 0.0
      %2398 = vmatpush1.msra.mxu0 0.0
      %2399 = vmatprep.subr.mxu0 0.0
      %2400 = vmatpush1.msra.mxu0 0.0
      %2401 = vmatprep.subr.mxu0 0.0
      %2402 = vmatpush1.msra.mxu0 0.0
      %2403 = vmatprep.subr.mxu0 0.0
      %2404 = vmatpush1.msra.mxu0 0.0
      %2405 = vmatprep.subr.mxu0 0.0
      %2406 = vmatpush1.msra.mxu0 0.0
      %2407 = vmatprep.subr.mxu0 0.0
      %2408 = vmatpush1.msra.mxu0 0.0
      %2409 = vmatprep.subr.mxu0 0.0
      %2410 = vmatpush1.msra.mxu0 0.0
      %2411 = vmatprep.subr.mxu0 0.0
      %2412 = vmatpush1.msra.mxu0 0.0
      %2413 = vmatprep.mubr.f32.mxu0 0.0
      %2414 = vmatmul.mubr.f32.gmra.mrb[0].mxu0 %v2329
      %v2415 = vpop.f32.mrb[0].mxu0
      %v2416 = vadd.f32 0.0, %v2415
      %v2417 = vpop.f32.mrb[0].mxu0
      %2418 = vmatprep.mubr.f32.mxu0 0.0
      %2419 = vmatmul.mubr.f32.gmra.mrb[0].mxu0 %v2330
      %v2420 = vpop.f32.mrb[0].mxu0
      %v2421 = vadd.f32 0.0, %v2420
      %v2422 = vpop.f32.mrb[0].mxu0
      %2423 = vmatprep.mubr.f32.mxu0 0.0
      %2424 = vmatmul.mubr.f32.gmra.mrb[0].mxu0 %v2331
      %v2425 = vpop.f32.mrb[0].mxu0
      %v2426 = vadd.f32 0.0, %v2425
      %v2427 = vpop.f32.mrb[0].mxu0
      %2428 = vdwg.mxu0
      %v2429 = vadd.f32 %v2326, %v2416
      %v2430 = vadd.f32 %v2327, %v2421
      %v2431 = vadd.f32 %v2328, %v2426
      %v2432 = vld [vmem:[%s166 + $0xb] sm:$0xff]
      %v2433 = vld [vmem:[%s166 + $0x13] sm:$0xff]
      %v2434 = vld [vmem:[%s166 + $0x1b] sm:$0xf]
      %s2435 = scalar_lea.vmem %s1, 2816
      %v2436 = vld [vmem:[%s2435] sm:$0xff]
      %v2437 = vld [vmem:[%s2435 + $0x8] sm:$0xff]
      %v2438 = vld [vmem:[%s2435 + $0x10] sm:$0xff]
      %v2439 = vld [vmem:[%s2435 + $0x18] sm:$0xff]
      %v2440 = vld [vmem:[%s2435 + $0x20] sm:$0xff]
      %v2441 = vld [vmem:[%s2435 + $0x28] sm:$0xff]
      %v2442 = vld [vmem:[%s2435 + $0x30] sm:$0xff]
      %v2443 = vld [vmem:[%s2435 + $0x38] sm:$0xff]
      %v2444 = vld [vmem:[%s2435 + $0x40] sm:$0xff]
      %v2445 = vld [vmem:[%s2435 + $0x48] sm:$0xff]
      %v2446 = vld [vmem:[%s2435 + $0x50] sm:$0xff]
      %v2447 = vld [vmem:[%s2435 + $0x58] sm:$0xff]
      %v2448 = vld [vmem:[%s2435 + $0x60] sm:$0xff]
      %v2449 = vld [vmem:[%s2435 + $0x68] sm:$0xff]
      %v2450 = vld [vmem:[%s2435 + $0x70] sm:$0xff]
      %v2451 = vld [vmem:[%s2435 + $0x78] sm:$0xff]
      %2452 = vmatprep.subr.mxu0 0.0
      %2453 = vmatpush1.msra.mxu0 %v2436
      %2454 = vmatprep.subr.mxu0 0.0
      %2455 = vmatpush1.msra.mxu0 %v2437
      %2456 = vmatprep.subr.mxu0 0.0
      %2457 = vmatpush1.msra.mxu0 %v2438
      %2458 = vmatprep.subr.mxu0 0.0
      %2459 = vmatpush1.msra.mxu0 %v2439
      %2460 = vmatprep.subr.mxu0 0.0
      %2461 = vmatpush1.msra.mxu0 %v2440
      %2462 = vmatprep.subr.mxu0 0.0
      %2463 = vmatpush1.msra.mxu0 %v2441
      %2464 = vmatprep.subr.mxu0 0.0
      %2465 = vmatpush1.msra.mxu0 %v2442
      %2466 = vmatprep.subr.mxu0 0.0
      %2467 = vmatpush1.msra.mxu0 %v2443
      %2468 = vmatprep.subr.mxu0 0.0
      %2469 = vmatpush1.msra.mxu0 %v2444
      %2470 = vmatprep.subr.mxu0 0.0
      %2471 = vmatpush1.msra.mxu0 %v2445
      %2472 = vmatprep.subr.mxu0 0.0
      %2473 = vmatpush1.msra.mxu0 %v2446
      %2474 = vmatprep.subr.mxu0 0.0
      %2475 = vmatpush1.msra.mxu0 %v2447
      %2476 = vmatprep.subr.mxu0 0.0
      %2477 = vmatpush1.msra.mxu0 %v2448
      %2478 = vmatprep.subr.mxu0 0.0
      %2479 = vmatpush1.msra.mxu0 %v2449
      %2480 = vmatprep.subr.mxu0 0.0
      %2481 = vmatpush1.msra.mxu0 %v2450
      %2482 = vmatprep.subr.mxu0 0.0
      %2483 = vmatpush1.msra.mxu0 %v2451
      %2484 = vmatprep.subr.mxu0 0.0
      %2485 = vmatpush1.msra.mxu0 0.0
      %2486 = vmatprep.subr.mxu0 0.0
      %2487 = vmatpush1.msra.mxu0 0.0
      %2488 = vmatprep.subr.mxu0 0.0
      %2489 = vmatpush1.msra.mxu0 0.0
      %2490 = vmatprep.subr.mxu0 0.0
      %2491 = vmatpush1.msra.mxu0 0.0
      %2492 = vmatprep.subr.mxu0 0.0
      %2493 = vmatpush1.msra.mxu0 0.0
      %2494 = vmatprep.subr.mxu0 0.0
      %2495 = vmatpush1.msra.mxu0 0.0
      %2496 = vmatprep.subr.mxu0 0.0
      %2497 = vmatpush1.msra.mxu0 0.0
      %2498 = vmatprep.subr.mxu0 0.0
      %2499 = vmatpush1.msra.mxu0 0.0
      %2500 = vmatprep.subr.mxu0 0.0
      %2501 = vmatpush1.msra.mxu0 0.0
      %2502 = vmatprep.subr.mxu0 0.0
      %2503 = vmatpush1.msra.mxu0 0.0
      %2504 = vmatprep.subr.mxu0 0.0
      %2505 = vmatpush1.msra.mxu0 0.0
      %2506 = vmatprep.subr.mxu0 0.0
      %2507 = vmatpush1.msra.mxu0 0.0
      %2508 = vmatprep.subr.mxu0 0.0
      %2509 = vmatpush1.msra.mxu0 0.0
      %2510 = vmatprep.subr.mxu0 0.0
      %2511 = vmatpush1.msra.mxu0 0.0
      %2512 = vmatprep.subr.mxu0 0.0
      %2513 = vmatpush1.msra.mxu0 0.0
      %2514 = vmatprep.subr.mxu0 0.0
      %2515 = vmatpush1.msra.mxu0 0.0
      %2516 = vmatprep.mubr.f32.mxu0 0.0
      %2517 = vmatmul.mubr.f32.gmra.mrb[0].mxu0 %v2432
      %v2518 = vpop.f32.mrb[0].mxu0
      %v2519 = vadd.f32 0.0, %v2518
      %v2520 = vpop.f32.mrb[0].mxu0
      %2521 = vmatprep.mubr.f32.mxu0 0.0
      %2522 = vmatmul.mubr.f32.gmra.mrb[0].mxu0 %v2433
      %v2523 = vpop.f32.mrb[0].mxu0
      %v2524 = vadd.f32 0.0, %v2523
      %v2525 = vpop.f32.mrb[0].mxu0
      %2526 = vmatprep.mubr.f32.mxu0 0.0
      %2527 = vmatmul.mubr.f32.gmra.mrb[0].mxu0 %v2434
      %v2528 = vpop.f32.mrb[0].mxu0
      %v2529 = vadd.f32 0.0, %v2528
      %v2530 = vpop.f32.mrb[0].mxu0
      %2531 = vdwg.mxu0
      %v2532 = vadd.f32 %v2429, %v2519
      %v2533 = vadd.f32 %v2430, %v2524
      %v2534 = vadd.f32 %v2431, %v2529
      %v2535 = vld [vmem:[%s191 + $0xb] sm:$0xff]
      %v2536 = vld [vmem:[%s191 + $0x13] sm:$0xff]
      %v2537 = vld [vmem:[%s191 + $0x1b] sm:$0xf]
      %s2538 = scalar_lea.vmem %s1, 2944
      %v2539 = vld [vmem:[%s2538] sm:$0xff]
      %v2540 = vld [vmem:[%s2538 + $0x8] sm:$0xff]
      %v2541 = vld [vmem:[%s2538 + $0x10] sm:$0xff]
      %v2542 = vld [vmem:[%s2538 + $0x18] sm:$0xff]
      %v2543 = vld [vmem:[%s2538 + $0x20] sm:$0xff]
      %v2544 = vld [vmem:[%s2538 + $0x28] sm:$0xff]
      %v2545 = vld [vmem:[%s2538 + $0x30] sm:$0xff]
      %v2546 = vld [vmem:[%s2538 + $0x38] sm:$0xff]
      %v2547 = vld [vmem:[%s2538 + $0x40] sm:$0xff]
      %v2548 = vld [vmem:[%s2538 + $0x48] sm:$0xff]
      %v2549 = vld [vmem:[%s2538 + $0x50] sm:$0xff]
      %v2550 = vld [vmem:[%s2538 + $0x58] sm:$0xff]
      %v2551 = vld [vmem:[%s2538 + $0x60] sm:$0xff]
      %v2552 = vld [vmem:[%s2538 + $0x68] sm:$0xff]
      %v2553 = vld [vmem:[%s2538 + $0x70] sm:$0xff]
      %v2554 = vld [vmem:[%s2538 + $0x78] sm:$0xff]
      %2555 = vmatprep.subr.mxu0 0.0
      %2556 = vmatpush1.msra.mxu0 %v2539
      %2557 = vmatprep.subr.mxu0 0.0
      %2558 = vmatpush1.msra.mxu0 %v2540
      %2559 = vmatprep.subr.mxu0 0.0
      %2560 = vmatpush1.msra.mxu0 %v2541
      %2561 = vmatprep.subr.mxu0 0.0
      %2562 = vmatpush1.msra.mxu0 %v2542
      %2563 = vmatprep.subr.mxu0 0.0
      %2564 = vmatpush1.msra.mxu0 %v2543
      %2565 = vmatprep.subr.mxu0 0.0
      %2566 = vmatpush1.msra.mxu0 %v2544
      %2567 = vmatprep.subr.mxu0 0.0
      %2568 = vmatpush1.msra.mxu0 %v2545
      %2569 = vmatprep.subr.mxu0 0.0
      %2570 = vmatpush1.msra.mxu0 %v2546
      %2571 = vmatprep.subr.mxu0 0.0
      %2572 = vmatpush1.msra.mxu0 %v2547
      %2573 = vmatprep.subr.mxu0 0.0
      %2574 = vmatpush1.msra.mxu0 %v2548
      %2575 = vmatprep.subr.mxu0 0.0
      %2576 = vmatpush1.msra.mxu0 %v2549
      %2577 = vmatprep.subr.mxu0 0.0
      %2578 = vmatpush1.msra.mxu0 %v2550
      %2579 = vmatprep.subr.mxu0 0.0
      %2580 = vmatpush1.msra.mxu0 %v2551
      %2581 = vmatprep.subr.mxu0 0.0
      %2582 = vmatpush1.msra.mxu0 %v2552
      %2583 = vmatprep.subr.mxu0 0.0
      %2584 = vmatpush1.msra.mxu0 %v2553
      %2585 = vmatprep.subr.mxu0 0.0
      %2586 = vmatpush1.msra.mxu0 %v2554
      %2587 = vmatprep.subr.mxu0 0.0
      %2588 = vmatpush1.msra.mxu0 0.0
      %2589 = vmatprep.subr.mxu0 0.0
      %2590 = vmatpush1.msra.mxu0 0.0
      %2591 = vmatprep.subr.mxu0 0.0
      %2592 = vmatpush1.msra.mxu0 0.0
      %2593 = vmatprep.subr.mxu0 0.0
      %2594 = vmatpush1.msra.mxu0 0.0
      %2595 = vmatprep.subr.mxu0 0.0
      %2596 = vmatpush1.msra.mxu0 0.0
      %2597 = vmatprep.subr.mxu0 0.0
      %2598 = vmatpush1.msra.mxu0 0.0
      %2599 = vmatprep.subr.mxu0 0.0
      %2600 = vmatpush1.msra.mxu0 0.0
      %2601 = vmatprep.subr.mxu0 0.0
      %2602 = vmatpush1.msra.mxu0 0.0
      %2603 = vmatprep.subr.mxu0 0.0
      %2604 = vmatpush1.msra.mxu0 0.0
      %2605 = vmatprep.subr.mxu0 0.0
      %2606 = vmatpush1.msra.mxu0 0.0
      %2607 = vmatprep.subr.mxu0 0.0
      %2608 = vmatpush1.msra.mxu0 0.0
      %2609 = vmatprep.subr.mxu0 0.0
      %2610 = vmatpush1.msra.mxu0 0.0
      %2611 = vmatprep.subr.mxu0 0.0
      %2612 = vmatpush1.msra.mxu0 0.0
      %2613 = vmatprep.subr.mxu0 0.0
      %2614 = vmatpush1.msra.mxu0 0.0
      %2615 = vmatprep.subr.mxu0 0.0
      %2616 = vmatpush1.msra.mxu0 0.0
      %2617 = vmatprep.subr.mxu0 0.0
      %2618 = vmatpush1.msra.mxu0 0.0
      %2619 = vmatprep.mubr.f32.mxu0 0.0
      %2620 = vmatmul.mubr.f32.gmra.mrb[0].mxu0 %v2535
      %v2621 = vpop.f32.mrb[0].mxu0
      %v2622 = vadd.f32 0.0, %v2621
      %v2623 = vpop.f32.mrb[0].mxu0
      %2624 = vmatprep.mubr.f32.mxu0 0.0
      %2625 = vmatmul.mubr.f32.gmra.mrb[0].mxu0 %v2536
      %v2626 = vpop.f32.mrb[0].mxu0
      %v2627 = vadd.f32 0.0, %v2626
      %v2628 = vpop.f32.mrb[0].mxu0
      %2629 = vmatprep.mubr.f32.mxu0 0.0
      %2630 = vmatmul.mubr.f32.gmra.mrb[0].mxu0 %v2537
      %v2631 = vpop.f32.mrb[0].mxu0
      %v2632 = vadd.f32 0.0, %v2631
      %v2633 = vpop.f32.mrb[0].mxu0
      %2634 = vdwg.mxu0
      %v2635 = vadd.f32 %v2532, %v2622
      %v2636 = vadd.f32 %v2533, %v2627
      %v2637 = vadd.f32 %v2534, %v2632
      %v2638 = vld [vmem:[%s166 + $0xc] sm:$0xff]
      %v2639 = vld [vmem:[%s166 + $0x14] sm:$0xff]
      %v2640 = vld [vmem:[%s166 + $0x1c] sm:$0xf]
      %s2641 = scalar_lea.vmem %s1, 3072
      %v2642 = vld [vmem:[%s2641] sm:$0xff]
      %v2643 = vld [vmem:[%s2641 + $0x8] sm:$0xff]
      %v2644 = vld [vmem:[%s2641 + $0x10] sm:$0xff]
      %v2645 = vld [vmem:[%s2641 + $0x18] sm:$0xff]
      %v2646 = vld [vmem:[%s2641 + $0x20] sm:$0xff]
      %v2647 = vld [vmem:[%s2641 + $0x28] sm:$0xff]
      %v2648 = vld [vmem:[%s2641 + $0x30] sm:$0xff]
      %v2649 = vld [vmem:[%s2641 + $0x38] sm:$0xff]
      %v2650 = vld [vmem:[%s2641 + $0x40] sm:$0xff]
      %v2651 = vld [vmem:[%s2641 + $0x48] sm:$0xff]
      %v2652 = vld [vmem:[%s2641 + $0x50] sm:$0xff]
      %v2653 = vld [vmem:[%s2641 + $0x58] sm:$0xff]
      %v2654 = vld [vmem:[%s2641 + $0x60] sm:$0xff]
      %v2655 = vld [vmem:[%s2641 + $0x68] sm:$0xff]
      %v2656 = vld [vmem:[%s2641 + $0x70] sm:$0xff]
      %v2657 = vld [vmem:[%s2641 + $0x78] sm:$0xff]
      %2658 = vmatprep.subr.mxu0 0.0
      %2659 = vmatpush1.msra.mxu0 %v2642
      %2660 = vmatprep.subr.mxu0 0.0
      %2661 = vmatpush1.msra.mxu0 %v2643
      %2662 = vmatprep.subr.mxu0 0.0
      %2663 = vmatpush1.msra.mxu0 %v2644
      %2664 = vmatprep.subr.mxu0 0.0
      %2665 = vmatpush1.msra.mxu0 %v2645
      %2666 = vmatprep.subr.mxu0 0.0
      %2667 = vmatpush1.msra.mxu0 %v2646
      %2668 = vmatprep.subr.mxu0 0.0
      %2669 = vmatpush1.msra.mxu0 %v2647
      %2670 = vmatprep.subr.mxu0 0.0
      %2671 = vmatpush1.msra.mxu0 %v2648
      %2672 = vmatprep.subr.mxu0 0.0
      %2673 = vmatpush1.msra.mxu0 %v2649
      %2674 = vmatprep.subr.mxu0 0.0
      %2675 = vmatpush1.msra.mxu0 %v2650
      %2676 = vmatprep.subr.mxu0 0.0
      %2677 = vmatpush1.msra.mxu0 %v2651
      %2678 = vmatprep.subr.mxu0 0.0
      %2679 = vmatpush1.msra.mxu0 %v2652
      %2680 = vmatprep.subr.mxu0 0.0
      %2681 = vmatpush1.msra.mxu0 %v2653
      %2682 = vmatprep.subr.mxu0 0.0
      %2683 = vmatpush1.msra.mxu0 %v2654
      %2684 = vmatprep.subr.mxu0 0.0
      %2685 = vmatpush1.msra.mxu0 %v2655
      %2686 = vmatprep.subr.mxu0 0.0
      %2687 = vmatpush1.msra.mxu0 %v2656
      %2688 = vmatprep.subr.mxu0 0.0
      %2689 = vmatpush1.msra.mxu0 %v2657
      %2690 = vmatprep.subr.mxu0 0.0
      %2691 = vmatpush1.msra.mxu0 0.0
      %2692 = vmatprep.subr.mxu0 0.0
      %2693 = vmatpush1.msra.mxu0 0.0
      %2694 = vmatprep.subr.mxu0 0.0
      %2695 = vmatpush1.msra.mxu0 0.0
      %2696 = vmatprep.subr.mxu0 0.0
      %2697 = vmatpush1.msra.mxu0 0.0
      %2698 = vmatprep.subr.mxu0 0.0
      %2699 = vmatpush1.msra.mxu0 0.0
      %2700 = vmatprep.subr.mxu0 0.0
      %2701 = vmatpush1.msra.mxu0 0.0
      %2702 = vmatprep.subr.mxu0 0.0
      %2703 = vmatpush1.msra.mxu0 0.0
      %2704 = vmatprep.subr.mxu0 0.0
      %2705 = vmatpush1.msra.mxu0 0.0
      %2706 = vmatprep.subr.mxu0 0.0
      %2707 = vmatpush1.msra.mxu0 0.0
      %2708 = vmatprep.subr.mxu0 0.0
      %2709 = vmatpush1.msra.mxu0 0.0
      %2710 = vmatprep.subr.mxu0 0.0
      %2711 = vmatpush1.msra.mxu0 0.0
      %2712 = vmatprep.subr.mxu0 0.0
      %2713 = vmatpush1.msra.mxu0 0.0
      %2714 = vmatprep.subr.mxu0 0.0
      %2715 = vmatpush1.msra.mxu0 0.0
      %2716 = vmatprep.subr.mxu0 0.0
      %2717 = vmatpush1.msra.mxu0 0.0
      %2718 = vmatprep.subr.mxu0 0.0
      %2719 = vmatpush1.msra.mxu0 0.0
      %2720 = vmatprep.subr.mxu0 0.0
      %2721 = vmatpush1.msra.mxu0 0.0
      %2722 = vmatprep.mubr.f32.mxu0 0.0
      %2723 = vmatmul.mubr.f32.gmra.mrb[0].mxu0 %v2638
      %v2724 = vpop.f32.mrb[0].mxu0
      %v2725 = vadd.f32 0.0, %v2724
      %v2726 = vpop.f32.mrb[0].mxu0
      %2727 = vmatprep.mubr.f32.mxu0 0.0
      %2728 = vmatmul.mubr.f32.gmra.mrb[0].mxu0 %v2639
      %v2729 = vpop.f32.mrb[0].mxu0
      %v2730 = vadd.f32 0.0, %v2729
      %v2731 = vpop.f32.mrb[0].mxu0
      %2732 = vmatprep.mubr.f32.mxu0 0.0
      %2733 = vmatmul.mubr.f32.gmra.mrb[0].mxu0 %v2640
      %v2734 = vpop.f32.mrb[0].mxu0
      %v2735 = vadd.f32 0.0, %v2734
      %v2736 = vpop.f32.mrb[0].mxu0
      %2737 = vdwg.mxu0
      %v2738 = vadd.f32 %v2635, %v2725
      %v2739 = vadd.f32 %v2636, %v2730
      %v2740 = vadd.f32 %v2637, %v2735
      %v2741 = vld [vmem:[%s191 + $0xc] sm:$0xff]
      %v2742 = vld [vmem:[%s191 + $0x14] sm:$0xff]
      %v2743 = vld [vmem:[%s191 + $0x1c] sm:$0xf]
      %s2744 = scalar_lea.vmem %s1, 3200
      %v2745 = vld [vmem:[%s2744] sm:$0xff]
      %v2746 = vld [vmem:[%s2744 + $0x8] sm:$0xff]
      %v2747 = vld [vmem:[%s2744 + $0x10] sm:$0xff]
      %v2748 = vld [vmem:[%s2744 + $0x18] sm:$0xff]
      %v2749 = vld [vmem:[%s2744 + $0x20] sm:$0xff]
      %v2750 = vld [vmem:[%s2744 + $0x28] sm:$0xff]
      %v2751 = vld [vmem:[%s2744 + $0x30] sm:$0xff]
      %v2752 = vld [vmem:[%s2744 + $0x38] sm:$0xff]
      %v2753 = vld [vmem:[%s2744 + $0x40] sm:$0xff]
      %v2754 = vld [vmem:[%s2744 + $0x48] sm:$0xff]
      %v2755 = vld [vmem:[%s2744 + $0x50] sm:$0xff]
      %v2756 = vld [vmem:[%s2744 + $0x58] sm:$0xff]
      %v2757 = vld [vmem:[%s2744 + $0x60] sm:$0xff]
      %v2758 = vld [vmem:[%s2744 + $0x68] sm:$0xff]
      %v2759 = vld [vmem:[%s2744 + $0x70] sm:$0xff]
      %v2760 = vld [vmem:[%s2744 + $0x78] sm:$0xff]
      %2761 = vmatprep.subr.mxu0 0.0
      %2762 = vmatpush1.msra.mxu0 %v2745
      %2763 = vmatprep.subr.mxu0 0.0
      %2764 = vmatpush1.msra.mxu0 %v2746
      %2765 = vmatprep.subr.mxu0 0.0
      %2766 = vmatpush1.msra.mxu0 %v2747
      %2767 = vmatprep.subr.mxu0 0.0
      %2768 = vmatpush1.msra.mxu0 %v2748
      %2769 = vmatprep.subr.mxu0 0.0
      %2770 = vmatpush1.msra.mxu0 %v2749
      %2771 = vmatprep.subr.mxu0 0.0
      %2772 = vmatpush1.msra.mxu0 %v2750
      %2773 = vmatprep.subr.mxu0 0.0
      %2774 = vmatpush1.msra.mxu0 %v2751
      %2775 = vmatprep.subr.mxu0 0.0
      %2776 = vmatpush1.msra.mxu0 %v2752
      %2777 = vmatprep.subr.mxu0 0.0
      %2778 = vmatpush1.msra.mxu0 %v2753
      %2779 = vmatprep.subr.mxu0 0.0
      %2780 = vmatpush1.msra.mxu0 %v2754
      %2781 = vmatprep.subr.mxu0 0.0
      %2782 = vmatpush1.msra.mxu0 %v2755
      %2783 = vmatprep.subr.mxu0 0.0
      %2784 = vmatpush1.msra.mxu0 %v2756
      %2785 = vmatprep.subr.mxu0 0.0
      %2786 = vmatpush1.msra.mxu0 %v2757
      %2787 = vmatprep.subr.mxu0 0.0
      %2788 = vmatpush1.msra.mxu0 %v2758
      %2789 = vmatprep.subr.mxu0 0.0
      %2790 = vmatpush1.msra.mxu0 %v2759
      %2791 = vmatprep.subr.mxu0 0.0
      %2792 = vmatpush1.msra.mxu0 %v2760
      %2793 = vmatprep.subr.mxu0 0.0
      %2794 = vmatpush1.msra.mxu0 0.0
      %2795 = vmatprep.subr.mxu0 0.0
      %2796 = vmatpush1.msra.mxu0 0.0
      %2797 = vmatprep.subr.mxu0 0.0
      %2798 = vmatpush1.msra.mxu0 0.0
      %2799 = vmatprep.subr.mxu0 0.0
      %2800 = vmatpush1.msra.mxu0 0.0
      %2801 = vmatprep.subr.mxu0 0.0
      %2802 = vmatpush1.msra.mxu0 0.0
      %2803 = vmatprep.subr.mxu0 0.0
      %2804 = vmatpush1.msra.mxu0 0.0
      %2805 = vmatprep.subr.mxu0 0.0
      %2806 = vmatpush1.msra.mxu0 0.0
      %2807 = vmatprep.subr.mxu0 0.0
      %2808 = vmatpush1.msra.mxu0 0.0
      %2809 = vmatprep.subr.mxu0 0.0
      %2810 = vmatpush1.msra.mxu0 0.0
      %2811 = vmatprep.subr.mxu0 0.0
      %2812 = vmatpush1.msra.mxu0 0.0
      %2813 = vmatprep.subr.mxu0 0.0
      %2814 = vmatpush1.msra.mxu0 0.0
      %2815 = vmatprep.subr.mxu0 0.0
      %2816 = vmatpush1.msra.mxu0 0.0
      %2817 = vmatprep.subr.mxu0 0.0
      %2818 = vmatpush1.msra.mxu0 0.0
      %2819 = vmatprep.subr.mxu0 0.0
      %2820 = vmatpush1.msra.mxu0 0.0
      %2821 = vmatprep.subr.mxu0 0.0
      %2822 = vmatpush1.msra.mxu0 0.0
      %2823 = vmatprep.subr.mxu0 0.0
      %2824 = vmatpush1.msra.mxu0 0.0
      %2825 = vmatprep.mubr.f32.mxu0 0.0
      %2826 = vmatmul.mubr.f32.gmra.mrb[0].mxu0 %v2741
      %v2827 = vpop.f32.mrb[0].mxu0
      %v2828 = vadd.f32 0.0, %v2827
      %v2829 = vpop.f32.mrb[0].mxu0
      %2830 = vmatprep.mubr.f32.mxu0 0.0
      %2831 = vmatmul.mubr.f32.gmra.mrb[0].mxu0 %v2742
      %v2832 = vpop.f32.mrb[0].mxu0
      %v2833 = vadd.f32 0.0, %v2832
      %v2834 = vpop.f32.mrb[0].mxu0
      %2835 = vmatprep.mubr.f32.mxu0 0.0
      %2836 = vmatmul.mubr.f32.gmra.mrb[0].mxu0 %v2743
      %v2837 = vpop.f32.mrb[0].mxu0
      %v2838 = vadd.f32 0.0, %v2837
      %v2839 = vpop.f32.mrb[0].mxu0
      %2840 = vdwg.mxu0
      %v2841 = vadd.f32 %v2738, %v2828
      %v2842 = vadd.f32 %v2739, %v2833
      %v2843 = vadd.f32 %v2740, %v2838
      %v2844 = vld [vmem:[%s166 + $0xd] sm:$0xff]
      %v2845 = vld [vmem:[%s166 + $0x15] sm:$0xff]
      %v2846 = vld [vmem:[%s166 + $0x1d] sm:$0xf]
      %s2847 = scalar_lea.vmem %s1, 3328
      %v2848 = vld [vmem:[%s2847] sm:$0xff]
      %v2849 = vld [vmem:[%s2847 + $0x8] sm:$0xff]
      %v2850 = vld [vmem:[%s2847 + $0x10] sm:$0xff]
      %v2851 = vld [vmem:[%s2847 + $0x18] sm:$0xff]
      %v2852 = vld [vmem:[%s2847 + $0x20] sm:$0xff]
      %v2853 = vld [vmem:[%s2847 + $0x28] sm:$0xff]
      %v2854 = vld [vmem:[%s2847 + $0x30] sm:$0xff]
      %v2855 = vld [vmem:[%s2847 + $0x38] sm:$0xff]
      %v2856 = vld [vmem:[%s2847 + $0x40] sm:$0xff]
      %v2857 = vld [vmem:[%s2847 + $0x48] sm:$0xff]
      %v2858 = vld [vmem:[%s2847 + $0x50] sm:$0xff]
      %v2859 = vld [vmem:[%s2847 + $0x58] sm:$0xff]
      %v2860 = vld [vmem:[%s2847 + $0x60] sm:$0xff]
      %v2861 = vld [vmem:[%s2847 + $0x68] sm:$0xff]
      %v2862 = vld [vmem:[%s2847 + $0x70] sm:$0xff]
      %v2863 = vld [vmem:[%s2847 + $0x78] sm:$0xff]
      %2864 = vmatprep.subr.mxu0 0.0
      %2865 = vmatpush1.msra.mxu0 %v2848
      %2866 = vmatprep.subr.mxu0 0.0
      %2867 = vmatpush1.msra.mxu0 %v2849
      %2868 = vmatprep.subr.mxu0 0.0
      %2869 = vmatpush1.msra.mxu0 %v2850
      %2870 = vmatprep.subr.mxu0 0.0
      %2871 = vmatpush1.msra.mxu0 %v2851
      %2872 = vmatprep.subr.mxu0 0.0
      %2873 = vmatpush1.msra.mxu0 %v2852
      %2874 = vmatprep.subr.mxu0 0.0
      %2875 = vmatpush1.msra.mxu0 %v2853
      %2876 = vmatprep.subr.mxu0 0.0
      %2877 = vmatpush1.msra.mxu0 %v2854
      %2878 = vmatprep.subr.mxu0 0.0
      %2879 = vmatpush1.msra.mxu0 %v2855
      %2880 = vmatprep.subr.mxu0 0.0
      %2881 = vmatpush1.msra.mxu0 %v2856
      %2882 = vmatprep.subr.mxu0 0.0
      %2883 = vmatpush1.msra.mxu0 %v2857
      %2884 = vmatprep.subr.mxu0 0.0
      %2885 = vmatpush1.msra.mxu0 %v2858
      %2886 = vmatprep.subr.mxu0 0.0
      %2887 = vmatpush1.msra.mxu0 %v2859
      %2888 = vmatprep.subr.mxu0 0.0
      %2889 = vmatpush1.msra.mxu0 %v2860
      %2890 = vmatprep.subr.mxu0 0.0
      %2891 = vmatpush1.msra.mxu0 %v2861
      %2892 = vmatprep.subr.mxu0 0.0
      %2893 = vmatpush1.msra.mxu0 %v2862
      %2894 = vmatprep.subr.mxu0 0.0
      %2895 = vmatpush1.msra.mxu0 %v2863
      %2896 = vmatprep.subr.mxu0 0.0
      %2897 = vmatpush1.msra.mxu0 0.0
      %2898 = vmatprep.subr.mxu0 0.0
      %2899 = vmatpush1.msra.mxu0 0.0
      %2900 = vmatprep.subr.mxu0 0.0
      %2901 = vmatpush1.msra.mxu0 0.0
      %2902 = vmatprep.subr.mxu0 0.0
      %2903 = vmatpush1.msra.mxu0 0.0
      %2904 = vmatprep.subr.mxu0 0.0
      %2905 = vmatpush1.msra.mxu0 0.0
      %2906 = vmatprep.subr.mxu0 0.0
      %2907 = vmatpush1.msra.mxu0 0.0
      %2908 = vmatprep.subr.mxu0 0.0
      %2909 = vmatpush1.msra.mxu0 0.0
      %2910 = vmatprep.subr.mxu0 0.0
      %2911 = vmatpush1.msra.mxu0 0.0
      %2912 = vmatprep.subr.mxu0 0.0
      %2913 = vmatpush1.msra.mxu0 0.0
      %2914 = vmatprep.subr.mxu0 0.0
      %2915 = vmatpush1.msra.mxu0 0.0
      %2916 = vmatprep.subr.mxu0 0.0
      %2917 = vmatpush1.msra.mxu0 0.0
      %2918 = vmatprep.subr.mxu0 0.0
      %2919 = vmatpush1.msra.mxu0 0.0
      %2920 = vmatprep.subr.mxu0 0.0
      %2921 = vmatpush1.msra.mxu0 0.0
      %2922 = vmatprep.subr.mxu0 0.0
      %2923 = vmatpush1.msra.mxu0 0.0
      %2924 = vmatprep.subr.mxu0 0.0
      %2925 = vmatpush1.msra.mxu0 0.0
      %2926 = vmatprep.subr.mxu0 0.0
      %2927 = vmatpush1.msra.mxu0 0.0
      %2928 = vmatprep.mubr.f32.mxu0 0.0
      %2929 = vmatmul.mubr.f32.gmra.mrb[0].mxu0 %v2844
      %v2930 = vpop.f32.mrb[0].mxu0
      %v2931 = vadd.f32 0.0, %v2930
      %v2932 = vpop.f32.mrb[0].mxu0
      %2933 = vmatprep.mubr.f32.mxu0 0.0
      %2934 = vmatmul.mubr.f32.gmra.mrb[0].mxu0 %v2845
      %v2935 = vpop.f32.mrb[0].mxu0
      %v2936 = vadd.f32 0.0, %v2935
      %v2937 = vpop.f32.mrb[0].mxu0
      %2938 = vmatprep.mubr.f32.mxu0 0.0
      %2939 = vmatmul.mubr.f32.gmra.mrb[0].mxu0 %v2846
      %v2940 = vpop.f32.mrb[0].mxu0
      %v2941 = vadd.f32 0.0, %v2940
      %v2942 = vpop.f32.mrb[0].mxu0
      %2943 = vdwg.mxu0
      %v2944 = vadd.f32 %v2841, %v2931
      %v2945 = vadd.f32 %v2842, %v2936
      %v2946 = vadd.f32 %v2843, %v2941
      %v2947 = vld [vmem:[%s191 + $0xd] sm:$0xff]
      %v2948 = vld [vmem:[%s191 + $0x15] sm:$0xff]
      %v2949 = vld [vmem:[%s191 + $0x1d] sm:$0xf]
      %s2950 = scalar_lea.vmem %s1, 3456
      %v2951 = vld [vmem:[%s2950] sm:$0xff]
      %v2952 = vld [vmem:[%s2950 + $0x8] sm:$0xff]
      %v2953 = vld [vmem:[%s2950 + $0x10] sm:$0xff]
      %v2954 = vld [vmem:[%s2950 + $0x18] sm:$0xff]
      %v2955 = vld [vmem:[%s2950 + $0x20] sm:$0xff]
      %v2956 = vld [vmem:[%s2950 + $0x28] sm:$0xff]
      %v2957 = vld [vmem:[%s2950 + $0x30] sm:$0xff]
      %v2958 = vld [vmem:[%s2950 + $0x38] sm:$0xff]
      %v2959 = vld [vmem:[%s2950 + $0x40] sm:$0xff]
      %v2960 = vld [vmem:[%s2950 + $0x48] sm:$0xff]
      %v2961 = vld [vmem:[%s2950 + $0x50] sm:$0xff]
      %v2962 = vld [vmem:[%s2950 + $0x58] sm:$0xff]
      %v2963 = vld [vmem:[%s2950 + $0x60] sm:$0xff]
      %v2964 = vld [vmem:[%s2950 + $0x68] sm:$0xff]
      %v2965 = vld [vmem:[%s2950 + $0x70] sm:$0xff]
      %v2966 = vld [vmem:[%s2950 + $0x78] sm:$0xff]
      %2967 = vmatprep.subr.mxu0 0.0
      %2968 = vmatpush1.msra.mxu0 %v2951
      %2969 = vmatprep.subr.mxu0 0.0
      %2970 = vmatpush1.msra.mxu0 %v2952
      %2971 = vmatprep.subr.mxu0 0.0
      %2972 = vmatpush1.msra.mxu0 %v2953
      %2973 = vmatprep.subr.mxu0 0.0
      %2974 = vmatpush1.msra.mxu0 %v2954
      %2975 = vmatprep.subr.mxu0 0.0
      %2976 = vmatpush1.msra.mxu0 %v2955
      %2977 = vmatprep.subr.mxu0 0.0
      %2978 = vmatpush1.msra.mxu0 %v2956
      %2979 = vmatprep.subr.mxu0 0.0
      %2980 = vmatpush1.msra.mxu0 %v2957
      %2981 = vmatprep.subr.mxu0 0.0
      %2982 = vmatpush1.msra.mxu0 %v2958
      %2983 = vmatprep.subr.mxu0 0.0
      %2984 = vmatpush1.msra.mxu0 %v2959
      %2985 = vmatprep.subr.mxu0 0.0
      %2986 = vmatpush1.msra.mxu0 %v2960
      %2987 = vmatprep.subr.mxu0 0.0
      %2988 = vmatpush1.msra.mxu0 %v2961
      %2989 = vmatprep.subr.mxu0 0.0
      %2990 = vmatpush1.msra.mxu0 %v2962
      %2991 = vmatprep.subr.mxu0 0.0
      %2992 = vmatpush1.msra.mxu0 %v2963
      %2993 = vmatprep.subr.mxu0 0.0
      %2994 = vmatpush1.msra.mxu0 %v2964
      %2995 = vmatprep.subr.mxu0 0.0
      %2996 = vmatpush1.msra.mxu0 %v2965
      %2997 = vmatprep.subr.mxu0 0.0
      %2998 = vmatpush1.msra.mxu0 %v2966
      %2999 = vmatprep.subr.mxu0 0.0
      %3000 = vmatpush1.msra.mxu0 0.0
      %3001 = vmatprep.subr.mxu0 0.0
      %3002 = vmatpush1.msra.mxu0 0.0
      %3003 = vmatprep.subr.mxu0 0.0
      %3004 = vmatpush1.msra.mxu0 0.0
      %3005 = vmatprep.subr.mxu0 0.0
      %3006 = vmatpush1.msra.mxu0 0.0
      %3007 = vmatprep.subr.mxu0 0.0
      %3008 = vmatpush1.msra.mxu0 0.0
      %3009 = vmatprep.subr.mxu0 0.0
      %3010 = vmatpush1.msra.mxu0 0.0
      %3011 = vmatprep.subr.mxu0 0.0
      %3012 = vmatpush1.msra.mxu0 0.0
      %3013 = vmatprep.subr.mxu0 0.0
      %3014 = vmatpush1.msra.mxu0 0.0
      %3015 = vmatprep.subr.mxu0 0.0
      %3016 = vmatpush1.msra.mxu0 0.0
      %3017 = vmatprep.subr.mxu0 0.0
      %3018 = vmatpush1.msra.mxu0 0.0
      %3019 = vmatprep.subr.mxu0 0.0
      %3020 = vmatpush1.msra.mxu0 0.0
      %3021 = vmatprep.subr.mxu0 0.0
      %3022 = vmatpush1.msra.mxu0 0.0
      %3023 = vmatprep.subr.mxu0 0.0
      %3024 = vmatpush1.msra.mxu0 0.0
      %3025 = vmatprep.subr.mxu0 0.0
      %3026 = vmatpush1.msra.mxu0 0.0
      %3027 = vmatprep.subr.mxu0 0.0
      %3028 = vmatpush1.msra.mxu0 0.0
      %3029 = vmatprep.subr.mxu0 0.0
      %3030 = vmatpush1.msra.mxu0 0.0
      %3031 = vmatprep.mubr.f32.mxu0 0.0
      %3032 = vmatmul.mubr.f32.gmra.mrb[0].mxu0 %v2947
      %v3033 = vpop.f32.mrb[0].mxu0
      %v3034 = vadd.f32 0.0, %v3033
      %v3035 = vpop.f32.mrb[0].mxu0
      %3036 = vmatprep.mubr.f32.mxu0 0.0
      %3037 = vmatmul.mubr.f32.gmra.mrb[0].mxu0 %v2948
      %v3038 = vpop.f32.mrb[0].mxu0
      %v3039 = vadd.f32 0.0, %v3038
      %v3040 = vpop.f32.mrb[0].mxu0
      %3041 = vmatprep.mubr.f32.mxu0 0.0
      %3042 = vmatmul.mubr.f32.gmra.mrb[0].mxu0 %v2949
      %v3043 = vpop.f32.mrb[0].mxu0
      %v3044 = vadd.f32 0.0, %v3043
      %v3045 = vpop.f32.mrb[0].mxu0
      %3046 = vdwg.mxu0
      %v3047 = vadd.f32 %v2944, %v3034
      %v3048 = vadd.f32 %v2945, %v3039
      %v3049 = vadd.f32 %v2946, %v3044
      %v3050 = vld [vmem:[%s166 + $0xe] sm:$0xff]
      %v3051 = vld [vmem:[%s166 + $0x16] sm:$0xff]
      %v3052 = vld [vmem:[%s166 + $0x1e] sm:$0xf]
      %s3053 = scalar_lea.vmem %s1, 3584
      %v3054 = vld [vmem:[%s3053] sm:$0xff]
      %v3055 = vld [vmem:[%s3053 + $0x8] sm:$0xff]
      %v3056 = vld [vmem:[%s3053 + $0x10] sm:$0xff]
      %v3057 = vld [vmem:[%s3053 + $0x18] sm:$0xff]
      %v3058 = vld [vmem:[%s3053 + $0x20] sm:$0xff]
      %v3059 = vld [vmem:[%s3053 + $0x28] sm:$0xff]
      %v3060 = vld [vmem:[%s3053 + $0x30] sm:$0xff]
      %v3061 = vld [vmem:[%s3053 + $0x38] sm:$0xff]
      %v3062 = vld [vmem:[%s3053 + $0x40] sm:$0xff]
      %v3063 = vld [vmem:[%s3053 + $0x48] sm:$0xff]
      %v3064 = vld [vmem:[%s3053 + $0x50] sm:$0xff]
      %v3065 = vld [vmem:[%s3053 + $0x58] sm:$0xff]
      %v3066 = vld [vmem:[%s3053 + $0x60] sm:$0xff]
      %v3067 = vld [vmem:[%s3053 + $0x68] sm:$0xff]
      %v3068 = vld [vmem:[%s3053 + $0x70] sm:$0xff]
      %v3069 = vld [vmem:[%s3053 + $0x78] sm:$0xff]
      %3070 = vmatprep.subr.mxu0 0.0
      %3071 = vmatpush1.msra.mxu0 %v3054
      %3072 = vmatprep.subr.mxu0 0.0
      %3073 = vmatpush1.msra.mxu0 %v3055
      %3074 = vmatprep.subr.mxu0 0.0
      %3075 = vmatpush1.msra.mxu0 %v3056
      %3076 = vmatprep.subr.mxu0 0.0
      %3077 = vmatpush1.msra.mxu0 %v3057
      %3078 = vmatprep.subr.mxu0 0.0
      %3079 = vmatpush1.msra.mxu0 %v3058
      %3080 = vmatprep.subr.mxu0 0.0
      %3081 = vmatpush1.msra.mxu0 %v3059
      %3082 = vmatprep.subr.mxu0 0.0
      %3083 = vmatpush1.msra.mxu0 %v3060
      %3084 = vmatprep.subr.mxu0 0.0
      %3085 = vmatpush1.msra.mxu0 %v3061
      %3086 = vmatprep.subr.mxu0 0.0
      %3087 = vmatpush1.msra.mxu0 %v3062
      %3088 = vmatprep.subr.mxu0 0.0
      %3089 = vmatpush1.msra.mxu0 %v3063
      %3090 = vmatprep.subr.mxu0 0.0
      %3091 = vmatpush1.msra.mxu0 %v3064
      %3092 = vmatprep.subr.mxu0 0.0
      %3093 = vmatpush1.msra.mxu0 %v3065
      %3094 = vmatprep.subr.mxu0 0.0
      %3095 = vmatpush1.msra.mxu0 %v3066
      %3096 = vmatprep.subr.mxu0 0.0
      %3097 = vmatpush1.msra.mxu0 %v3067
      %3098 = vmatprep.subr.mxu0 0.0
      %3099 = vmatpush1.msra.mxu0 %v3068
      %3100 = vmatprep.subr.mxu0 0.0
      %3101 = vmatpush1.msra.mxu0 %v3069
      %3102 = vmatprep.subr.mxu0 0.0
      %3103 = vmatpush1.msra.mxu0 0.0
      %3104 = vmatprep.subr.mxu0 0.0
      %3105 = vmatpush1.msra.mxu0 0.0
      %3106 = vmatprep.subr.mxu0 0.0
      %3107 = vmatpush1.msra.mxu0 0.0
      %3108 = vmatprep.subr.mxu0 0.0
      %3109 = vmatpush1.msra.mxu0 0.0
      %3110 = vmatprep.subr.mxu0 0.0
      %3111 = vmatpush1.msra.mxu0 0.0
      %3112 = vmatprep.subr.mxu0 0.0
      %3113 = vmatpush1.msra.mxu0 0.0
      %3114 = vmatprep.subr.mxu0 0.0
      %3115 = vmatpush1.msra.mxu0 0.0
      %3116 = vmatprep.subr.mxu0 0.0
      %3117 = vmatpush1.msra.mxu0 0.0
      %3118 = vmatprep.subr.mxu0 0.0
      %3119 = vmatpush1.msra.mxu0 0.0
      %3120 = vmatprep.subr.mxu0 0.0
      %3121 = vmatpush1.msra.mxu0 0.0
      %3122 = vmatprep.subr.mxu0 0.0
      %3123 = vmatpush1.msra.mxu0 0.0
      %3124 = vmatprep.subr.mxu0 0.0
      %3125 = vmatpush1.msra.mxu0 0.0
      %3126 = vmatprep.subr.mxu0 0.0
      %3127 = vmatpush1.msra.mxu0 0.0
      %3128 = vmatprep.subr.mxu0 0.0
      %3129 = vmatpush1.msra.mxu0 0.0
      %3130 = vmatprep.subr.mxu0 0.0
      %3131 = vmatpush1.msra.mxu0 0.0
      %3132 = vmatprep.subr.mxu0 0.0
      %3133 = vmatpush1.msra.mxu0 0.0
      %3134 = vmatprep.mubr.f32.mxu0 0.0
      %3135 = vmatmul.mubr.f32.gmra.mrb[0].mxu0 %v3050
      %v3136 = vpop.f32.mrb[0].mxu0
      %v3137 = vadd.f32 0.0, %v3136
      %v3138 = vpop.f32.mrb[0].mxu0
      %3139 = vmatprep.mubr.f32.mxu0 0.0
      %3140 = vmatmul.mubr.f32.gmra.mrb[0].mxu0 %v3051
      %v3141 = vpop.f32.mrb[0].mxu0
      %v3142 = vadd.f32 0.0, %v3141
      %v3143 = vpop.f32.mrb[0].mxu0
      %3144 = vmatprep.mubr.f32.mxu0 0.0
      %3145 = vmatmul.mubr.f32.gmra.mrb[0].mxu0 %v3052
      %v3146 = vpop.f32.mrb[0].mxu0
      %v3147 = vadd.f32 0.0, %v3146
      %v3148 = vpop.f32.mrb[0].mxu0
      %3149 = vdwg.mxu0
      %v3150 = vadd.f32 %v3047, %v3137
      %v3151 = vadd.f32 %v3048, %v3142
      %v3152 = vadd.f32 %v3049, %v3147
      %v3153 = vld [vmem:[%s191 + $0xe] sm:$0xff]
      %v3154 = vld [vmem:[%s191 + $0x16] sm:$0xff]
      %v3155 = vld [vmem:[%s191 + $0x1e] sm:$0xf]
      %s3156 = scalar_lea.vmem %s1, 3712
      %v3157 = vld [vmem:[%s3156] sm:$0xff]
      %v3158 = vld [vmem:[%s3156 + $0x8] sm:$0xff]
      %v3159 = vld [vmem:[%s3156 + $0x10] sm:$0xff]
      %v3160 = vld [vmem:[%s3156 + $0x18] sm:$0xff]
      %v3161 = vld [vmem:[%s3156 + $0x20] sm:$0xff]
      %v3162 = vld [vmem:[%s3156 + $0x28] sm:$0xff]
      %v3163 = vld [vmem:[%s3156 + $0x30] sm:$0xff]
      %v3164 = vld [vmem:[%s3156 + $0x38] sm:$0xff]
      %v3165 = vld [vmem:[%s3156 + $0x40] sm:$0xff]
      %v3166 = vld [vmem:[%s3156 + $0x48] sm:$0xff]
      %v3167 = vld [vmem:[%s3156 + $0x50] sm:$0xff]
      %v3168 = vld [vmem:[%s3156 + $0x58] sm:$0xff]
      %v3169 = vld [vmem:[%s3156 + $0x60] sm:$0xff]
      %v3170 = vld [vmem:[%s3156 + $0x68] sm:$0xff]
      %v3171 = vld [vmem:[%s3156 + $0x70] sm:$0xff]
      %v3172 = vld [vmem:[%s3156 + $0x78] sm:$0xff]
      %3173 = vmatprep.subr.mxu0 0.0
      %3174 = vmatpush1.msra.mxu0 %v3157
      %3175 = vmatprep.subr.mxu0 0.0
      %3176 = vmatpush1.msra.mxu0 %v3158
      %3177 = vmatprep.subr.mxu0 0.0
      %3178 = vmatpush1.msra.mxu0 %v3159
      %3179 = vmatprep.subr.mxu0 0.0
      %3180 = vmatpush1.msra.mxu0 %v3160
      %3181 = vmatprep.subr.mxu0 0.0
      %3182 = vmatpush1.msra.mxu0 %v3161
      %3183 = vmatprep.subr.mxu0 0.0
      %3184 = vmatpush1.msra.mxu0 %v3162
      %3185 = vmatprep.subr.mxu0 0.0
      %3186 = vmatpush1.msra.mxu0 %v3163
      %3187 = vmatprep.subr.mxu0 0.0
      %3188 = vmatpush1.msra.mxu0 %v3164
      %3189 = vmatprep.subr.mxu0 0.0
      %3190 = vmatpush1.msra.mxu0 %v3165
      %3191 = vmatprep.subr.mxu0 0.0
      %3192 = vmatpush1.msra.mxu0 %v3166
      %3193 = vmatprep.subr.mxu0 0.0
      %3194 = vmatpush1.msra.mxu0 %v3167
      %3195 = vmatprep.subr.mxu0 0.0
      %3196 = vmatpush1.msra.mxu0 %v3168
      %3197 = vmatprep.subr.mxu0 0.0
      %3198 = vmatpush1.msra.mxu0 %v3169
      %3199 = vmatprep.subr.mxu0 0.0
      %3200 = vmatpush1.msra.mxu0 %v3170
      %3201 = vmatprep.subr.mxu0 0.0
      %3202 = vmatpush1.msra.mxu0 %v3171
      %3203 = vmatprep.subr.mxu0 0.0
      %3204 = vmatpush1.msra.mxu0 %v3172
      %3205 = vmatprep.subr.mxu0 0.0
      %3206 = vmatpush1.msra.mxu0 0.0
      %3207 = vmatprep.subr.mxu0 0.0
      %3208 = vmatpush1.msra.mxu0 0.0
      %3209 = vmatprep.subr.mxu0 0.0
      %3210 = vmatpush1.msra.mxu0 0.0
      %3211 = vmatprep.subr.mxu0 0.0
      %3212 = vmatpush1.msra.mxu0 0.0
      %3213 = vmatprep.subr.mxu0 0.0
      %3214 = vmatpush1.msra.mxu0 0.0
      %3215 = vmatprep.subr.mxu0 0.0
      %3216 = vmatpush1.msra.mxu0 0.0
      %3217 = vmatprep.subr.mxu0 0.0
      %3218 = vmatpush1.msra.mxu0 0.0
      %3219 = vmatprep.subr.mxu0 0.0
      %3220 = vmatpush1.msra.mxu0 0.0
      %3221 = vmatprep.subr.mxu0 0.0
      %3222 = vmatpush1.msra.mxu0 0.0
      %3223 = vmatprep.subr.mxu0 0.0
      %3224 = vmatpush1.msra.mxu0 0.0
      %3225 = vmatprep.subr.mxu0 0.0
      %3226 = vmatpush1.msra.mxu0 0.0
      %3227 = vmatprep.subr.mxu0 0.0
      %3228 = vmatpush1.msra.mxu0 0.0
      %3229 = vmatprep.subr.mxu0 0.0
      %3230 = vmatpush1.msra.mxu0 0.0
      %3231 = vmatprep.subr.mxu0 0.0
      %3232 = vmatpush1.msra.mxu0 0.0
      %3233 = vmatprep.subr.mxu0 0.0
      %3234 = vmatpush1.msra.mxu0 0.0
      %3235 = vmatprep.subr.mxu0 0.0
      %3236 = vmatpush1.msra.mxu0 0.0
      %3237 = vmatprep.mubr.f32.mxu0 0.0
      %3238 = vmatmul.mubr.f32.gmra.mrb[0].mxu0 %v3153
      %v3239 = vpop.f32.mrb[0].mxu0
      %v3240 = vadd.f32 0.0, %v3239
      %v3241 = vpop.f32.mrb[0].mxu0
      %3242 = vmatprep.mubr.f32.mxu0 0.0
      %3243 = vmatmul.mubr.f32.gmra.mrb[0].mxu0 %v3154
      %v3244 = vpop.f32.mrb[0].mxu0
      %v3245 = vadd.f32 0.0, %v3244
      %v3246 = vpop.f32.mrb[0].mxu0
      %3247 = vmatprep.mubr.f32.mxu0 0.0
      %3248 = vmatmul.mubr.f32.gmra.mrb[0].mxu0 %v3155
      %v3249 = vpop.f32.mrb[0].mxu0
      %v3250 = vadd.f32 0.0, %v3249
      %v3251 = vpop.f32.mrb[0].mxu0
      %3252 = vdwg.mxu0
      %v3253 = vadd.f32 %v3150, %v3240
      %v3254 = vadd.f32 %v3151, %v3245
      %v3255 = vadd.f32 %v3152, %v3250
      %v3256 = vld [vmem:[%s166 + $0xf] sm:$0xff]
      %v3257 = vld [vmem:[%s166 + $0x17] sm:$0xff]
      %v3258 = vld [vmem:[%s166 + $0x1f] sm:$0xf]
      %s3259 = scalar_lea.vmem %s1, 3840
      %v3260 = vld [vmem:[%s3259] sm:$0xff]
      %v3261 = vld [vmem:[%s3259 + $0x8] sm:$0xff]
      %v3262 = vld [vmem:[%s3259 + $0x10] sm:$0xff]
      %v3263 = vld [vmem:[%s3259 + $0x18] sm:$0xff]
      %v3264 = vld [vmem:[%s3259 + $0x20] sm:$0xff]
      %v3265 = vld [vmem:[%s3259 + $0x28] sm:$0xff]
      %v3266 = vld [vmem:[%s3259 + $0x30] sm:$0xff]
      %v3267 = vld [vmem:[%s3259 + $0x38] sm:$0xff]
      %v3268 = vld [vmem:[%s3259 + $0x40] sm:$0xff]
      %v3269 = vld [vmem:[%s3259 + $0x48] sm:$0xff]
      %v3270 = vld [vmem:[%s3259 + $0x50] sm:$0xff]
      %v3271 = vld [vmem:[%s3259 + $0x58] sm:$0xff]
      %v3272 = vld [vmem:[%s3259 + $0x60] sm:$0xff]
      %v3273 = vld [vmem:[%s3259 + $0x68] sm:$0xff]
      %v3274 = vld [vmem:[%s3259 + $0x70] sm:$0xff]
      %v3275 = vld [vmem:[%s3259 + $0x78] sm:$0xff]
      %3276 = vmatprep.subr.mxu0 0.0
      %3277 = vmatpush1.msra.mxu0 %v3260
      %3278 = vmatprep.subr.mxu0 0.0
      %3279 = vmatpush1.msra.mxu0 %v3261
      %3280 = vmatprep.subr.mxu0 0.0
      %3281 = vmatpush1.msra.mxu0 %v3262
      %3282 = vmatprep.subr.mxu0 0.0
      %3283 = vmatpush1.msra.mxu0 %v3263
      %3284 = vmatprep.subr.mxu0 0.0
      %3285 = vmatpush1.msra.mxu0 %v3264
      %3286 = vmatprep.subr.mxu0 0.0
      %3287 = vmatpush1.msra.mxu0 %v3265
      %3288 = vmatprep.subr.mxu0 0.0
      %3289 = vmatpush1.msra.mxu0 %v3266
      %3290 = vmatprep.subr.mxu0 0.0
      %3291 = vmatpush1.msra.mxu0 %v3267
      %3292 = vmatprep.subr.mxu0 0.0
      %3293 = vmatpush1.msra.mxu0 %v3268
      %3294 = vmatprep.subr.mxu0 0.0
      %3295 = vmatpush1.msra.mxu0 %v3269
      %3296 = vmatprep.subr.mxu0 0.0
      %3297 = vmatpush1.msra.mxu0 %v3270
      %3298 = vmatprep.subr.mxu0 0.0
      %3299 = vmatpush1.msra.mxu0 %v3271
      %3300 = vmatprep.subr.mxu0 0.0
      %3301 = vmatpush1.msra.mxu0 %v3272
      %3302 = vmatprep.subr.mxu0 0.0
      %3303 = vmatpush1.msra.mxu0 %v3273
      %3304 = vmatprep.subr.mxu0 0.0
      %3305 = vmatpush1.msra.mxu0 %v3274
      %3306 = vmatprep.subr.mxu0 0.0
      %3307 = vmatpush1.msra.mxu0 %v3275
      %3308 = vmatprep.subr.mxu0 0.0
      %3309 = vmatpush1.msra.mxu0 0.0
      %3310 = vmatprep.subr.mxu0 0.0
      %3311 = vmatpush1.msra.mxu0 0.0
      %3312 = vmatprep.subr.mxu0 0.0
      %3313 = vmatpush1.msra.mxu0 0.0
      %3314 = vmatprep.subr.mxu0 0.0
      %3315 = vmatpush1.msra.mxu0 0.0
      %3316 = vmatprep.subr.mxu0 0.0
      %3317 = vmatpush1.msra.mxu0 0.0
      %3318 = vmatprep.subr.mxu0 0.0
      %3319 = vmatpush1.msra.mxu0 0.0
      %3320 = vmatprep.subr.mxu0 0.0
      %3321 = vmatpush1.msra.mxu0 0.0
      %3322 = vmatprep.subr.mxu0 0.0
      %3323 = vmatpush1.msra.mxu0 0.0
      %3324 = vmatprep.subr.mxu0 0.0
      %3325 = vmatpush1.msra.mxu0 0.0
      %3326 = vmatprep.subr.mxu0 0.0
      %3327 = vmatpush1.msra.mxu0 0.0
      %3328 = vmatprep.subr.mxu0 0.0
      %3329 = vmatpush1.msra.mxu0 0.0
      %3330 = vmatprep.subr.mxu0 0.0
      %3331 = vmatpush1.msra.mxu0 0.0
      %3332 = vmatprep.subr.mxu0 0.0
      %3333 = vmatpush1.msra.mxu0 0.0
      %3334 = vmatprep.subr.mxu0 0.0
      %3335 = vmatpush1.msra.mxu0 0.0
      %3336 = vmatprep.subr.mxu0 0.0
      %3337 = vmatpush1.msra.mxu0 0.0
      %3338 = vmatprep.subr.mxu0 0.0
      %3339 = vmatpush1.msra.mxu0 0.0
      %3340 = vmatprep.mubr.f32.mxu0 0.0
      %3341 = vmatmul.mubr.f32.gmra.mrb[0].mxu0 %v3256
      %v3342 = vpop.f32.mrb[0].mxu0
      %v3343 = vadd.f32 0.0, %v3342
      %v3344 = vpop.f32.mrb[0].mxu0
      %3345 = vmatprep.mubr.f32.mxu0 0.0
      %3346 = vmatmul.mubr.f32.gmra.mrb[0].mxu0 %v3257
      %v3347 = vpop.f32.mrb[0].mxu0
      %v3348 = vadd.f32 0.0, %v3347
      %v3349 = vpop.f32.mrb[0].mxu0
      %3350 = vmatprep.mubr.f32.mxu0 0.0
      %3351 = vmatmul.mubr.f32.gmra.mrb[0].mxu0 %v3258
      %v3352 = vpop.f32.mrb[0].mxu0
      %v3353 = vadd.f32 0.0, %v3352
      %v3354 = vpop.f32.mrb[0].mxu0
      %3355 = vdwg.mxu0
      %v3356 = vadd.f32 %v3253, %v3343
      %v3357 = vadd.f32 %v3254, %v3348
      %v3358 = vadd.f32 %v3255, %v3353
      %v3359 = vld [vmem:[%s191 + $0xf] sm:$0xff]
      %v3360 = vld [vmem:[%s191 + $0x17] sm:$0xff]
      %v3361 = vld [vmem:[%s191 + $0x1f] sm:$0xf]
      %s3362 = scalar_lea.vmem %s1, 3968
      %v3363 = vld [vmem:[%s3362] sm:$0xff]
      %v3364 = vld [vmem:[%s3362 + $0x8] sm:$0xff]
      %v3365 = vld [vmem:[%s3362 + $0x10] sm:$0xff]
      %v3366 = vld [vmem:[%s3362 + $0x18] sm:$0xff]
      %v3367 = vld [vmem:[%s3362 + $0x20] sm:$0xff]
      %v3368 = vld [vmem:[%s3362 + $0x28] sm:$0xff]
      %v3369 = vld [vmem:[%s3362 + $0x30] sm:$0xff]
      %v3370 = vld [vmem:[%s3362 + $0x38] sm:$0xff]
      %v3371 = vld [vmem:[%s3362 + $0x40] sm:$0xff]
      %v3372 = vld [vmem:[%s3362 + $0x48] sm:$0xff]
      %v3373 = vld [vmem:[%s3362 + $0x50] sm:$0xff]
      %v3374 = vld [vmem:[%s3362 + $0x58] sm:$0xff]
      %v3375 = vld [vmem:[%s3362 + $0x60] sm:$0xff]
      %v3376 = vld [vmem:[%s3362 + $0x68] sm:$0xff]
      %v3377 = vld [vmem:[%s3362 + $0x70] sm:$0xff]
      %v3378 = vld [vmem:[%s3362 + $0x78] sm:$0xff]
      %3379 = vmatprep.subr.mxu0 0.0
      %3380 = vmatpush1.msra.mxu0 %v3363
      %3381 = vmatprep.subr.mxu0 0.0
      %3382 = vmatpush1.msra.mxu0 %v3364
      %3383 = vmatprep.subr.mxu0 0.0
      %3384 = vmatpush1.msra.mxu0 %v3365
      %3385 = vmatprep.subr.mxu0 0.0
      %3386 = vmatpush1.msra.mxu0 %v3366
      %3387 = vmatprep.subr.mxu0 0.0
      %3388 = vmatpush1.msra.mxu0 %v3367
      %3389 = vmatprep.subr.mxu0 0.0
      %3390 = vmatpush1.msra.mxu0 %v3368
      %3391 = vmatprep.subr.mxu0 0.0
      %3392 = vmatpush1.msra.mxu0 %v3369
      %3393 = vmatprep.subr.mxu0 0.0
      %3394 = vmatpush1.msra.mxu0 %v3370
      %3395 = vmatprep.subr.mxu0 0.0
      %3396 = vmatpush1.msra.mxu0 %v3371
      %3397 = vmatprep.subr.mxu0 0.0
      %3398 = vmatpush1.msra.mxu0 %v3372
      %3399 = vmatprep.subr.mxu0 0.0
      %3400 = vmatpush1.msra.mxu0 %v3373
      %3401 = vmatprep.subr.mxu0 0.0
      %3402 = vmatpush1.msra.mxu0 %v3374
      %3403 = vmatprep.subr.mxu0 0.0
      %3404 = vmatpush1.msra.mxu0 %v3375
      %3405 = vmatprep.subr.mxu0 0.0
      %3406 = vmatpush1.msra.mxu0 %v3376
      %3407 = vmatprep.subr.mxu0 0.0
      %3408 = vmatpush1.msra.mxu0 %v3377
      %3409 = vmatprep.subr.mxu0 0.0
      %3410 = vmatpush1.msra.mxu0 %v3378
      %3411 = vmatprep.subr.mxu0 0.0
      %3412 = vmatpush1.msra.mxu0 0.0
      %3413 = vmatprep.subr.mxu0 0.0
      %3414 = vmatpush1.msra.mxu0 0.0
      %3415 = vmatprep.subr.mxu0 0.0
      %3416 = vmatpush1.msra.mxu0 0.0
      %3417 = vmatprep.subr.mxu0 0.0
      %3418 = vmatpush1.msra.mxu0 0.0
      %3419 = vmatprep.subr.mxu0 0.0
      %3420 = vmatpush1.msra.mxu0 0.0
      %3421 = vmatprep.subr.mxu0 0.0
      %3422 = vmatpush1.msra.mxu0 0.0
      %3423 = vmatprep.subr.mxu0 0.0
      %3424 = vmatpush1.msra.mxu0 0.0
      %3425 = vmatprep.subr.mxu0 0.0
      %3426 = vmatpush1.msra.mxu0 0.0
      %3427 = vmatprep.subr.mxu0 0.0
      %3428 = vmatpush1.msra.mxu0 0.0
      %3429 = vmatprep.subr.mxu0 0.0
      %3430 = vmatpush1.msra.mxu0 0.0
      %3431 = vmatprep.subr.mxu0 0.0
      %3432 = vmatpush1.msra.mxu0 0.0
      %3433 = vmatprep.subr.mxu0 0.0
      %3434 = vmatpush1.msra.mxu0 0.0
      %3435 = vmatprep.subr.mxu0 0.0
      %3436 = vmatpush1.msra.mxu0 0.0
      %3437 = vmatprep.subr.mxu0 0.0
      %3438 = vmatpush1.msra.mxu0 0.0
      %3439 = vmatprep.subr.mxu0 0.0
      %3440 = vmatpush1.msra.mxu0 0.0
      %3441 = vmatprep.subr.mxu0 0.0
      %3442 = vmatpush1.msra.mxu0 0.0
      %3443 = vmatprep.mubr.f32.mxu0 0.0
      %3444 = vmatmul.mubr.f32.gmra.mrb[0].mxu0 %v3359
      %v3445 = vpop.f32.mrb[0].mxu0
      %v3446 = vadd.f32 0.0, %v3445
      %v3447 = vpop.f32.mrb[0].mxu0
      %3448 = vmatprep.mubr.f32.mxu0 0.0
      %3449 = vmatmul.mubr.f32.gmra.mrb[0].mxu0 %v3360
      %v3450 = vpop.f32.mrb[0].mxu0
      %v3451 = vadd.f32 0.0, %v3450
      %v3452 = vpop.f32.mrb[0].mxu0
      %3453 = vmatprep.mubr.f32.mxu0 0.0
      %3454 = vmatmul.mubr.f32.gmra.mrb[0].mxu0 %v3361
      %v3455 = vpop.f32.mrb[0].mxu0
      %v3456 = vadd.f32 0.0, %v3455
      %v3457 = vpop.f32.mrb[0].mxu0
      %3458 = vdwg.mxu0
      %v3459 = vadd.f32 %v3356, %v3446
      %v3460 = vadd.f32 %v3357, %v3451
      %v3461 = vadd.f32 %v3358, %v3456
      %s3462 = sld [smem:[#allocation2]]
      %v3463 = vstv %s3462
      %v3464 = vadd.f32 %v3459, %v3463
      %v3465 = vadd.f32 %v3460, %v3463
      %v3466 = vadd.f32 %v3461, %v3463
      %vm3467 = vcmp.gt.f32.partialorder %v3464, 0.0
      %vm3468 = vcmp.gt.f32.partialorder %v3465, 0.0
      %vm3469 = vcmp.gt.f32.partialorder %v3466, 0.0
      %v3470 = vmul.f32 %v3464, 0.1
      %v3471 = vmul.f32 %v3465, 0.1
      %v3472 = vmul.f32 %v3466, 0.1
      %v3473 = vsel %vm3467, %v3464, %v3470
      %v3474 = vsel %vm3468, %v3465, %v3471
      %v3475 = vsel %vm3469, %v3466, %v3472
      %vm3476 = vcmask 162816
      %3477 = vst.msk [vmem:[%s171] sm:$0xff] %vm3476, %v3473
      %3478 = vst.msk [vmem:[%s171 + $0x8] sm:$0xff] %vm3476, %v3474
      %vm3479 = vcmask 158720
      %3480 = vst.msk [vmem:[%s171 + $0x10] sm:$0xf] %vm3479, %v3475
      %p3481 = scmp.lt.s32.totalorder %s15, 1
      %s3482 = scalar_select %p3481, %s15, 1
      %s3483 = smul.addr %s3482, 3
      %s3484 = smul.addr %s3483, 8
      %s3485 = scalar_lea.vmem %s3, %s3484
      // Predicated region
      $region33: #{conv_leaky_relu.1} parent=31 // pred_check
        %p3486 = pneg %p101
      $region34: #{conv_leaky_relu.1} parent=31 // pred_check_branch
        %3488 = sbr.rel (%p3486) target = $region36
      $region35: #{conv_leaky_relu.1} parent=31 // pred_region
        _
      $region36: #{conv_leaky_relu.1} parent=31 // pred_fallthru
        _
    $region32: #{conv_leaky_relu.1} parent=5 // pred_fallthru
      _
    %p3489 = scmp.le.s32.totalorder 2, %s10
    // Predicated region
    $region37: #{conv_leaky_relu.1} parent=5 // pred_check
      %p3490 = pneg %p3489
    $region38: #{conv_leaky_relu.1} parent=5 // pred_check_branch
      %3492 = sbr.rel (%p3490) target = $region40
    $region39: #{conv_leaky_relu.1} parent=5 // pred_region
      %s3493 = ssub.s32 %s10, 2
      // Predicated region
      $region41: #{conv_leaky_relu.1} parent=39 // pred_check
        %p3494 = pneg %p107
      $region42: #{conv_leaky_relu.1} parent=39 // pred_check_branch
        %3496 = sbr.rel (%p3494) target = $region44
      $region43: #{conv_leaky_relu.1} parent=39 // pred_region
        %p3497 = scmp.lt.s32.totalorder %s16, 1
        %s3498 = scalar_select %p3497, %s16, 1
        %s3499 = smul.addr %s3498, 3
        %s3500 = smul.addr %s3499, 8
        %s3501 = scalar_lea.vmem %s3, %s3500
      $region44: #{conv_leaky_relu.1} parent=39 // pred_fallthru
        _
    $region40: #{conv_leaky_relu.1} parent=5 // pred_fallthru
      _
  $region6: #{conv_leaky_relu.1} parent=0 // loop_footer
    %s14 = sadd.s32 1, %s10
  $region7: #{conv_leaky_relu.1} parent=0 // loop_footer_branch
    %9 = sbr.rel target = $region3
  $region8: #{conv_leaky_relu.1} parent=0 // loop_exit
    _

</llo_original>
